<compile_context>
chip_gen: v6e
topology: v6e:2x2x1
jax: 0.10.0
libtpu: 0.0.40
codegen_flags: <defaults>
</compile_context>

<pallas_src>
import math
import functools

import jax
import jax.numpy as jnp
from jax import lax
from jax.experimental import pallas as pl
from jax.experimental.pallas import tpu as pltpu


# ----------------------------------------------------------------------------
# Kernel 1: fused QKV projection   qkv = x @ W_qkv + b_qkv
#   x:     (M, H)  f32 activations (cast to bf16 per tile inside the kernel)
#   w_qkv: (H, 3H) bf16  = concat([Wq^T * scale, Wk^T, Wv^T], axis=1)
#   b_qkv: (1, 3H) f32   = concat([bq * scale, bk, bv])
# Tiled over M; weight/bias block indices are grid-invariant (kept resident).
# ----------------------------------------------------------------------------
def _qkv_proj_kernel(x_ref, w_ref, b_ref, o_ref):
    acc = jnp.dot(x_ref[...].astype(jnp.bfloat16), w_ref[...],
                  preferred_element_type=jnp.float32)
    o_ref[...] = acc + b_ref[...]


def _pick_m_tile(m):
    # ~0.75-4.5 MiB per buffer at BERT shapes -> fits v7x's 64 MiB VMEM with
    # double buffering while staying on the flat part of the tile-size curve.
    for t in (512, 256, 128):
        if m % t == 0 and m > t:
            return t
    return m


def qkv_projection_pallas(x2d, w_qkv, b_qkv):
    M, H = x2d.shape
    N = w_qkv.shape[1]
    tm = _pick_m_tile(M)
    return pl.pallas_call(
        _qkv_proj_kernel,
        out_shape=jax.ShapeDtypeStruct((M, N), jnp.float32),
        grid=(M // tm,),
        in_specs=[
            pl.BlockSpec((tm, H), lambda i: (i, 0)),
            pl.BlockSpec((H, N), lambda i: (0, 0)),
            pl.BlockSpec((1, N), lambda i: (0, 0)),
        ],
        out_specs=pl.BlockSpec((tm, N), lambda i: (i, 0)),
        compiler_params=pltpu.CompilerParams(
            dimension_semantics=("parallel",)),
    )(x2d, w_qkv, b_qkv)


# ----------------------------------------------------------------------------
# Kernel 2: scaled dot-product attention, one (batch, head) tile per grid step.
# Q is already pre-scaled by 1/sqrt(head_dim) (folded into the query weights).
# ----------------------------------------------------------------------------
def _attn_kernel(q_ref, k_ref, v_ref, m_ref, o_ref):
    q = q_ref[0].astype(jnp.bfloat16)           # (S, DH)
    k = k_ref[0].astype(jnp.bfloat16)           # (S, DH)
    v = v_ref[0].astype(jnp.bfloat16)           # (S, DH)
    mask = m_ref[0, 0]                          # (1, S) additive, f32

    # QK^T contracting head_dim directly on the MXU (no in-kernel transpose).
    scores = lax.dot_general(
        q, k, dimension_numbers=(((1,), (1,)), ((), ())),
        preferred_element_type=jnp.float32)     # (S, S) f32
    scores = scores + mask

    # Numerically-stable softmax, all elementwise math in f32.
    scores = scores - jnp.max(scores, axis=-1, keepdims=True)
    p = jnp.exp(scores)
    inv = pl.reciprocal(jnp.sum(p, axis=-1, keepdims=True), approx=True)
    p = (p * inv).astype(jnp.bfloat16)

    o_ref[0] = jnp.dot(p, v, preferred_element_type=jnp.float32)


def attention_pallas(qkv, attention_mask, num_heads, head_dim):
    B, S, H3 = qkv.shape
    H = H3 // 3
    NH, DH = num_heads, head_dim
    return pl.pallas_call(
        _attn_kernel,
        out_shape=jax.ShapeDtypeStruct((B, S, H), jnp.float32),
        grid=(B, NH),
        in_specs=[
            # Q / K / V for head h live at column blocks h, NH+h, 2*NH+h of the
            # fused (B, S, 3H) projection output (block width = DH).
            pl.BlockSpec((1, S, DH), lambda b, h: (b, 0, h)),
            pl.BlockSpec((1, S, DH), lambda b, h: (b, 0, NH + h)),
            pl.BlockSpec((1, S, DH), lambda b, h: (b, 0, 2 * NH + h)),
            pl.BlockSpec((1, 1, 1, S), lambda b, h: (b, 0, 0, 0)),
        ],
        # Context for head h goes straight to columns [h*DH, (h+1)*DH) of the
        # (B, S, H) output — replaces the permute(0,2,1,3)+view in PyTorch.
        out_specs=pl.BlockSpec((1, S, DH), lambda b, h: (b, 0, h)),
        compiler_params=pltpu.CompilerParams(
            dimension_semantics=("parallel", "parallel")),
    )(qkv, qkv, qkv, attention_mask)


# ----------------------------------------------------------------------------
# One-time weight preparation (outside the per-step forward).
# ----------------------------------------------------------------------------
def prepare_qkv_params(params, head_dim, mxu_dtype=jnp.bfloat16):
    """Transpose PyTorch (out,in) weights, fold 1/sqrt(head_dim) into the query
    projection, concatenate into a single (H, 3H) weight / (1, 3H) bias, and
    store the weight in bf16 for the MXU."""
    scale = 1.0 / math.sqrt(head_dim)
    wq = params["query_w"].T * scale
    wk = params["key_w"].T
    wv = params["value_w"].T
    w_qkv = jnp.concatenate([wq, wk, wv], axis=1).astype(mxu_dtype)   # (H, 3H)
    b_qkv = jnp.concatenate([params["query_b"] * scale,
                             params["key_b"],
                             params["value_b"]])[None, :].astype(jnp.float32)
    return w_qkv, b_qkv


# ----------------------------------------------------------------------------
# BertSelfAttention forward (glue is only free reshapes; hot paths in Pallas)
# ----------------------------------------------------------------------------
def bert_self_attention(hidden_states, attention_mask, w_qkv, b_qkv,
                        num_heads, head_dim):
    B, S, H = hidden_states.shape
    x2d = hidden_states.reshape(B * S, H)              # contiguous, free
    qkv = qkv_projection_pallas(x2d, w_qkv, b_qkv)     # (B*S, 3H) f32
    qkv = qkv.reshape(B, S, 3 * H)                     # contiguous, free
    return attention_pallas(qkv, attention_mask, num_heads, head_dim)


# ----------------------------------------------------------------------------
# Pure-JAX f32 reference (mirrors the PyTorch module) for verification
# ----------------------------------------------------------------------------
def bert_self_attention_ref(hidden_states, attention_mask, params,
                            num_heads, head_dim):
    B, S, H = hidden_states.shape

    def proj(name):
        return hidden_states @ params[f"{name}_w"].T + params[f"{name}_b"]

    def split_heads(t):
        return t.reshape(B, S, num_heads, head_dim).transpose(0, 2, 1, 3)

    q = split_heads(proj("query"))
    k = split_heads(proj("key"))
    v = split_heads(proj("value"))

    scores = jnp.einsum("bhqd,bhkd->bhqk", q, k) / math.sqrt(head_dim)
    scores = scores + attention_mask
    probs = jax.nn.softmax(scores, axis=-1)
    ctx = jnp.einsum("bhqk,bhkd->bhqd", probs, v)
    return ctx.transpose(0, 2, 1, 3).reshape(B, S, num_heads * head_dim)


if __name__ == "__main__":
    # Small but TPU-aligned shapes consistent with the module: hidden divisible
    # by num_heads, head_dim a multiple of 128 so per-head blocks / stores are
    # lane-dense, seq a multiple of 8.
    B, S, H = 2, 128, 512
    NUM_HEADS = 4
    HEAD_DIM = H // NUM_HEADS      # 128

    key = jax.random.PRNGKey(0)
    k_hs, k_mask, k_qw, k_qb, k_kw, k_kb, k_vw, k_vb = jax.random.split(key, 8)

    hidden_states = jax.random.normal(k_hs, (B, S, H), dtype=jnp.float32)
    # BERT-style additive mask: 0 for attend, -10000 for masked positions.
    mask_bits = (jax.random.uniform(k_mask, (B, 1, 1, S)) > 0.2).astype(jnp.float32)
    attention_mask = (1.0 - mask_bits) * -10000.0

    init_scale = 0.02
    params = {
        "query_w": init_scale * jax.random.normal(k_qw, (H, H), jnp.float32),
        "query_b": init_scale * jax.random.normal(k_qb, (H,), jnp.float32),
        "key_w":   init_scale * jax.random.normal(k_kw, (H, H), jnp.float32),
        "key_b":   init_scale * jax.random.normal(k_kb, (H,), jnp.float32),
        "value_w": init_scale * jax.random.normal(k_vw, (H, H), jnp.float32),
        "value_b": init_scale * jax.random.normal(k_vb, (H,), jnp.float32),
    }

    # One-time weight prep (fused, transposed, scale-folded, bf16).
    w_qkv, b_qkv = prepare_qkv_params(params, HEAD_DIM)

    fwd = jax.jit(functools.partial(bert_self_attention,
                                    num_heads=NUM_HEADS, head_dim=HEAD_DIM))
    out = fwd(hidden_states, attention_mask, w_qkv, b_qkv)
    out = jax.block_until_ready(out)

    ref = bert_self_attention_ref(hidden_states, attention_mask, params,
                                  NUM_HEADS, HEAD_DIM)
    assert out.shape == (B, S, H), out.shape
    # bf16 MXU operands with f32 accumulation + approx reciprocal: observed
    # error is ~1e-3; tolerance loosened accordingly.
    assert jnp.allclose(out, ref, atol=2e-2, rtol=2e-2), "mismatch vs reference"

    print("KERNEL_OK")
</pallas_src>

<mosaic_0001>
module attributes {stable_mosaic.version = 11 : i64} {
  func.func @_qkv_proj_kernel(%arg0: i32, %arg1: memref<128x512xf32, #tpu.memory_space<vmem>>, %arg2: memref<512x1536xbf16, #tpu.memory_space<vmem>>, %arg3: memref<1x1536xf32, #tpu.memory_space<vmem>>, %arg4: memref<128x1536xf32, #tpu.memory_space<vmem>>) attributes {dimension_semantics = [#tpu.dimension_semantics<parallel>], iteration_bounds = array<i64: 2>, scalar_prefetch = 0 : i64, scratch_operands = 0 : i64, tpu.core_type = #tpu.core_type<tc>, window_params = [{transform_indices = @transform_0, window_bounds = array<i64: 128, 512>}, {pipeline_mode = #tpu.pipeline_mode<synchronous>, transform_indices = @transform_1, window_bounds = array<i64: 512, 1536>}, {pipeline_mode = #tpu.pipeline_mode<synchronous>, transform_indices = @transform_2, window_bounds = array<i64: 1, 1536>}, {transform_indices = @transform_3, window_bounds = array<i64: 128, 1536>}]} {
    %c0 = arith.constant 0 : index
    %c0_0 = arith.constant 0 : index
    %0 = vector.load %arg1[%c0, %c0_0] : memref<128x512xf32, #tpu.memory_space<vmem>>, vector<128x512xf32>
    %1 = arith.truncf %0 : vector<128x512xf32> to vector<128x512xbf16>
    %c0_1 = arith.constant 0 : index
    %c0_2 = arith.constant 0 : index
    %2 = vector.load %arg2[%c0_1, %c0_2] : memref<512x1536xbf16, #tpu.memory_space<vmem>>, vector<512x1536xbf16>
    %cst = arith.constant dense<0.000000e+00> : vector<128x1536xf32>
    %3 = tpu.matmul %1, %2, %cst {dimension_numbers = #tpu.dot_dimension_numbers<[1], [0], [0], [1], [0, 0, 1, 1], [], []>} : vector<128x512xbf16>, vector<512x1536xbf16>, vector<128x1536xf32> -> vector<128x1536xf32>
    %c0_3 = arith.constant 0 : index
    %c0_4 = arith.constant 0 : index
    %4 = vector.load %arg3[%c0_3, %c0_4] : memref<1x1536xf32, #tpu.memory_space<vmem>>, vector<1x1536xf32>
    %5 = vector.broadcast %4 : vector<1x1536xf32> to vector<128x1536xf32>
    %6 = arith.addf %3, %5 : vector<128x1536xf32>
    %c0_5 = arith.constant 0 : index
    %c0_6 = arith.constant 0 : index
    %7 = vector.load %arg4[%c0_5, %c0_6] : memref<128x1536xf32, #tpu.memory_space<vmem>>, vector<128x1536xf32>
    tpu.vector_store %arg4[%c0_5, %c0_6], %6 {strides = array<i32>} : memref<128x1536xf32, #tpu.memory_space<vmem>>, vector<128x1536xf32>,
    return
  }
  func.func @transform_0(%arg0: i32) -> (i32, i32) {
    %c0_i32 = arith.constant 0 : i32
    %c0_i32_0 = arith.constant 0 : i32
    return %arg0, %c0_i32 : i32, i32
  }
  func.func @transform_1(%arg0: i32) -> (i32, i32) {
    %c0_i32 = arith.constant 0 : i32
    %c0_i32_0 = arith.constant 0 : i32
    %c0_i32_1 = arith.constant 0 : i32
    return %c0_i32, %c0_i32_0 : i32, i32
  }
  func.func @transform_2(%arg0: i32) -> (i32, i32) {
    %c0_i32 = arith.constant 0 : i32
    %c0_i32_0 = arith.constant 0 : i32
    %c0_i32_1 = arith.constant 0 : i32
    return %c0_i32, %c0_i32_0 : i32, i32
  }
  func.func @transform_3(%arg0: i32) -> (i32, i32) {
    %c0_i32 = arith.constant 0 : i32
    %c0_i32_0 = arith.constant 0 : i32
    return %arg0, %c0_i32 : i32, i32
  }
}

module attributes {stable_mosaic.version = 11 : i64} {
  func.func @_attn_kernel(%arg0: i32, %arg1: i32, %arg2: memref<1x128x128xf32, #tpu.memory_space<vmem>>, %arg3: memref<1x128x128xf32, #tpu.memory_space<vmem>>, %arg4: memref<1x128x128xf32, #tpu.memory_space<vmem>>, %arg5: memref<1x1x1x128xf32, #tpu.memory_space<vmem>>, %arg6: memref<1x128x128xf32, #tpu.memory_space<vmem>>) attributes {dimension_semantics = [#tpu.dimension_semantics<parallel>, #tpu.dimension_semantics<parallel>], iteration_bounds = array<i64: 2, 4>, scalar_prefetch = 0 : i64, scratch_operands = 0 : i64, tpu.core_type = #tpu.core_type<tc>, window_params = [{transform_indices = @transform_0, window_bounds = array<i64: 1, 128, 128>}, {transform_indices = @transform_1, window_bounds = array<i64: 1, 128, 128>}, {transform_indices = @transform_2, window_bounds = array<i64: 1, 128, 128>}, {transform_indices = @transform_3, window_bounds = array<i64: 1, 1, 1, 128>}, {transform_indices = @transform_4, window_bounds = array<i64: 1, 128, 128>}]} {
    %c0 = arith.constant 0 : index
    %c0_0 = arith.constant 0 : index
    %c0_1 = arith.constant 0 : index
    %0 = vector.load %arg2[%c0, %c0_0, %c0_1] : memref<1x128x128xf32, #tpu.memory_space<vmem>>, vector<1x128x128xf32>
    %1 = vector.shape_cast %0 : vector<1x128x128xf32> to vector<128x128xf32>
    %2 = arith.truncf %1 : vector<128x128xf32> to vector<128x128xbf16>
    %c0_2 = arith.constant 0 : index
    %c0_3 = arith.constant 0 : index
    %c0_4 = arith.constant 0 : index
    %3 = vector.load %arg3[%c0_2, %c0_3, %c0_4] : memref<1x128x128xf32, #tpu.memory_space<vmem>>, vector<1x128x128xf32>
    %4 = vector.shape_cast %3 : vector<1x128x128xf32> to vector<128x128xf32>
    %5 = arith.truncf %4 : vector<128x128xf32> to vector<128x128xbf16>
    %c0_5 = arith.constant 0 : index
    %c0_6 = arith.constant 0 : index
    %c0_7 = arith.constant 0 : index
    %6 = vector.load %arg4[%c0_5, %c0_6, %c0_7] : memref<1x128x128xf32, #tpu.memory_space<vmem>>, vector<1x128x128xf32>
    %7 = vector.shape_cast %6 : vector<1x128x128xf32> to vector<128x128xf32>
    %8 = arith.truncf %7 : vector<128x128xf32> to vector<128x128xbf16>
    %c0_8 = arith.constant 0 : index
    %c0_9 = arith.constant 0 : index
    %c0_10 = arith.constant 0 : index
    %c0_11 = arith.constant 0 : index
    %9 = vector.load %arg5[%c0_8, %c0_9, %c0_10, %c0_11] : memref<1x1x1x128xf32, #tpu.memory_space<vmem>>, vector<1x1x1x128xf32>
    %10 = vector.shape_cast %9 : vector<1x1x1x128xf32> to vector<1x128xf32>
    %cst = arith.constant dense<0.000000e+00> : vector<128x128xf32>
    %11 = tpu.matmul %2, %5, %cst {dimension_numbers = #tpu.dot_dimension_numbers<[1], [1], [0], [0], [0, 0, 1, 0], [], []>} : vector<128x128xbf16>, vector<128x128xbf16>, vector<128x128xf32> -> vector<128x128xf32>
    %12 = vector.broadcast %10 : vector<1x128xf32> to vector<128x128xf32>
    %13 = arith.addf %11, %12 : vector<128x128xf32>
    %cst_12 = arith.constant dense<0xFF800000> : vector<128xf32>
    %14 = vector.multi_reduction <maximumf>, %13, %cst_12 [1] : vector<128x128xf32> to vector<128xf32>
    %15 = vector.shape_cast %14 : vector<128xf32> to vector<128x1xf32>
    %16 = vector.broadcast %15 : vector<128x1xf32> to vector<128x128xf32>
    %17 = arith.subf %13, %16 : vector<128x128xf32>
    %18 = math.exp %17 : vector<128x128xf32>
    %cst_13 = arith.constant dense<0.000000e+00> : vector<128xf32>
    %19 = vector.multi_reduction <add>, %18, %cst_13 [1] : vector<128x128xf32> to vector<128xf32>
    %20 = vector.shape_cast %19 : vector<128xf32> to vector<128x1xf32>
    %21 = tpu.reciprocal %20 {approx = true} : vector<128x1xf32> -> vector<128x1xf32>
    %22 = vector.broadcast %21 : vector<128x1xf32> to vector<128x128xf32>
    %23 = arith.mulf %18, %22 : vector<128x128xf32>
    %24 = arith.truncf %23 : vector<128x128xf32> to vector<128x128xbf16>
    %cst_14 = arith.constant dense<0.000000e+00> : vector<128x128xf32>
    %25 = tpu.matmul %24, %8, %cst_14 {dimension_numbers = #tpu.dot_dimension_numbers<[1], [0], [0], [1], [0, 0, 1, 1], [], []>} : vector<128x128xbf16>, vector<128x128xbf16>, vector<128x128xf32> -> vector<128x128xf32>
    %c0_15 = arith.constant 0 : index
    %c0_16 = arith.constant 0 : index
    %c0_17 = arith.constant 0 : index
    %26 = vector.load %arg6[%c0_15, %c0_16, %c0_17] : memref<1x128x128xf32, #tpu.memory_space<vmem>>, vector<1x128x128xf32>
    %27 = vector.shape_cast %26 : vector<1x128x128xf32> to vector<128x128xf32>
    %28 = vector.shape_cast %25 : vector<128x128xf32> to vector<1x128x128xf32>
    tpu.vector_store %arg6[%c0_15, %c0_16, %c0_17], %28 {strides = array<i32>} : memref<1x128x128xf32, #tpu.memory_space<vmem>>, vector<1x128x128xf32>,
    return
  }
  func.func @transform_0(%arg0: i32, %arg1: i32) -> (i32, i32, i32) {
    %c0_i32 = arith.constant 0 : i32
    %c0_i32_0 = arith.constant 0 : i32
    return %arg0, %c0_i32, %arg1 : i32, i32, i32
  }
  func.func @transform_1(%arg0: i32, %arg1: i32) -> (i32, i32, i32) {
    %c4_i32 = arith.constant 4 : i32
    %0 = arith.addi %c4_i32, %arg1 : i32
    %c0_i32 = arith.constant 0 : i32
    %c0_i32_0 = arith.constant 0 : i32
    return %arg0, %c0_i32, %0 : i32, i32, i32
  }
  func.func @transform_2(%arg0: i32, %arg1: i32) -> (i32, i32, i32) {
    %c8_i32 = arith.constant 8 : i32
    %0 = arith.addi %c8_i32, %arg1 : i32
    %c0_i32 = arith.constant 0 : i32
    %c0_i32_0 = arith.constant 0 : i32
    return %arg0, %c0_i32, %0 : i32, i32, i32
  }
  func.func @transform_3(%arg0: i32, %arg1: i32) -> (i32, i32, i32, i32) {
    %c0_i32 = arith.constant 0 : i32
    %c0_i32_0 = arith.constant 0 : i32
    %c0_i32_1 = arith.constant 0 : i32
    %c0_i32_2 = arith.constant 0 : i32
    return %arg0, %c0_i32, %c0_i32_0, %c0_i32_1 : i32, i32, i32, i32
  }
  func.func @transform_4(%arg0: i32, %arg1: i32) -> (i32, i32, i32) {
    %c0_i32 = arith.constant 0 : i32
    %c0_i32_0 = arith.constant 0 : i32
    return %arg0, %c0_i32, %arg1 : i32, i32, i32
  }
}

</mosaic_0001>

<llo_original>
// kernel: bert_self_attention.3
$region0: #{bert_self_attention.3}
  #allocation0 [shape = 'u32[]', space=smem, size = 0x4, offset = 0x4, fixed_abs, tag = 'smem constant byte address 0x4 - core index']
  #allocation1 [shape = 'u32[144,128]{1,0:T(1,128)}', space=vmem, size = 0x12000, scoped, tag = 'internal scratch']
  %s0 = inlined_call_operand.vmem [shape: f32[2,128,1536], index: 0, kind: input, shape index: {}, may-alias: {0,1,2}]
  %s1 = inlined_call_operand.vmem [shape: f32[2,128,1536], index: 1, kind: input, shape index: {}, may-alias: {0,1,2}]
  %s2 = inlined_call_operand.vmem [shape: f32[2,128,1536], index: 2, kind: input, shape index: {}, may-alias: {0,1,2}]
  %s3 = inlined_call_operand.vmem [shape: f32[2,1,1,128], index: 3, kind: input, shape index: {}]
  %s4 = inlined_call_operand.hbm [shape: f32[2,128,512], index: 4, kind: output, shape index: {}]
  %s5 = sld [smem:[#allocation0]]
  $region163: #{bert_self_attention.3} parent=0
    _
  %s7 = ssub.s32 1, %s5
  %s8 = scalar_select 0, %s7, %s5
  $region1: #{bert_self_attention.3} parent=0
    #allocation2 [shape = 'u8[131072]{0}', space=vmem, size = 0x20000, scoped, tag = 'input window, operand 0']
    #allocation3 [shape = 'u8[131072]{0}', space=vmem, size = 0x20000, scoped, tag = 'input window, operand 1']
    #allocation4 [shape = 'u8[131072]{0}', space=vmem, size = 0x20000, scoped, tag = 'input window, operand 2']
    #allocation5 [shape = 'u8[131072]{0}', space=vmem, size = 0x20000, scoped, tag = 'output window, operand 0']
    #allocation6 [shape = 's32[2]{0}', space=sflag, size = 0x8, scoped, tag = 'scoped memory for bert_self_attention.3']
    %9 = vsyncpa [#allocation6], 0
    %s10 = scalar_lea.sflag [#allocation6], 1
    %11 = vsyncpa %s10, 0
    loop: start=0, step=1, limit=10
    $region2: #{bert_self_attention.3} parent=1 // loop_pre_header
      _
    $region3: #{bert_self_attention.3} parent=1 // loop_header
      %s13 = sphi 0, %s17
      %p14 = scmp.ge.s32.totalorder %s13, 10
      %s20 = sphi 0, %s32
      %s21 = sphi 0, %s28
      %s22 = sphi 0, %s20
      %s23 = sphi 0, %s21
      %s24 = sphi 0, %s22
      %s25 = sphi 0, %s23
      %s37 = sphi 0, %s39
      %s40 = sphi 0, %s37
      %s41 = sphi 0, %s40
      %s57 = sphi 0, %s41
      %s67 = sphi 0, %s69
      %s70 = sphi 0, %s67
      %s71 = sphi 0, %s70
      %s87 = sphi 0, %s71
      %s97 = sphi 0, %s99
      %s100 = sphi 0, %s97
      %s101 = sphi 0, %s100
      %s117 = sphi 0, %s101
      %s123 = sphi 0, %s125
      %s126 = sphi 0, %s123
      %s127 = sphi 0, %s126
      %s143 = sphi 0, %s127
      %s151 = sphi 0, %s153
      %s154 = sphi 0, %s151
      %s155 = sphi 0, %s154
      %s171 = sphi 0, %s155
    $region4: #{bert_self_attention.3} parent=1 // loop_header_branch
      %16 = sbr.rel (%p14) target = $region8
    $region5: #{bert_self_attention.3} parent=1 // loop_body
      %s18 = ssub.s32 %s13, 1
      %s19 = ssub.s32 %s13, 2
      %s26 = sadd.s32 1, %s21
      %p27 = scmp.ge.s32.totalorder %s26, 4
      %s28 = scalar_select %p27, 0, %s26
      %s29 = sadd.s32 1, %s20
      %s30 = scalar_select %p27, %s29, %s20
      %p31 = scmp.ge.s32.totalorder %s30, 2
      %s32 = scalar_select %p31, 0, %s30
      %s33 = ssub.s32 %s20, %s32
      %s34 = ssub.s32 %s21, %s28
      %s35 = sor.u32 %s33, %s34
      %p36 = scmp.eq.s32.totalorder %s35, 0
      %s38 = sadd.s32 %s37, 1
      %s39 = scalar_select %p36, %s37, %s38
      %p42 = pneg %p36
      %p43 = scmp.eq.s32.totalorder %s13, 7
      %p44 = por %p42, %p43
      %p45 = scmp.ne.s32.totalorder %s37, %s40
      %p46 = scmp.eq.s32.totalorder %s13, 0
      %p47 = por %p45, %p46
      %p48 = scmp.ne.s32.totalorder %s37, %s40
      %p49 = scmp.eq.s32.totalorder %s18, 7
      %p50 = por %p48, %p49
      %p51 = scmp.ne.s32.totalorder %s40, %s41
      %p52 = scmp.eq.s32.totalorder %s18, 0
      %p53 = por %p51, %p52
      %p54 = scmp.ne.s32.totalorder %s40, %s41
      %p55 = scmp.eq.s32.totalorder %s19, 7
      %p56 = por %p54, %p55
      %p58 = scmp.ne.s32.totalorder %s41, %s57
      %p59 = scmp.eq.s32.totalorder %s19, 0
      %p60 = por %p58, %p59
      %s61 = sadd.s32 %s21, 4
      %s62 = sadd.s32 %s28, 4
      %s63 = ssub.s32 %s20, %s32
      %s64 = ssub.s32 %s61, %s62
      %s65 = sor.u32 %s63, %s64
      %p66 = scmp.eq.s32.totalorder %s65, 0
      %s68 = sadd.s32 %s67, 1
      %s69 = scalar_select %p66, %s67, %s68
      %p72 = pneg %p66
      %p73 = scmp.eq.s32.totalorder %s13, 7
      %p74 = por %p72, %p73
      %p75 = scmp.ne.s32.totalorder %s67, %s70
      %p76 = scmp.eq.s32.totalorder %s13, 0
      %p77 = por %p75, %p76
      %p78 = scmp.ne.s32.totalorder %s67, %s70
      %p79 = scmp.eq.s32.totalorder %s18, 7
      %p80 = por %p78, %p79
      %p81 = scmp.ne.s32.totalorder %s70, %s71
      %p82 = scmp.eq.s32.totalorder %s18, 0
      %p83 = por %p81, %p82
      %p84 = scmp.ne.s32.totalorder %s70, %s71
      %p85 = scmp.eq.s32.totalorder %s19, 7
      %p86 = por %p84, %p85
      %p88 = scmp.ne.s32.totalorder %s71, %s87
      %p89 = scmp.eq.s32.totalorder %s19, 0
      %p90 = por %p88, %p89
      %s91 = sadd.s32 %s21, 8
      %s92 = sadd.s32 %s28, 8
      %s93 = ssub.s32 %s20, %s32
      %s94 = ssub.s32 %s91, %s92
      %s95 = sor.u32 %s93, %s94
      %p96 = scmp.eq.s32.totalorder %s95, 0
      %s98 = sadd.s32 %s97, 1
      %s99 = scalar_select %p96, %s97, %s98
      %p102 = pneg %p96
      %p103 = scmp.eq.s32.totalorder %s13, 7
      %p104 = por %p102, %p103
      %p105 = scmp.ne.s32.totalorder %s97, %s100
      %p106 = scmp.eq.s32.totalorder %s13, 0
      %p107 = por %p105, %p106
      %p108 = scmp.ne.s32.totalorder %s97, %s100
      %p109 = scmp.eq.s32.totalorder %s18, 7
      %p110 = por %p108, %p109
      %p111 = scmp.ne.s32.totalorder %s100, %s101
      %p112 = scmp.eq.s32.totalorder %s18, 0
      %p113 = por %p111, %p112
      %p114 = scmp.ne.s32.totalorder %s100, %s101
      %p115 = scmp.eq.s32.totalorder %s19, 7
      %p116 = por %p114, %p115
      %p118 = scmp.ne.s32.totalorder %s101, %s117
      %p119 = scmp.eq.s32.totalorder %s19, 0
      %p120 = por %p118, %p119
      %s121 = ssub.s32 %s20, %s32
      %p122 = scmp.eq.s32.totalorder %s121, 0
      %s124 = sadd.s32 %s123, 1
      %s125 = scalar_select %p122, %s123, %s124
      %p128 = pneg %p122
      %p129 = scmp.eq.s32.totalorder %s13, 7
      %p130 = por %p128, %p129
      %p131 = scmp.ne.s32.totalorder %s123, %s126
      %p132 = scmp.eq.s32.totalorder %s13, 0
      %p133 = por %p131, %p132
      %p134 = scmp.ne.s32.totalorder %s123, %s126
      %p135 = scmp.eq.s32.totalorder %s18, 7
      %p136 = por %p134, %p135
      %p137 = scmp.ne.s32.totalorder %s126, %s127
      %p138 = scmp.eq.s32.totalorder %s18, 0
      %p139 = por %p137, %p138
      %p140 = scmp.ne.s32.totalorder %s126, %s127
      %p141 = scmp.eq.s32.totalorder %s19, 7
      %p142 = por %p140, %p141
      %p144 = scmp.ne.s32.totalorder %s127, %s143
      %p145 = scmp.eq.s32.totalorder %s19, 0
      %p146 = por %p144, %p145
      %s147 = ssub.s32 %s20, %s32
      %s148 = ssub.s32 %s21, %s28
      %s149 = sor.u32 %s147, %s148
      %p150 = scmp.eq.s32.totalorder %s149, 0
      %s152 = sadd.s32 %s151, 1
      %s153 = scalar_select %p150, %s151, %s152
      %p156 = pneg %p150
      %p157 = scmp.eq.s32.totalorder %s13, 7
      %p158 = por %p156, %p157
      %p159 = scmp.ne.s32.totalorder %s151, %s154
      %p160 = scmp.eq.s32.totalorder %s13, 0
      %p161 = por %p159, %p160
      %p162 = scmp.ne.s32.totalorder %s151, %s154
      %p163 = scmp.eq.s32.totalorder %s18, 7
      %p164 = por %p162, %p163
      %p165 = scmp.ne.s32.totalorder %s154, %s155
      %p166 = scmp.eq.s32.totalorder %s18, 0
      %p167 = por %p165, %p166
      %p168 = scmp.ne.s32.totalorder %s154, %s155
      %p169 = scmp.eq.s32.totalorder %s19, 7
      %p170 = por %p168, %p169
      %p172 = scmp.ne.s32.totalorder %s155, %s171
      %p173 = scmp.eq.s32.totalorder %s19, 0
      %p174 = por %p172, %p173
      %p175 = scmp.le.s32.totalorder 1, %s13
      %p176 = scmp.lt.s32.totalorder %s13, 9
      %p177 = pnand %p175, %p176
      %p178 = pneg %p177
      // Predicated region
      $region9: #{bert_self_attention.3} parent=5 // pred_check
        _
      $region10: #{bert_self_attention.3} parent=5 // pred_check_branch
        %180 = sbr.rel (%p177) target = $region12
      $region11: #{bert_self_attention.3} parent=5 // pred_region
        %s181 = ssub.s32 %s13, 1
      $region12: #{bert_self_attention.3} parent=5 // pred_fallthru
        _
      %p182 = scmp.lt.s32.totalorder %s13, 8
      // Predicated region
      $region13: #{bert_self_attention.3} parent=5 // pred_check
        %p183 = pneg %p182
      $region14: #{bert_self_attention.3} parent=5 // pred_check_branch
        %185 = sbr.rel (%p183) target = $region16
      $region15: #{bert_self_attention.3} parent=5 // pred_region
        // Predicated region
        $region17: #{bert_self_attention.3} parent=15 // pred_check
          %p186 = pneg %p47
        $region18: #{bert_self_attention.3} parent=15 // pred_check_branch
          %188 = sbr.rel (%p186) target = $region20
        $region19: #{bert_self_attention.3} parent=15 // pred_region
          %s189 = sand.u32 %s37, 1
          %s190 = sand.u32 %s37, 1
          %s191 = smul.addr %s190, 128
          %s192 = scalar_lea.vmem [#allocation2], %s191
          %s193 = smul.addr %s20, 192
          %s194 = sadd.s32 %s21, %s193
          %s195 = smul.addr %s194, 8
          %s196 = scalar_lea.vmem %s0, %s195
          // Predicated region
          $region21: #{bert_self_attention.3} parent=19 // pred_check
            _
          $region22: #{bert_self_attention.3} parent=19 // pred_check_branch
            %198 = sbr.rel (0) target = $region24
          $region23: #{bert_self_attention.3} parent=19 // pred_region
            // Predicated region
            $region25: #{bert_self_attention.3} parent=23 // pred_check
              _
            $region26: #{bert_self_attention.3} parent=23 // pred_check_branch
              %200 = sbr.rel (0) target = $region28
            $region27: #{bert_self_attention.3} parent=23 // pred_region
              // Predicated region
              $region40: #{bert_self_attention.3} parent=27 // pred_check
                _
              $region41: #{bert_self_attention.3} parent=27 // pred_check_branch
                %246 = sbr.rel (0) target = $region43
              $region42: #{bert_self_attention.3} parent=27 // pred_region
                loop: start=0, step=1, limit=1
                $region44: #{bert_self_attention.3} parent=42 // loop_pre_header
                  _
                $region45: #{bert_self_attention.3} parent=42 // loop_header
                  %s248 = sphi 0, %s252
                  %p249 = scmp.ge.s32.totalorder %s248, 1
                  %s253 = sphi %s196, %s196
                  %s254 = sphi %s192, %s192
                $region46: #{bert_self_attention.3} parent=42 // loop_header_branch
                  %251 = sbr.rel (%p249) target = $region50
                $region47: #{bert_self_attention.3} parent=42 // loop_body
                  %v255 = vld [vmem:[%s253] sm:$0xff]
                  %256 = vst [vmem:[%s254] sm:$0xff] %v255
                  %v257 = vld [vmem:[%s253 + $0x60] sm:$0xff]
                  %258 = vst [vmem:[%s254 + $0x8] sm:$0xff] %v257
                  %v259 = vld [vmem:[%s253 + $0xc0] sm:$0xff]
                  %260 = vst [vmem:[%s254 + $0x10] sm:$0xff] %v259
                  %v261 = vld [vmem:[%s253 + $0x120] sm:$0xff]
                  %262 = vst [vmem:[%s254 + $0x18] sm:$0xff] %v261
                  %v263 = vld [vmem:[%s253 + $0x180] sm:$0xff]
                  %264 = vst [vmem:[%s254 + $0x20] sm:$0xff] %v263
                  %v265 = vld [vmem:[%s253 + $0x1e0] sm:$0xff]
                  %266 = vst [vmem:[%s254 + $0x28] sm:$0xff] %v265
                  %v267 = vld [vmem:[%s253 + $0x240] sm:$0xff]
                  %268 = vst [vmem:[%s254 + $0x30] sm:$0xff] %v267
                  %v269 = vld [vmem:[%s253 + $0x2a0] sm:$0xff]
                  %270 = vst [vmem:[%s254 + $0x38] sm:$0xff] %v269
                  %v271 = vld [vmem:[%s253 + $0x300] sm:$0xff]
                  %272 = vst [vmem:[%s254 + $0x40] sm:$0xff] %v271
                  %v273 = vld [vmem:[%s253 + $0x360] sm:$0xff]
                  %274 = vst [vmem:[%s254 + $0x48] sm:$0xff] %v273
                  %v275 = vld [vmem:[%s253 + $0x3c0] sm:$0xff]
                  %276 = vst [vmem:[%s254 + $0x50] sm:$0xff] %v275
                  %v277 = vld [vmem:[%s253 + $0x420] sm:$0xff]
                  %278 = vst [vmem:[%s254 + $0x58] sm:$0xff] %v277
                  %v279 = vld [vmem:[%s253 + $0x480] sm:$0xff]
                  %280 = vst [vmem:[%s254 + $0x60] sm:$0xff] %v279
                  %v281 = vld [vmem:[%s253 + $0x4e0] sm:$0xff]
                  %282 = vst [vmem:[%s254 + $0x68] sm:$0xff] %v281
                  %v283 = vld [vmem:[%s253 + $0x540] sm:$0xff]
                  %284 = vst [vmem:[%s254 + $0x70] sm:$0xff] %v283
                  %v285 = vld [vmem:[%s253 + $0x5a0] sm:$0xff]
                  %286 = vst [vmem:[%s254 + $0x78] sm:$0xff] %v285
                $region48: #{bert_self_attention.3} parent=42 // loop_footer
                  %s252 = sadd.s32 1, %s248
                $region49: #{bert_self_attention.3} parent=42 // loop_footer_branch
                  %247 = sbr.rel target = $region45
                $region50: #{bert_self_attention.3} parent=42 // loop_exit
                  _
              $region43: #{bert_self_attention.3} parent=27 // pred_fallthru
                _
              // Predicated region
              $region51: #{bert_self_attention.3} parent=27 // pred_check
                _
              $region52: #{bert_self_attention.3} parent=27 // pred_check_branch
                %288 = sbr.rel target = $region54
              $region53: #{bert_self_attention.3} parent=27 // pred_region
                _
              $region54: #{bert_self_attention.3} parent=27 // pred_fallthru
                _
            $region28: #{bert_self_attention.3} parent=23 // pred_fallthru
              _
            // Predicated region
            $region29: #{bert_self_attention.3} parent=23 // pred_check
              _
            $region30: #{bert_self_attention.3} parent=23 // pred_check_branch
              %202 = sbr.rel target = $region32
            $region31: #{bert_self_attention.3} parent=23 // pred_region
              %s204 = ssub.s32 256, 1
              loop: start=0, step=1, limit=1
              $region33: #{bert_self_attention.3} parent=31 // loop_pre_header
                _
              $region34: #{bert_self_attention.3} parent=31 // loop_header
                %s206 = sphi 0, %s210
                %p207 = scmp.ge.s32.totalorder %s206, 1
                %s211 = sphi %s196, %s196
                %s212 = sphi %s192, %s192
              $region35: #{bert_self_attention.3} parent=31 // loop_header_branch
                %209 = sbr.rel (%p207) target = $region39
              $region36: #{bert_self_attention.3} parent=31 // loop_body
                %v213 = vld [vmem:[%s211] sm:%s204]
                %214 = vst [vmem:[%s212] sm:%s204] %v213
                %v215 = vld [vmem:[%s211 + $0x60] sm:%s204]
                %216 = vst [vmem:[%s212 + $0x8] sm:%s204] %v215
                %v217 = vld [vmem:[%s211 + $0xc0] sm:%s204]
                %218 = vst [vmem:[%s212 + $0x10] sm:%s204] %v217
                %v219 = vld [vmem:[%s211 + $0x120] sm:%s204]
                %220 = vst [vmem:[%s212 + $0x18] sm:%s204] %v219
                %v221 = vld [vmem:[%s211 + $0x180] sm:%s204]
                %222 = vst [vmem:[%s212 + $0x20] sm:%s204] %v221
                %v223 = vld [vmem:[%s211 + $0x1e0] sm:%s204]
                %224 = vst [vmem:[%s212 + $0x28] sm:%s204] %v223
                %v225 = vld [vmem:[%s211 + $0x240] sm:%s204]
                %226 = vst [vmem:[%s212 + $0x30] sm:%s204] %v225
                %v227 = vld [vmem:[%s211 + $0x2a0] sm:%s204]
                %228 = vst [vmem:[%s212 + $0x38] sm:%s204] %v227
                %v229 = vld [vmem:[%s211 + $0x300] sm:%s204]
                %230 = vst [vmem:[%s212 + $0x40] sm:%s204] %v229
                %v231 = vld [vmem:[%s211 + $0x360] sm:%s204]
                %232 = vst [vmem:[%s212 + $0x48] sm:%s204] %v231
                %v233 = vld [vmem:[%s211 + $0x3c0] sm:%s204]
                %234 = vst [vmem:[%s212 + $0x50] sm:%s204] %v233
                %v235 = vld [vmem:[%s211 + $0x420] sm:%s204]
                %236 = vst [vmem:[%s212 + $0x58] sm:%s204] %v235
                %v237 = vld [vmem:[%s211 + $0x480] sm:%s204]
                %238 = vst [vmem:[%s212 + $0x60] sm:%s204] %v237
                %v239 = vld [vmem:[%s211 + $0x4e0] sm:%s204]
                %240 = vst [vmem:[%s212 + $0x68] sm:%s204] %v239
                %v241 = vld [vmem:[%s211 + $0x540] sm:%s204]
                %242 = vst [vmem:[%s212 + $0x70] sm:%s204] %v241
                %v243 = vld [vmem:[%s211 + $0x5a0] sm:%s204]
                %244 = vst [vmem:[%s212 + $0x78] sm:%s204] %v243
              $region37: #{bert_self_attention.3} parent=31 // loop_footer
                %s210 = sadd.s32 1, %s206
              $region38: #{bert_self_attention.3} parent=31 // loop_footer_branch
                %205 = sbr.rel target = $region34
              $region39: #{bert_self_attention.3} parent=31 // loop_exit
                _
            $region32: #{bert_self_attention.3} parent=23 // pred_fallthru
              _
          $region24: #{bert_self_attention.3} parent=19 // pred_fallthru
            _
          %289 = vnop
        $region20: #{bert_self_attention.3} parent=15 // pred_fallthru
          _
        // Predicated region
        $region55: #{bert_self_attention.3} parent=15 // pred_check
          %p290 = pneg %p77
        $region56: #{bert_self_attention.3} parent=15 // pred_check_branch
          %292 = sbr.rel (%p290) target = $region58
        $region57: #{bert_self_attention.3} parent=15 // pred_region
          %s293 = sand.u32 %s67, 1
          %s294 = sand.u32 %s67, 1
          %s295 = smul.addr %s294, 128
          %s296 = scalar_lea.vmem [#allocation3], %s295
          %s297 = sadd.s32 %s21, 4
          %s298 = smul.addr %s20, 192
          %s299 = sadd.s32 %s297, %s298
          %s300 = smul.addr %s299, 8
          %s301 = scalar_lea.vmem %s1, %s300
          // Predicated region
          $region59: #{bert_self_attention.3} parent=57 // pred_check
            _
          $region60: #{bert_self_attention.3} parent=57 // pred_check_branch
            %303 = sbr.rel (0) target = $region62
          $region61: #{bert_self_attention.3} parent=57 // pred_region
            // Predicated region
            $region63: #{bert_self_attention.3} parent=61 // pred_check
              _
            $region64: #{bert_self_attention.3} parent=61 // pred_check_branch
              %305 = sbr.rel (0) target = $region66
            $region65: #{bert_self_attention.3} parent=61 // pred_region
              // Predicated region
              $region78: #{bert_self_attention.3} parent=65 // pred_check
                _
              $region79: #{bert_self_attention.3} parent=65 // pred_check_branch
                %351 = sbr.rel (0) target = $region81
              $region80: #{bert_self_attention.3} parent=65 // pred_region
                loop: start=0, step=1, limit=1
                $region82: #{bert_self_attention.3} parent=80 // loop_pre_header
                  _
                $region83: #{bert_self_attention.3} parent=80 // loop_header
                  %s353 = sphi 0, %s357
                  %p354 = scmp.ge.s32.totalorder %s353, 1
                  %s358 = sphi %s301, %s301
                  %s359 = sphi %s296, %s296
                $region84: #{bert_self_attention.3} parent=80 // loop_header_branch
                  %356 = sbr.rel (%p354) target = $region88
                $region85: #{bert_self_attention.3} parent=80 // loop_body
                  %v360 = vld [vmem:[%s358] sm:$0xff]
                  %361 = vst [vmem:[%s359] sm:$0xff] %v360
                  %v362 = vld [vmem:[%s358 + $0x60] sm:$0xff]
                  %363 = vst [vmem:[%s359 + $0x8] sm:$0xff] %v362
                  %v364 = vld [vmem:[%s358 + $0xc0] sm:$0xff]
                  %365 = vst [vmem:[%s359 + $0x10] sm:$0xff] %v364
                  %v366 = vld [vmem:[%s358 + $0x120] sm:$0xff]
                  %367 = vst [vmem:[%s359 + $0x18] sm:$0xff] %v366
                  %v368 = vld [vmem:[%s358 + $0x180] sm:$0xff]
                  %369 = vst [vmem:[%s359 + $0x20] sm:$0xff] %v368
                  %v370 = vld [vmem:[%s358 + $0x1e0] sm:$0xff]
                  %371 = vst [vmem:[%s359 + $0x28] sm:$0xff] %v370
                  %v372 = vld [vmem:[%s358 + $0x240] sm:$0xff]
                  %373 = vst [vmem:[%s359 + $0x30] sm:$0xff] %v372
                  %v374 = vld [vmem:[%s358 + $0x2a0] sm:$0xff]
                  %375 = vst [vmem:[%s359 + $0x38] sm:$0xff] %v374
                  %v376 = vld [vmem:[%s358 + $0x300] sm:$0xff]
                  %377 = vst [vmem:[%s359 + $0x40] sm:$0xff] %v376
                  %v378 = vld [vmem:[%s358 + $0x360] sm:$0xff]
                  %379 = vst [vmem:[%s359 + $0x48] sm:$0xff] %v378
                  %v380 = vld [vmem:[%s358 + $0x3c0] sm:$0xff]
                  %381 = vst [vmem:[%s359 + $0x50] sm:$0xff] %v380
                  %v382 = vld [vmem:[%s358 + $0x420] sm:$0xff]
                  %383 = vst [vmem:[%s359 + $0x58] sm:$0xff] %v382
                  %v384 = vld [vmem:[%s358 + $0x480] sm:$0xff]
                  %385 = vst [vmem:[%s359 + $0x60] sm:$0xff] %v384
                  %v386 = vld [vmem:[%s358 + $0x4e0] sm:$0xff]
                  %387 = vst [vmem:[%s359 + $0x68] sm:$0xff] %v386
                  %v388 = vld [vmem:[%s358 + $0x540] sm:$0xff]
                  %389 = vst [vmem:[%s359 + $0x70] sm:$0xff] %v388
                  %v390 = vld [vmem:[%s358 + $0x5a0] sm:$0xff]
                  %391 = vst [vmem:[%s359 + $0x78] sm:$0xff] %v390
                $region86: #{bert_self_attention.3} parent=80 // loop_footer
                  %s357 = sadd.s32 1, %s353
                $region87: #{bert_self_attention.3} parent=80 // loop_footer_branch
                  %352 = sbr.rel target = $region83
                $region88: #{bert_self_attention.3} parent=80 // loop_exit
                  _
              $region81: #{bert_self_attention.3} parent=65 // pred_fallthru
                _
              // Predicated region
              $region89: #{bert_self_attention.3} parent=65 // pred_check
                _
              $region90: #{bert_self_attention.3} parent=65 // pred_check_branch
                %393 = sbr.rel target = $region92
              $region91: #{bert_self_attention.3} parent=65 // pred_region
                _
              $region92: #{bert_self_attention.3} parent=65 // pred_fallthru
                _
            $region66: #{bert_self_attention.3} parent=61 // pred_fallthru
              _
            // Predicated region
            $region67: #{bert_self_attention.3} parent=61 // pred_check
              _
            $region68: #{bert_self_attention.3} parent=61 // pred_check_branch
              %307 = sbr.rel target = $region70
            $region69: #{bert_self_attention.3} parent=61 // pred_region
              %s309 = ssub.s32 256, 1
              loop: start=0, step=1, limit=1
              $region71: #{bert_self_attention.3} parent=69 // loop_pre_header
                _
              $region72: #{bert_self_attention.3} parent=69 // loop_header
                %s311 = sphi 0, %s315
                %p312 = scmp.ge.s32.totalorder %s311, 1
                %s316 = sphi %s301, %s301
                %s317 = sphi %s296, %s296
              $region73: #{bert_self_attention.3} parent=69 // loop_header_branch
                %314 = sbr.rel (%p312) target = $region77
              $region74: #{bert_self_attention.3} parent=69 // loop_body
                %v318 = vld [vmem:[%s316] sm:%s309]
                %319 = vst [vmem:[%s317] sm:%s309] %v318
                %v320 = vld [vmem:[%s316 + $0x60] sm:%s309]
                %321 = vst [vmem:[%s317 + $0x8] sm:%s309] %v320
                %v322 = vld [vmem:[%s316 + $0xc0] sm:%s309]
                %323 = vst [vmem:[%s317 + $0x10] sm:%s309] %v322
                %v324 = vld [vmem:[%s316 + $0x120] sm:%s309]
                %325 = vst [vmem:[%s317 + $0x18] sm:%s309] %v324
                %v326 = vld [vmem:[%s316 + $0x180] sm:%s309]
                %327 = vst [vmem:[%s317 + $0x20] sm:%s309] %v326
                %v328 = vld [vmem:[%s316 + $0x1e0] sm:%s309]
                %329 = vst [vmem:[%s317 + $0x28] sm:%s309] %v328
                %v330 = vld [vmem:[%s316 + $0x240] sm:%s309]
                %331 = vst [vmem:[%s317 + $0x30] sm:%s309] %v330
                %v332 = vld [vmem:[%s316 + $0x2a0] sm:%s309]
                %333 = vst [vmem:[%s317 + $0x38] sm:%s309] %v332
                %v334 = vld [vmem:[%s316 + $0x300] sm:%s309]
                %335 = vst [vmem:[%s317 + $0x40] sm:%s309] %v334
                %v336 = vld [vmem:[%s316 + $0x360] sm:%s309]
                %337 = vst [vmem:[%s317 + $0x48] sm:%s309] %v336
                %v338 = vld [vmem:[%s316 + $0x3c0] sm:%s309]
                %339 = vst [vmem:[%s317 + $0x50] sm:%s309] %v338
                %v340 = vld [vmem:[%s316 + $0x420] sm:%s309]
                %341 = vst [vmem:[%s317 + $0x58] sm:%s309] %v340
                %v342 = vld [vmem:[%s316 + $0x480] sm:%s309]
                %343 = vst [vmem:[%s317 + $0x60] sm:%s309] %v342
                %v344 = vld [vmem:[%s316 + $0x4e0] sm:%s309]
                %345 = vst [vmem:[%s317 + $0x68] sm:%s309] %v344
                %v346 = vld [vmem:[%s316 + $0x540] sm:%s309]
                %347 = vst [vmem:[%s317 + $0x70] sm:%s309] %v346
                %v348 = vld [vmem:[%s316 + $0x5a0] sm:%s309]
                %349 = vst [vmem:[%s317 + $0x78] sm:%s309] %v348
              $region75: #{bert_self_attention.3} parent=69 // loop_footer
                %s315 = sadd.s32 1, %s311
              $region76: #{bert_self_attention.3} parent=69 // loop_footer_branch
                %310 = sbr.rel target = $region72
              $region77: #{bert_self_attention.3} parent=69 // loop_exit
                _
            $region70: #{bert_self_attention.3} parent=61 // pred_fallthru
              _
          $region62: #{bert_self_attention.3} parent=57 // pred_fallthru
            _
          %394 = vnop
        $region58: #{bert_self_attention.3} parent=15 // pred_fallthru
          _
        // Predicated region
        $region93: #{bert_self_attention.3} parent=15 // pred_check
          %p395 = pneg %p107
        $region94: #{bert_self_attention.3} parent=15 // pred_check_branch
          %397 = sbr.rel (%p395) target = $region96
        $region95: #{bert_self_attention.3} parent=15 // pred_region
          %s398 = sand.u32 %s97, 1
          %s399 = sand.u32 %s97, 1
          %s400 = smul.addr %s399, 128
          %s401 = scalar_lea.vmem [#allocation4], %s400
          %s402 = sadd.s32 %s21, 8
          %s403 = smul.addr %s20, 192
          %s404 = sadd.s32 %s402, %s403
          %s405 = smul.addr %s404, 8
          %s406 = scalar_lea.vmem %s2, %s405
          // Predicated region
          $region97: #{bert_self_attention.3} parent=95 // pred_check
            _
          $region98: #{bert_self_attention.3} parent=95 // pred_check_branch
            %408 = sbr.rel (0) target = $region100
          $region99: #{bert_self_attention.3} parent=95 // pred_region
            // Predicated region
            $region101: #{bert_self_attention.3} parent=99 // pred_check
              _
            $region102: #{bert_self_attention.3} parent=99 // pred_check_branch
              %410 = sbr.rel (0) target = $region104
            $region103: #{bert_self_attention.3} parent=99 // pred_region
              // Predicated region
              $region116: #{bert_self_attention.3} parent=103 // pred_check
                _
              $region117: #{bert_self_attention.3} parent=103 // pred_check_branch
                %456 = sbr.rel (0) target = $region119
              $region118: #{bert_self_attention.3} parent=103 // pred_region
                loop: start=0, step=1, limit=1
                $region120: #{bert_self_attention.3} parent=118 // loop_pre_header
                  _
                $region121: #{bert_self_attention.3} parent=118 // loop_header
                  %s458 = sphi 0, %s462
                  %p459 = scmp.ge.s32.totalorder %s458, 1
                  %s463 = sphi %s406, %s406
                  %s464 = sphi %s401, %s401
                $region122: #{bert_self_attention.3} parent=118 // loop_header_branch
                  %461 = sbr.rel (%p459) target = $region126
                $region123: #{bert_self_attention.3} parent=118 // loop_body
                  %v465 = vld [vmem:[%s463] sm:$0xff]
                  %466 = vst [vmem:[%s464] sm:$0xff] %v465
                  %v467 = vld [vmem:[%s463 + $0x60] sm:$0xff]
                  %468 = vst [vmem:[%s464 + $0x8] sm:$0xff] %v467
                  %v469 = vld [vmem:[%s463 + $0xc0] sm:$0xff]
                  %470 = vst [vmem:[%s464 + $0x10] sm:$0xff] %v469
                  %v471 = vld [vmem:[%s463 + $0x120] sm:$0xff]
                  %472 = vst [vmem:[%s464 + $0x18] sm:$0xff] %v471
                  %v473 = vld [vmem:[%s463 + $0x180] sm:$0xff]
                  %474 = vst [vmem:[%s464 + $0x20] sm:$0xff] %v473
                  %v475 = vld [vmem:[%s463 + $0x1e0] sm:$0xff]
                  %476 = vst [vmem:[%s464 + $0x28] sm:$0xff] %v475
                  %v477 = vld [vmem:[%s463 + $0x240] sm:$0xff]
                  %478 = vst [vmem:[%s464 + $0x30] sm:$0xff] %v477
                  %v479 = vld [vmem:[%s463 + $0x2a0] sm:$0xff]
                  %480 = vst [vmem:[%s464 + $0x38] sm:$0xff] %v479
                  %v481 = vld [vmem:[%s463 + $0x300] sm:$0xff]
                  %482 = vst [vmem:[%s464 + $0x40] sm:$0xff] %v481
                  %v483 = vld [vmem:[%s463 + $0x360] sm:$0xff]
                  %484 = vst [vmem:[%s464 + $0x48] sm:$0xff] %v483
                  %v485 = vld [vmem:[%s463 + $0x3c0] sm:$0xff]
                  %486 = vst [vmem:[%s464 + $0x50] sm:$0xff] %v485
                  %v487 = vld [vmem:[%s463 + $0x420] sm:$0xff]
                  %488 = vst [vmem:[%s464 + $0x58] sm:$0xff] %v487
                  %v489 = vld [vmem:[%s463 + $0x480] sm:$0xff]
                  %490 = vst [vmem:[%s464 + $0x60] sm:$0xff] %v489
                  %v491 = vld [vmem:[%s463 + $0x4e0] sm:$0xff]
                  %492 = vst [vmem:[%s464 + $0x68] sm:$0xff] %v491
                  %v493 = vld [vmem:[%s463 + $0x540] sm:$0xff]
                  %494 = vst [vmem:[%s464 + $0x70] sm:$0xff] %v493
                  %v495 = vld [vmem:[%s463 + $0x5a0] sm:$0xff]
                  %496 = vst [vmem:[%s464 + $0x78] sm:$0xff] %v495
                $region124: #{bert_self_attention.3} parent=118 // loop_footer
                  %s462 = sadd.s32 1, %s458
                $region125: #{bert_self_attention.3} parent=118 // loop_footer_branch
                  %457 = sbr.rel target = $region121
                $region126: #{bert_self_attention.3} parent=118 // loop_exit
                  _
              $region119: #{bert_self_attention.3} parent=103 // pred_fallthru
                _
              // Predicated region
              $region127: #{bert_self_attention.3} parent=103 // pred_check
                _
              $region128: #{bert_self_attention.3} parent=103 // pred_check_branch
                %498 = sbr.rel target = $region130
              $region129: #{bert_self_attention.3} parent=103 // pred_region
                _
              $region130: #{bert_self_attention.3} parent=103 // pred_fallthru
                _
            $region104: #{bert_self_attention.3} parent=99 // pred_fallthru
              _
            // Predicated region
            $region105: #{bert_self_attention.3} parent=99 // pred_check
              _
            $region106: #{bert_self_attention.3} parent=99 // pred_check_branch
              %412 = sbr.rel target = $region108
            $region107: #{bert_self_attention.3} parent=99 // pred_region
              %s414 = ssub.s32 256, 1
              loop: start=0, step=1, limit=1
              $region109: #{bert_self_attention.3} parent=107 // loop_pre_header
                _
              $region110: #{bert_self_attention.3} parent=107 // loop_header
                %s416 = sphi 0, %s420
                %p417 = scmp.ge.s32.totalorder %s416, 1
                %s421 = sphi %s406, %s406
                %s422 = sphi %s401, %s401
              $region111: #{bert_self_attention.3} parent=107 // loop_header_branch
                %419 = sbr.rel (%p417) target = $region115
              $region112: #{bert_self_attention.3} parent=107 // loop_body
                %v423 = vld [vmem:[%s421] sm:%s414]
                %424 = vst [vmem:[%s422] sm:%s414] %v423
                %v425 = vld [vmem:[%s421 + $0x60] sm:%s414]
                %426 = vst [vmem:[%s422 + $0x8] sm:%s414] %v425
                %v427 = vld [vmem:[%s421 + $0xc0] sm:%s414]
                %428 = vst [vmem:[%s422 + $0x10] sm:%s414] %v427
                %v429 = vld [vmem:[%s421 + $0x120] sm:%s414]
                %430 = vst [vmem:[%s422 + $0x18] sm:%s414] %v429
                %v431 = vld [vmem:[%s421 + $0x180] sm:%s414]
                %432 = vst [vmem:[%s422 + $0x20] sm:%s414] %v431
                %v433 = vld [vmem:[%s421 + $0x1e0] sm:%s414]
                %434 = vst [vmem:[%s422 + $0x28] sm:%s414] %v433
                %v435 = vld [vmem:[%s421 + $0x240] sm:%s414]
                %436 = vst [vmem:[%s422 + $0x30] sm:%s414] %v435
                %v437 = vld [vmem:[%s421 + $0x2a0] sm:%s414]
                %438 = vst [vmem:[%s422 + $0x38] sm:%s414] %v437
                %v439 = vld [vmem:[%s421 + $0x300] sm:%s414]
                %440 = vst [vmem:[%s422 + $0x40] sm:%s414] %v439
                %v441 = vld [vmem:[%s421 + $0x360] sm:%s414]
                %442 = vst [vmem:[%s422 + $0x48] sm:%s414] %v441
                %v443 = vld [vmem:[%s421 + $0x3c0] sm:%s414]
                %444 = vst [vmem:[%s422 + $0x50] sm:%s414] %v443
                %v445 = vld [vmem:[%s421 + $0x420] sm:%s414]
                %446 = vst [vmem:[%s422 + $0x58] sm:%s414] %v445
                %v447 = vld [vmem:[%s421 + $0x480] sm:%s414]
                %448 = vst [vmem:[%s422 + $0x60] sm:%s414] %v447
                %v449 = vld [vmem:[%s421 + $0x4e0] sm:%s414]
                %450 = vst [vmem:[%s422 + $0x68] sm:%s414] %v449
                %v451 = vld [vmem:[%s421 + $0x540] sm:%s414]
                %452 = vst [vmem:[%s422 + $0x70] sm:%s414] %v451
                %v453 = vld [vmem:[%s421 + $0x5a0] sm:%s414]
                %454 = vst [vmem:[%s422 + $0x78] sm:%s414] %v453
              $region113: #{bert_self_attention.3} parent=107 // loop_footer
                %s420 = sadd.s32 1, %s416
              $region114: #{bert_self_attention.3} parent=107 // loop_footer_branch
                %415 = sbr.rel target = $region110
              $region115: #{bert_self_attention.3} parent=107 // loop_exit
                _
            $region108: #{bert_self_attention.3} parent=99 // pred_fallthru
              _
          $region100: #{bert_self_attention.3} parent=95 // pred_fallthru
            _
          %499 = vnop
        $region96: #{bert_self_attention.3} parent=15 // pred_fallthru
          _
        // Predicated region
        $region131: #{bert_self_attention.3} parent=15 // pred_check
          %p500 = pneg %p133
        $region132: #{bert_self_attention.3} parent=15 // pred_check_branch
          %502 = sbr.rel (%p500) target = $region134
        $region133: #{bert_self_attention.3} parent=15 // pred_region
          %p503 = scmp.lt.s32.totalorder %s20, 1
          %s504 = scalar_select %p503, %s20, 1
          %s505 = scalar_lea.vmem %s3, %s504
        $region134: #{bert_self_attention.3} parent=15 // pred_fallthru
          _
      $region16: #{bert_self_attention.3} parent=5 // pred_fallthru
        _
      %p506 = scmp.le.s32.totalorder 1, %s13
      %p507 = scmp.lt.s32.totalorder %s13, 9
      %p508 = pnand %p506, %p507
      %p509 = pneg %p508
      // Predicated region
      $region135: #{bert_self_attention.3} parent=5 // pred_check
        _
      $region136: #{bert_self_attention.3} parent=5 // pred_check_branch
        %511 = sbr.rel (%p508) target = $region138
      $region137: #{bert_self_attention.3} parent=5 // pred_region
        %s512 = ssub.s32 %s13, 1
        %s513 = sand.u32 %s40, 1
        %s514 = sand.u32 %s40, 1
        %s515 = smul.addr %s514, 128
        %s516 = scalar_lea.vmem [#allocation2], %s515
        // Predicated region
        $region139: #{bert_self_attention.3} parent=137 // pred_check
          %p517 = pneg %p53
        $region140: #{bert_self_attention.3} parent=137 // pred_check_branch
          %519 = sbr.rel (%p517) target = $region142
        $region141: #{bert_self_attention.3} parent=137 // pred_region
          _
        $region142: #{bert_self_attention.3} parent=137 // pred_fallthru
          _
        %s520 = sand.u32 %s70, 1
        %s521 = sand.u32 %s70, 1
        %s522 = smul.addr %s521, 128
        %s523 = scalar_lea.vmem [#allocation3], %s522
        // Predicated region
        $region143: #{bert_self_attention.3} parent=137 // pred_check
          %p524 = pneg %p83
        $region144: #{bert_self_attention.3} parent=137 // pred_check_branch
          %526 = sbr.rel (%p524) target = $region146
        $region145: #{bert_self_attention.3} parent=137 // pred_region
          _
        $region146: #{bert_self_attention.3} parent=137 // pred_fallthru
          _
        %s527 = sand.u32 %s100, 1
        %s528 = sand.u32 %s100, 1
        %s529 = smul.addr %s528, 128
        %s530 = scalar_lea.vmem [#allocation4], %s529
        // Predicated region
        $region147: #{bert_self_attention.3} parent=137 // pred_check
          %p531 = pneg %p113
        $region148: #{bert_self_attention.3} parent=137 // pred_check_branch
          %533 = sbr.rel (%p531) target = $region150
        $region149: #{bert_self_attention.3} parent=137 // pred_region
          _
        $region150: #{bert_self_attention.3} parent=137 // pred_fallthru
          _
        %s534 = sand.u32 %s40, 1
        %s535 = sand.u32 %s40, 1
        %s536 = smul.addr %s535, 128
        %s537 = scalar_lea.vmem [#allocation2], %s536
        %p538 = pneg %p53
        %p539 = pneg %p50
        %s540 = sand.u32 %s70, 1
        %s541 = sand.u32 %s70, 1
        %s542 = smul.addr %s541, 128
        %s543 = scalar_lea.vmem [#allocation3], %s542
        %p544 = pneg %p83
        %p545 = pneg %p80
        %s546 = sand.u32 %s100, 1
        %s547 = sand.u32 %s100, 1
        %s548 = smul.addr %s547, 128
        %s549 = scalar_lea.vmem [#allocation4], %s548
        %p550 = pneg %p113
        %p551 = pneg %p110
        %p552 = scmp.lt.s32.totalorder %s22, 1
        %s553 = scalar_select %p552, %s22, 1
        %s554 = scalar_lea.vmem %s3, %s553
        %p555 = pneg %p139
        %p556 = pneg %p136
        %p557 = pneg %p167
        %p558 = pneg %p164
        %s559 = sand.u32 %s154, 1
        %s560 = scalar_lea.sflag [#allocation6], %s559
        %s561 = sand.u32 %s154, 1
        %s562 = smul.addr %s561, 128
        %s563 = scalar_lea.vmem [#allocation5], %s562
        %s564 = sadd.s32 %s23, 4
        %s565 = sadd.s32 %s23, 8
        %p566 = scmp.lt.s32.totalorder %s22, 1
        %s567 = scalar_select %p566, %s22, 1
        %s568 = scalar_lea.vmem %s3, %s567
        %v570 = vld [vmem:[%s516] sm:$0xff]
        %v571 = vld [vmem:[%s516 + $0x8] sm:$0xff]
        %v572 = vld [vmem:[%s516 + $0x10] sm:$0xff]
        %v573 = vld [vmem:[%s516 + $0x18] sm:$0xff]
        %v574 = vld [vmem:[%s516 + $0x20] sm:$0xff]
        %v575 = vld [vmem:[%s516 + $0x28] sm:$0xff]
        %v576 = vld [vmem:[%s516 + $0x30] sm:$0xff]
        %v577 = vld [vmem:[%s516 + $0x38] sm:$0xff]
        %v578 = vld [vmem:[%s516 + $0x40] sm:$0xff]
        %v579 = vld [vmem:[%s516 + $0x48] sm:$0xff]
        %v580 = vld [vmem:[%s516 + $0x50] sm:$0xff]
        %v581 = vld [vmem:[%s516 + $0x58] sm:$0xff]
        %v582 = vld [vmem:[%s516 + $0x60] sm:$0xff]
        %v583 = vld [vmem:[%s516 + $0x68] sm:$0xff]
        %v584 = vld [vmem:[%s516 + $0x70] sm:$0xff]
        %v585 = vld [vmem:[%s516 + $0x78] sm:$0xff]
        %v586 = vpack.c.bf16 %v571, %v570
        %v587 = vpack.c.bf16 %v573, %v572
        %v588 = vpack.c.bf16 %v575, %v574
        %v589 = vpack.c.bf16 %v577, %v576
        %v590 = vpack.c.bf16 %v579, %v578
        %v591 = vpack.c.bf16 %v581, %v580
        %v592 = vpack.c.bf16 %v583, %v582
        %v593 = vpack.c.bf16 %v585, %v584
        %v594 = vld [vmem:[%s523] sm:$0xff]
        %v595 = vld [vmem:[%s523 + $0x8] sm:$0xff]
        %v596 = vld [vmem:[%s523 + $0x10] sm:$0xff]
        %v597 = vld [vmem:[%s523 + $0x18] sm:$0xff]
        %v598 = vld [vmem:[%s523 + $0x20] sm:$0xff]
        %v599 = vld [vmem:[%s523 + $0x28] sm:$0xff]
        %v600 = vld [vmem:[%s523 + $0x30] sm:$0xff]
        %v601 = vld [vmem:[%s523 + $0x38] sm:$0xff]
        %v602 = vld [vmem:[%s523 + $0x40] sm:$0xff]
        %v603 = vld [vmem:[%s523 + $0x48] sm:$0xff]
        %v604 = vld [vmem:[%s523 + $0x50] sm:$0xff]
        %v605 = vld [vmem:[%s523 + $0x58] sm:$0xff]
        %v606 = vld [vmem:[%s523 + $0x60] sm:$0xff]
        %v607 = vld [vmem:[%s523 + $0x68] sm:$0xff]
        %v608 = vld [vmem:[%s523 + $0x70] sm:$0xff]
        %v609 = vld [vmem:[%s523 + $0x78] sm:$0xff]
        %v610 = vpack.c.bf16 %v595, %v594
        %v611 = vpack.c.bf16 %v597, %v596
        %v612 = vpack.c.bf16 %v599, %v598
        %v613 = vpack.c.bf16 %v601, %v600
        %v614 = vpack.c.bf16 %v603, %v602
        %v615 = vpack.c.bf16 %v605, %v604
        %v616 = vpack.c.bf16 %v607, %v606
        %v617 = vpack.c.bf16 %v609, %v608
        %v618 = vld [vmem:[%s530] sm:$0xff]
        %v619 = vld [vmem:[%s530 + $0x8] sm:$0xff]
        %v620 = vld [vmem:[%s530 + $0x10] sm:$0xff]
        %v621 = vld [vmem:[%s530 + $0x18] sm:$0xff]
        %v622 = vld [vmem:[%s530 + $0x20] sm:$0xff]
        %v623 = vld [vmem:[%s530 + $0x28] sm:$0xff]
        %v624 = vld [vmem:[%s530 + $0x30] sm:$0xff]
        %v625 = vld [vmem:[%s530 + $0x38] sm:$0xff]
        %v626 = vld [vmem:[%s530 + $0x40] sm:$0xff]
        %v627 = vld [vmem:[%s530 + $0x48] sm:$0xff]
        %v628 = vld [vmem:[%s530 + $0x50] sm:$0xff]
        %v629 = vld [vmem:[%s530 + $0x58] sm:$0xff]
        %v630 = vld [vmem:[%s530 + $0x60] sm:$0xff]
        %v631 = vld [vmem:[%s530 + $0x68] sm:$0xff]
        %v632 = vld [vmem:[%s530 + $0x70] sm:$0xff]
        %v633 = vld [vmem:[%s530 + $0x78] sm:$0xff]
        %v634 = vpack.c.bf16 %v619, %v618
        %v635 = vpack.c.bf16 %v621, %v620
        %v636 = vpack.c.bf16 %v623, %v622
        %v637 = vpack.c.bf16 %v625, %v624
        %v638 = vpack.c.bf16 %v627, %v626
        %v639 = vpack.c.bf16 %v629, %v628
        %v640 = vpack.c.bf16 %v631, %v630
        %v641 = vpack.c.bf16 %v633, %v632
        %v642 = vld [vmem:[%s568] sm:$0x1]
        %v644 = vlaneseq
        %v645 = vshrl.u32 %v644, 7
        %v646 = vsub.s32 0, %v645
        %v647 = vrot.slane %v642, %v646
        %649 = vmatprep.subr.bf16.mxu0 0
        %650 = vmatpush1.bf16.xpose.msra.mxu0 %v617
        %651 = vmatprep.subr.bf16.mxu0 0
        %652 = vmatpush1.bf16.xpose.msra.mxu0 %v616
        %653 = vmatprep.subr.bf16.mxu0 0
        %654 = vmatpush1.bf16.xpose.msra.mxu0 %v615
        %655 = vmatprep.subr.bf16.mxu0 0
        %656 = vmatpush1.bf16.xpose.msra.mxu0 %v614
        %657 = vmatprep.subr.bf16.mxu0 0
        %658 = vmatpush1.bf16.xpose.msra.mxu0 %v613
        %659 = vmatprep.subr.bf16.mxu0 0
        %660 = vmatpush1.bf16.xpose.msra.mxu0 %v612
        %661 = vmatprep.subr.bf16.mxu0 0
        %662 = vmatpush1.bf16.xpose.msra.mxu0 %v611
        %663 = vmatprep.subr.bf16.mxu0 0
        %664 = vmatpush1.bf16.xpose.msra.mxu0 %v610
        %665 = vmatprep.subr.bf16.mxu0 0
        %666 = vmatpush2.bf16.xpose.msra.mxu0 0
        %667 = vmatprep.subr.bf16.mxu0 0
        %668 = vmatpush2.bf16.xpose.msra.mxu0 0
        %669 = vmatprep.subr.bf16.mxu0 0
        %670 = vmatpush2.bf16.xpose.msra.mxu0 0
        %671 = vmatprep.subr.bf16.mxu0 0
        %672 = vmatpush2.bf16.xpose.msra.mxu0 0
        %673 = vmatprep.subr.bf16.mxu0 0
        %674 = vmatpush2.bf16.xpose.msra.mxu0 0
        %675 = vmatprep.subr.bf16.mxu0 0
        %676 = vmatpush2.bf16.xpose.msra.mxu0 0
        %677 = vmatprep.subr.bf16.mxu0 0
        %678 = vmatpush2.bf16.xpose.msra.mxu0 0
        %679 = vmatprep.subr.bf16.mxu0 0
        %680 = vmatpush2.bf16.xpose.msra.mxu0 0
        %681 = vmatprep.mubr.bf16.mxu0 0
        %682 = vmatmul.mubr.bf16.gmra.mxu0 %v586
        %v683 = vpop.f32.mrf.mxu0
        %v684 = vadd.f32 %v647, %v683
        %v685 = vpop.f32.mrf.mxu0
        %v686 = vpop.f32.mrf.mxu0
        %v687 = vadd.f32 %v647, %v686
        %v688 = vpop.f32.mrf.mxu0
        %689 = vmatprep.mubr.bf16.mxu0 0
        %690 = vmatmul.mubr.bf16.gmra.mxu0 %v587
        %v691 = vpop.f32.mrf.mxu0
        %v692 = vadd.f32 %v647, %v691
        %v693 = vpop.f32.mrf.mxu0
        %v694 = vpop.f32.mrf.mxu0
        %v695 = vadd.f32 %v647, %v694
        %v696 = vpop.f32.mrf.mxu0
        %697 = vmatprep.mubr.bf16.mxu0 0
        %698 = vmatmul.mubr.bf16.gmra.mxu0 %v588
        %v699 = vpop.f32.mrf.mxu0
        %v700 = vadd.f32 %v647, %v699
        %v701 = vpop.f32.mrf.mxu0
        %v702 = vpop.f32.mrf.mxu0
        %v703 = vadd.f32 %v647, %v702
        %v704 = vpop.f32.mrf.mxu0
        %705 = vmatprep.mubr.bf16.mxu0 0
        %706 = vmatmul.mubr.bf16.gmra.mxu0 %v589
        %v707 = vpop.f32.mrf.mxu0
        %v708 = vadd.f32 %v647, %v707
        %v709 = vpop.f32.mrf.mxu0
        %v710 = vpop.f32.mrf.mxu0
        %v711 = vadd.f32 %v647, %v710
        %v712 = vpop.f32.mrf.mxu0
        %713 = vmatprep.mubr.bf16.mxu0 0
        %714 = vmatmul.mubr.bf16.gmra.mxu0 %v590
        %v715 = vpop.f32.mrf.mxu0
        %v716 = vadd.f32 %v647, %v715
        %v717 = vpop.f32.mrf.mxu0
        %v718 = vpop.f32.mrf.mxu0
        %v719 = vadd.f32 %v647, %v718
        %v720 = vpop.f32.mrf.mxu0
        %721 = vmatprep.mubr.bf16.mxu0 0
        %722 = vmatmul.mubr.bf16.gmra.mxu0 %v591
        %v723 = vpop.f32.mrf.mxu0
        %v724 = vadd.f32 %v647, %v723
        %v725 = vpop.f32.mrf.mxu0
        %v726 = vpop.f32.mrf.mxu0
        %v727 = vadd.f32 %v647, %v726
        %v728 = vpop.f32.mrf.mxu0
        %729 = vmatprep.mubr.bf16.mxu0 0
        %730 = vmatmul.mubr.bf16.gmra.mxu0 %v592
        %v731 = vpop.f32.mrf.mxu0
        %v732 = vadd.f32 %v647, %v731
        %v733 = vpop.f32.mrf.mxu0
        %v734 = vpop.f32.mrf.mxu0
        %v735 = vadd.f32 %v647, %v734
        %v736 = vpop.f32.mrf.mxu0
        %737 = vmatprep.mubr.bf16.mxu0 0
        %738 = vmatmul.mubr.bf16.gmra.mxu0 %v593
        %v739 = vpop.f32.mrf.mxu0
        %v740 = vadd.f32 %v647, %v739
        %v741 = vpop.f32.mrf.mxu0
        %v742 = vpop.f32.mrf.mxu0
        %v743 = vadd.f32 %v647, %v742
        %v744 = vpop.f32.mrf.mxu0
        %745 = vdwg.mxu0
        %746 = vmax.xlane.f32.xlu0 %v684
        %v747 = vpop.xlane.xlu0 %746
        %748 = vmax.xlane.f32.xlu0 %v687
        %v749 = vpop.xlane.xlu0 %748
        %750 = vmax.xlane.f32.xlu0 %v692
        %v751 = vpop.xlane.xlu0 %750
        %752 = vmax.xlane.f32.xlu0 %v695
        %v753 = vpop.xlane.xlu0 %752
        %754 = vmax.xlane.f32.xlu0 %v700
        %v755 = vpop.xlane.xlu0 %754
        %756 = vmax.xlane.f32.xlu0 %v703
        %v757 = vpop.xlane.xlu0 %756
        %758 = vmax.xlane.f32.xlu0 %v708
        %v759 = vpop.xlane.xlu0 %758
        %760 = vmax.xlane.f32.xlu0 %v711
        %v761 = vpop.xlane.xlu0 %760
        %762 = vmax.xlane.f32.xlu0 %v716
        %v763 = vpop.xlane.xlu0 %762
        %764 = vmax.xlane.f32.xlu0 %v719
        %v765 = vpop.xlane.xlu0 %764
        %766 = vmax.xlane.f32.xlu0 %v724
        %v767 = vpop.xlane.xlu0 %766
        %768 = vmax.xlane.f32.xlu0 %v727
        %v769 = vpop.xlane.xlu0 %768
        %770 = vmax.xlane.f32.xlu0 %v732
        %v771 = vpop.xlane.xlu0 %770
        %772 = vmax.xlane.f32.xlu0 %v735
        %v773 = vpop.xlane.xlu0 %772
        %774 = vmax.xlane.f32.xlu0 %v740
        %v775 = vpop.xlane.xlu0 %774
        %776 = vmax.xlane.f32.xlu0 %v743
        %v777 = vpop.xlane.xlu0 %776
        %v778 = vsub.f32 %v684, %v747
        %v779 = vsub.f32 %v687, %v749
        %v780 = vsub.f32 %v692, %v751
        %v781 = vsub.f32 %v695, %v753
        %v782 = vsub.f32 %v700, %v755
        %v783 = vsub.f32 %v703, %v757
        %v784 = vsub.f32 %v708, %v759
        %v785 = vsub.f32 %v711, %v761
        %v786 = vsub.f32 %v716, %v763
        %v787 = vsub.f32 %v719, %v765
        %v788 = vsub.f32 %v724, %v767
        %v789 = vsub.f32 %v727, %v769
        %v790 = vsub.f32 %v732, %v771
        %v791 = vsub.f32 %v735, %v773
        %v792 = vsub.f32 %v740, %v775
        %v793 = vsub.f32 %v743, %v777
        %v794 = vmul.f32 %v778, 1.442695
        %v795 = vpow.pop %v794
        %v796 = vmul.f32 %v779, 1.442695
        %v797 = vpow.pop %v796
        %v798 = vmul.f32 %v780, 1.442695
        %v799 = vpow.pop %v798
        %v800 = vmul.f32 %v781, 1.442695
        %v801 = vpow.pop %v800
        %v802 = vmul.f32 %v782, 1.442695
        %v803 = vpow.pop %v802
        %v804 = vmul.f32 %v783, 1.442695
        %v805 = vpow.pop %v804
        %v806 = vmul.f32 %v784, 1.442695
        %v807 = vpow.pop %v806
        %v808 = vmul.f32 %v785, 1.442695
        %v809 = vpow.pop %v808
        %v810 = vmul.f32 %v786, 1.442695
        %v811 = vpow.pop %v810
        %v812 = vmul.f32 %v787, 1.442695
        %v813 = vpow.pop %v812
        %v814 = vmul.f32 %v788, 1.442695
        %v815 = vpow.pop %v814
        %v816 = vmul.f32 %v789, 1.442695
        %v817 = vpow.pop %v816
        %v818 = vmul.f32 %v790, 1.442695
        %v819 = vpow.pop %v818
        %v820 = vmul.f32 %v791, 1.442695
        %v821 = vpow.pop %v820
        %v822 = vmul.f32 %v792, 1.442695
        %v823 = vpow.pop %v822
        %v824 = vmul.f32 %v793, 1.442695
        %v825 = vpow.pop %v824
        %826 = vadd.xlane.f32.xlu0 %v795
        %v827 = vpop.xlane.xlu0 %826
        %828 = vadd.xlane.f32.xlu0 %v797
        %v829 = vpop.xlane.xlu0 %828
        %830 = vadd.xlane.f32.xlu0 %v799
        %v831 = vpop.xlane.xlu0 %830
        %832 = vadd.xlane.f32.xlu0 %v801
        %v833 = vpop.xlane.xlu0 %832
        %834 = vadd.xlane.f32.xlu0 %v803
        %v835 = vpop.xlane.xlu0 %834
        %836 = vadd.xlane.f32.xlu0 %v805
        %v837 = vpop.xlane.xlu0 %836
        %838 = vadd.xlane.f32.xlu0 %v807
        %v839 = vpop.xlane.xlu0 %838
        %840 = vadd.xlane.f32.xlu0 %v809
        %v841 = vpop.xlane.xlu0 %840
        %842 = vadd.xlane.f32.xlu0 %v811
        %v843 = vpop.xlane.xlu0 %842
        %844 = vadd.xlane.f32.xlu0 %v813
        %v845 = vpop.xlane.xlu0 %844
        %846 = vadd.xlane.f32.xlu0 %v815
        %v847 = vpop.xlane.xlu0 %846
        %848 = vadd.xlane.f32.xlu0 %v817
        %v849 = vpop.xlane.xlu0 %848
        %850 = vadd.xlane.f32.xlu0 %v819
        %v851 = vpop.xlane.xlu0 %850
        %852 = vadd.xlane.f32.xlu0 %v821
        %v853 = vpop.xlane.xlu0 %852
        %854 = vadd.xlane.f32.xlu0 %v823
        %v855 = vpop.xlane.xlu0 %854
        %856 = vadd.xlane.f32.xlu0 %v825
        %v857 = vpop.xlane.xlu0 %856
        %v858 = vrcp.pop %v827
        %v859 = vrcp.pop %v829
        %v860 = vrcp.pop %v831
        %v861 = vrcp.pop %v833
        %v862 = vrcp.pop %v835
        %v863 = vrcp.pop %v837
        %v864 = vrcp.pop %v839
        %v865 = vrcp.pop %v841
        %v866 = vrcp.pop %v843
        %v867 = vrcp.pop %v845
        %v868 = vrcp.pop %v847
        %v869 = vrcp.pop %v849
        %v870 = vrcp.pop %v851
        %v871 = vrcp.pop %v853
        %v872 = vrcp.pop %v855
        %v873 = vrcp.pop %v857
        %v874 = vmul.f32 %v795, %v858
        %v875 = vmul.f32 %v797, %v859
        %v876 = vmul.f32 %v799, %v860
        %v877 = vmul.f32 %v801, %v861
        %v878 = vmul.f32 %v803, %v862
        %v879 = vmul.f32 %v805, %v863
        %v880 = vmul.f32 %v807, %v864
        %v881 = vmul.f32 %v809, %v865
        %v882 = vmul.f32 %v811, %v866
        %v883 = vmul.f32 %v813, %v867
        %v884 = vmul.f32 %v815, %v868
        %v885 = vmul.f32 %v817, %v869
        %v886 = vmul.f32 %v819, %v870
        %v887 = vmul.f32 %v821, %v871
        %v888 = vmul.f32 %v823, %v872
        %v889 = vmul.f32 %v825, %v873
        %v890 = vpack.c.bf16 %v875, %v874
        %v891 = vpack.c.bf16 %v877, %v876
        %v892 = vpack.c.bf16 %v879, %v878
        %v893 = vpack.c.bf16 %v881, %v880
        %v894 = vpack.c.bf16 %v883, %v882
        %v895 = vpack.c.bf16 %v885, %v884
        %v896 = vpack.c.bf16 %v887, %v886
        %v897 = vpack.c.bf16 %v889, %v888
        %898 = vmatprep.subr.bf16.mxu0 0
        %899 = vmatpush1.bf16.msra.mxu0 %v641
        %900 = vmatprep.subr.bf16.mxu0 0
        %901 = vmatpush1.bf16.msra.mxu0 %v640
        %902 = vmatprep.subr.bf16.mxu0 0
        %903 = vmatpush1.bf16.msra.mxu0 %v639
        %904 = vmatprep.subr.bf16.mxu0 0
        %905 = vmatpush1.bf16.msra.mxu0 %v638
        %906 = vmatprep.subr.bf16.mxu0 0
        %907 = vmatpush1.bf16.msra.mxu0 %v637
        %908 = vmatprep.subr.bf16.mxu0 0
        %909 = vmatpush1.bf16.msra.mxu0 %v636
        %910 = vmatprep.subr.bf16.mxu0 0
        %911 = vmatpush1.bf16.msra.mxu0 %v635
        %912 = vmatprep.subr.bf16.mxu0 0
        %913 = vmatpush1.bf16.msra.mxu0 %v634
        %914 = vmatprep.subr.bf16.mxu0 0
        %915 = vmatpush2.bf16.msra.mxu0 0
        %916 = vmatprep.subr.bf16.mxu0 0
        %917 = vmatpush2.bf16.msra.mxu0 0
        %918 = vmatprep.subr.bf16.mxu0 0
        %919 = vmatpush2.bf16.msra.mxu0 0
        %920 = vmatprep.subr.bf16.mxu0 0
        %921 = vmatpush2.bf16.msra.mxu0 0
        %922 = vmatprep.subr.bf16.mxu0 0
        %923 = vmatpush2.bf16.msra.mxu0 0
        %924 = vmatprep.subr.bf16.mxu0 0
        %925 = vmatpush2.bf16.msra.mxu0 0
        %926 = vmatprep.subr.bf16.mxu0 0
        %927 = vmatpush2.bf16.msra.mxu0 0
        %928 = vmatprep.subr.bf16.mxu0 0
        %929 = vmatpush2.bf16.msra.mxu0 0
        %930 = vmatprep.mubr.bf16.mxu0 0
        %931 = vmatmul.mubr.bf16.gmra.mxu0 %v890
        %v932 = vpop.f32.mrf.mxu0
        %v933 = vadd.f32 0.0, %v932
        %v934 = vpop.f32.mrf.mxu0
        %v935 = vpop.f32.mrf.mxu0
        %v936 = vadd.f32 0.0, %v935
        %v937 = vpop.f32.mrf.mxu0
        %938 = vmatprep.mubr.bf16.mxu0 0
        %939 = vmatmul.mubr.bf16.gmra.mxu0 %v891
        %v940 = vpop.f32.mrf.mxu0
        %v941 = vadd.f32 0.0, %v940
        %v942 = vpop.f32.mrf.mxu0
        %v943 = vpop.f32.mrf.mxu0
        %v944 = vadd.f32 0.0, %v943
        %v945 = vpop.f32.mrf.mxu0
        %946 = vmatprep.mubr.bf16.mxu0 0
        %947 = vmatmul.mubr.bf16.gmra.mxu0 %v892
        %v948 = vpop.f32.mrf.mxu0
        %v949 = vadd.f32 0.0, %v948
        %v950 = vpop.f32.mrf.mxu0
        %v951 = vpop.f32.mrf.mxu0
        %v952 = vadd.f32 0.0, %v951
        %v953 = vpop.f32.mrf.mxu0
        %954 = vmatprep.mubr.bf16.mxu0 0
        %955 = vmatmul.mubr.bf16.gmra.mxu0 %v893
        %v956 = vpop.f32.mrf.mxu0
        %v957 = vadd.f32 0.0, %v956
        %v958 = vpop.f32.mrf.mxu0
        %v959 = vpop.f32.mrf.mxu0
        %v960 = vadd.f32 0.0, %v959
        %v961 = vpop.f32.mrf.mxu0
        %962 = vmatprep.mubr.bf16.mxu0 0
        %963 = vmatmul.mubr.bf16.gmra.mxu0 %v894
        %v964 = vpop.f32.mrf.mxu0
        %v965 = vadd.f32 0.0, %v964
        %v966 = vpop.f32.mrf.mxu0
        %v967 = vpop.f32.mrf.mxu0
        %v968 = vadd.f32 0.0, %v967
        %v969 = vpop.f32.mrf.mxu0
        %970 = vmatprep.mubr.bf16.mxu0 0
        %971 = vmatmul.mubr.bf16.gmra.mxu0 %v895
        %v972 = vpop.f32.mrf.mxu0
        %v973 = vadd.f32 0.0, %v972
        %v974 = vpop.f32.mrf.mxu0
        %v975 = vpop.f32.mrf.mxu0
        %v976 = vadd.f32 0.0, %v975
        %v977 = vpop.f32.mrf.mxu0
        %978 = vmatprep.mubr.bf16.mxu0 0
        %979 = vmatmul.mubr.bf16.gmra.mxu0 %v896
        %v980 = vpop.f32.mrf.mxu0
        %v981 = vadd.f32 0.0, %v980
        %v982 = vpop.f32.mrf.mxu0
        %v983 = vpop.f32.mrf.mxu0
        %v984 = vadd.f32 0.0, %v983
        %v985 = vpop.f32.mrf.mxu0
        %986 = vmatprep.mubr.bf16.mxu0 0
        %987 = vmatmul.mubr.bf16.gmra.mxu0 %v897
        %v988 = vpop.f32.mrf.mxu0
        %v989 = vadd.f32 0.0, %v988
        %v990 = vpop.f32.mrf.mxu0
        %v991 = vpop.f32.mrf.mxu0
        %v992 = vadd.f32 0.0, %v991
        %v993 = vpop.f32.mrf.mxu0
        %994 = vdwg.mxu0
        %995 = vst [vmem:[%s563] sm:$0xff] %v933
        %996 = vst [vmem:[%s563 + $0x8] sm:$0xff] %v936
        %997 = vst [vmem:[%s563 + $0x10] sm:$0xff] %v941
        %998 = vst [vmem:[%s563 + $0x18] sm:$0xff] %v944
        %999 = vst [vmem:[%s563 + $0x20] sm:$0xff] %v949
        %1000 = vst [vmem:[%s563 + $0x28] sm:$0xff] %v952
        %1001 = vst [vmem:[%s563 + $0x30] sm:$0xff] %v957
        %1002 = vst [vmem:[%s563 + $0x38] sm:$0xff] %v960
        %1003 = vst [vmem:[%s563 + $0x40] sm:$0xff] %v965
        %1004 = vst [vmem:[%s563 + $0x48] sm:$0xff] %v968
        %1005 = vst [vmem:[%s563 + $0x50] sm:$0xff] %v973
        %1006 = vst [vmem:[%s563 + $0x58] sm:$0xff] %v976
        %1007 = vst [vmem:[%s563 + $0x60] sm:$0xff] %v981
        %1008 = vst [vmem:[%s563 + $0x68] sm:$0xff] %v984
        %1009 = vst [vmem:[%s563 + $0x70] sm:$0xff] %v989
        %1010 = vst [vmem:[%s563 + $0x78] sm:$0xff] %v992
        %s1011 = sand.u32 %s154, 1
        %s1012 = scalar_lea.sflag [#allocation6], %s1011
        %s1013 = sand.u32 %s154, 1
        %s1014 = smul.addr %s1013, 128
        %s1015 = scalar_lea.vmem [#allocation5], %s1014
        // Predicated region
        $region151: #{bert_self_attention.3} parent=137 // pred_check
          %p1016 = pneg %p164
        $region152: #{bert_self_attention.3} parent=137 // pred_check_branch
          %1018 = sbr.rel (%p1016) target = $region154
        $region153: #{bert_self_attention.3} parent=137 // pred_region
          %s1020 = ssub.s32 2048, 2048
          %1021 = vsyncadd %s1012, %s1020
          %s1022 = smul.addr %s22, 64
          %s1023 = sadd.s32 %s23, %s1022
          %s1024 = smul.addr %s1023, 128
          %s1025 = scalar_lea.hbm %s4, %s1024
          %s1026 = sshll.u32 %s1015, 4
          %s1027 = int_to_ptr.vmem [resolvable:$true] %s1026
          %1032 = dma.vmem_to_hbm [thread:$0]  %s1027, 2048, %s1025, %s1012, 128, 512, 8
        $region154: #{bert_self_attention.3} parent=137 // pred_fallthru
          _
      $region138: #{bert_self_attention.3} parent=5 // pred_fallthru
        _
      %p1033 = scmp.le.s32.totalorder 2, %s13
      // Predicated region
      $region155: #{bert_self_attention.3} parent=5 // pred_check
        %p1034 = pneg %p1033
      $region156: #{bert_self_attention.3} parent=5 // pred_check_branch
        %1036 = sbr.rel (%p1034) target = $region158
      $region157: #{bert_self_attention.3} parent=5 // pred_region
        %s1037 = ssub.s32 %s13, 2
        // Predicated region
        $region159: #{bert_self_attention.3} parent=157 // pred_check
          %p1038 = pneg %p170
        $region160: #{bert_self_attention.3} parent=157 // pred_check_branch
          %1040 = sbr.rel (%p1038) target = $region162
        $region161: #{bert_self_attention.3} parent=157 // pred_region
          %s1041 = sand.u32 %s155, 1
          %s1042 = scalar_lea.sflag [#allocation6], %s1041
          %s1043 = sand.u32 %s155, 1
          %s1044 = smul.addr %s1043, 128
          %s1045 = scalar_lea.vmem [#allocation5], %s1044
          %1046 = dma.done %s1042, 2048
        $region162: #{bert_self_attention.3} parent=157 // pred_fallthru
          _
      $region158: #{bert_self_attention.3} parent=5 // pred_fallthru
        _
    $region6: #{bert_self_attention.3} parent=1 // loop_footer
      %s17 = sadd.s32 1, %s13
    $region7: #{bert_self_attention.3} parent=1 // loop_footer_branch
      %12 = sbr.rel target = $region3
    $region8: #{bert_self_attention.3} parent=1 // loop_exit
      _
    %1047 = vsyncpa [#allocation6], 1
    %s1048 = scalar_lea.sflag [#allocation6], 1
    %1049 = vsyncpa %s1048, 1

// kernel: bert_self_attention.2
$region0: #{bert_self_attention.2}
  #allocation0 [shape = 'u32[]', space=smem, size = 0x4, offset = 0x4, fixed_abs, tag = 'smem constant byte address 0x4 - core index']
  #allocation1 [shape = 'u32[144,128]{1,0:T(1,128)}', space=vmem, size = 0x12000, scoped, tag = 'internal scratch']
  %s0 = inlined_call_operand.hbm [shape: f32[256,512], index: 0, kind: input, shape index: {}]
  %s1 = inlined_call_operand.hbm [shape: bf16[512,1536], index: 1, kind: input, shape index: {}]
  %s2 = inlined_call_operand.hbm [shape: f32[1,1536], index: 2, kind: input, shape index: {}]
  %s3 = inlined_call_operand.vmem [shape: f32[256,1536], index: 3, kind: output, shape index: {}]
  %s4 = sld [smem:[#allocation0]]
  $region57: #{bert_self_attention.2} parent=0
    _
  %s6 = ssub.s32 1, %s4
  %s7 = scalar_select 0, %s6, %s4
  $region1: #{bert_self_attention.2} parent=0
    #allocation2 [shape = 'u8[524288]{0}', space=vmem, size = 0x80000, scoped, tag = 'input window, operand 0']
    #allocation3 [shape = 's32[2]{0}', space=sflag, size = 0x8, scoped, tag = 'scoped memory for bert_self_attention.2']
    #allocation4 [shape = 'u8[1572864]{0}', space=vmem, size = 0x180000, scoped, tag = 'input window, operand 1, single buffered']
    #allocation5 [shape = 's32[1]{0}', space=sflag, size = 0x4, scoped, tag = 'scoped memory for bert_self_attention.2']
    #allocation6 [shape = 'u8[6144]{0}', space=vmem, size = 0x1800, scoped, tag = 'input window, operand 2, single buffered']
    %8 = vsyncpa [#allocation3], 0
    %s9 = scalar_lea.sflag [#allocation3], 1
    %10 = vsyncpa %s9, 0
    %11 = vsyncpa [#allocation5], 0
    loop: start=0, step=1, limit=4
    $region2: #{bert_self_attention.2} parent=1 // loop_pre_header
      _
    $region3: #{bert_self_attention.2} parent=1 // loop_header
      %s13 = sphi 0, %s17
      %p14 = scmp.ge.s32.totalorder %s13, 4
      %s23 = sphi 0, %s25
      %s26 = sphi 0, %s23
      %s27 = sphi 0, %s26
      %s43 = sphi 0, %s27
      %s47 = sphi 0, %s47
      %s49 = sphi 0, %s47
      %s50 = sphi 0, %s49
      %s64 = sphi 0, %s50
      %s68 = sphi 0, %s68
      %s70 = sphi 0, %s68
      %s71 = sphi 0, %s70
      %s85 = sphi 0, %s71
      %s91 = sphi 0, %s93
      %s94 = sphi 0, %s91
      %s95 = sphi 0, %s94
      %s111 = sphi 0, %s95
    $region4: #{bert_self_attention.2} parent=1 // loop_header_branch
      %16 = sbr.rel (%p14) target = $region8
    $region5: #{bert_self_attention.2} parent=1 // loop_body
      %s18 = ssub.s32 %s13, 1
      %s19 = ssub.s32 %s13, 2
      %s20 = sadd.s32 %s13, 1
      %s21 = ssub.s32 %s13, %s20
      %p22 = scmp.eq.s32.totalorder %s21, 0
      %s24 = sadd.s32 %s23, 1
      %s25 = scalar_select %p22, %s23, %s24
      %p28 = pneg %p22
      %p29 = scmp.eq.s32.totalorder %s13, 1
      %p30 = por %p28, %p29
      %p31 = scmp.ne.s32.totalorder %s23, %s26
      %p32 = scmp.eq.s32.totalorder %s13, 0
      %p33 = por %p31, %p32
      %p34 = scmp.ne.s32.totalorder %s23, %s26
      %p35 = scmp.eq.s32.totalorder %s18, 1
      %p36 = por %p34, %p35
      %p37 = scmp.ne.s32.totalorder %s26, %s27
      %p38 = scmp.eq.s32.totalorder %s18, 0
      %p39 = por %p37, %p38
      %p40 = scmp.ne.s32.totalorder %s26, %s27
      %p41 = scmp.eq.s32.totalorder %s19, 1
      %p42 = por %p40, %p41
      %p44 = scmp.ne.s32.totalorder %s27, %s43
      %p45 = scmp.eq.s32.totalorder %s19, 0
      %p46 = por %p44, %p45
      %s48 = sadd.s32 %s47, 1
      %p51 = scmp.eq.s32.totalorder %s13, 1
      %p52 = scmp.ne.s32.totalorder %s47, %s49
      %p53 = scmp.eq.s32.totalorder %s13, 0
      %p54 = por %p52, %p53
      %p55 = scmp.ne.s32.totalorder %s47, %s49
      %p56 = scmp.eq.s32.totalorder %s18, 1
      %p57 = por %p55, %p56
      %p58 = scmp.ne.s32.totalorder %s49, %s50
      %p59 = scmp.eq.s32.totalorder %s18, 0
      %p60 = por %p58, %p59
      %p61 = scmp.ne.s32.totalorder %s49, %s50
      %p62 = scmp.eq.s32.totalorder %s19, 1
      %p63 = por %p61, %p62
      %p65 = scmp.ne.s32.totalorder %s50, %s64
      %p66 = scmp.eq.s32.totalorder %s19, 0
      %p67 = por %p65, %p66
      %s69 = sadd.s32 %s68, 1
      %p72 = scmp.eq.s32.totalorder %s13, 1
      %p73 = scmp.ne.s32.totalorder %s68, %s70
      %p74 = scmp.eq.s32.totalorder %s13, 0
      %p75 = por %p73, %p74
      %p76 = scmp.ne.s32.totalorder %s68, %s70
      %p77 = scmp.eq.s32.totalorder %s18, 1
      %p78 = por %p76, %p77
      %p79 = scmp.ne.s32.totalorder %s70, %s71
      %p80 = scmp.eq.s32.totalorder %s18, 0
      %p81 = por %p79, %p80
      %p82 = scmp.ne.s32.totalorder %s70, %s71
      %p83 = scmp.eq.s32.totalorder %s19, 1
      %p84 = por %p82, %p83
      %p86 = scmp.ne.s32.totalorder %s71, %s85
      %p87 = scmp.eq.s32.totalorder %s19, 0
      %p88 = por %p86, %p87
      %s89 = ssub.s32 %s13, %s20
      %p90 = scmp.eq.s32.totalorder %s89, 0
      %s92 = sadd.s32 %s91, 1
      %s93 = scalar_select %p90, %s91, %s92
      %p96 = pneg %p90
      %p97 = scmp.eq.s32.totalorder %s13, 1
      %p98 = por %p96, %p97
      %p99 = scmp.ne.s32.totalorder %s91, %s94
      %p100 = scmp.eq.s32.totalorder %s13, 0
      %p101 = por %p99, %p100
      %p102 = scmp.ne.s32.totalorder %s91, %s94
      %p103 = scmp.eq.s32.totalorder %s18, 1
      %p104 = por %p102, %p103
      %p105 = scmp.ne.s32.totalorder %s94, %s95
      %p106 = scmp.eq.s32.totalorder %s18, 0
      %p107 = por %p105, %p106
      %p108 = scmp.ne.s32.totalorder %s94, %s95
      %p109 = scmp.eq.s32.totalorder %s19, 1
      %p110 = por %p108, %p109
      %p112 = scmp.ne.s32.totalorder %s95, %s111
      %p113 = scmp.eq.s32.totalorder %s19, 0
      %p114 = por %p112, %p113
      %p115 = scmp.le.s32.totalorder 1, %s13
      %p116 = scmp.lt.s32.totalorder %s13, 3
      %p117 = pnand %p115, %p116
      %p118 = pneg %p117
      // Predicated region
      $region9: #{bert_self_attention.2} parent=5 // pred_check
        _
      $region10: #{bert_self_attention.2} parent=5 // pred_check_branch
        %120 = sbr.rel (%p117) target = $region12
      $region11: #{bert_self_attention.2} parent=5 // pred_region
        %s121 = ssub.s32 %s13, 1
        // Predicated region
        $region13: #{bert_self_attention.2} parent=11 // pred_check
          %p122 = pneg %p60
        $region14: #{bert_self_attention.2} parent=11 // pred_check_branch
          %124 = sbr.rel (%p122) target = $region16
        $region15: #{bert_self_attention.2} parent=11 // pred_region
          %s126 = ssub.s32 49152, 49152
          %127 = vsyncadd [#allocation5], %s126
          %s128 = sshll.u32 [#allocation4], 4
          %s129 = int_to_ptr.vmem [resolvable:$true] %s128
          %134 = dma.hbm_to_vmem [thread:$0]  %s1, 49152, %s129, [#allocation5], 768, 768, 48
        $region16: #{bert_self_attention.2} parent=11 // pred_fallthru
          _
        // Predicated region
        $region17: #{bert_self_attention.2} parent=11 // pred_check
          %p135 = pneg %p81
        $region18: #{bert_self_attention.2} parent=11 // pred_check_branch
          %137 = sbr.rel (%p135) target = $region20
        $region19: #{bert_self_attention.2} parent=11 // pred_region
          %s139 = ssub.s32 192, 192
          %140 = vsyncadd [#allocation5], %s139
          %s142 = sshll.u32 [#allocation6], 4
          %s143 = int_to_ptr.vmem [resolvable:$true] %s142
          %145 = dma.hbm_to_vmem [thread:$0]  %s2, 192, %s143, [#allocation5]
        $region20: #{bert_self_attention.2} parent=11 // pred_fallthru
          _
      $region12: #{bert_self_attention.2} parent=5 // pred_fallthru
        _
      %p146 = scmp.lt.s32.totalorder %s13, 2
      // Predicated region
      $region21: #{bert_self_attention.2} parent=5 // pred_check
        %p147 = pneg %p146
      $region22: #{bert_self_attention.2} parent=5 // pred_check_branch
        %149 = sbr.rel (%p147) target = $region24
      $region23: #{bert_self_attention.2} parent=5 // pred_region
        // Predicated region
        $region25: #{bert_self_attention.2} parent=23 // pred_check
          %p150 = pneg %p33
        $region26: #{bert_self_attention.2} parent=23 // pred_check_branch
          %152 = sbr.rel (%p150) target = $region28
        $region27: #{bert_self_attention.2} parent=23 // pred_region
          %s153 = sand.u32 %s23, 1
          %s154 = scalar_lea.sflag [#allocation3], %s153
          %s155 = sand.u32 %s23, 1
          %s156 = smul.addr %s155, 512
          %s157 = scalar_lea.vmem [#allocation2], %s156
          %s158 = smul.u32 16, %s13
          %s160 = ssub.s32 8192, 8192
          %161 = vsyncadd %s154, %s160
          %s162 = smul.addr %s158, 4
          %s163 = smul.addr %s162, 128
          %s164 = scalar_lea.hbm %s0, %s163
          %s165 = sshll.u32 %s157, 4
          %s166 = int_to_ptr.vmem [resolvable:$true] %s165
          %171 = dma.hbm_to_vmem [thread:$0]  %s164, 8192, %s166, %s154, 512, 512, 32
        $region28: #{bert_self_attention.2} parent=23 // pred_fallthru
          _
      $region24: #{bert_self_attention.2} parent=5 // pred_fallthru
        _
      %p172 = scmp.le.s32.totalorder 1, %s13
      %p173 = scmp.lt.s32.totalorder %s13, 3
      %p174 = pnand %p172, %p173
      %p175 = pneg %p174
      // Predicated region
      $region29: #{bert_self_attention.2} parent=5 // pred_check
        _
      $region30: #{bert_self_attention.2} parent=5 // pred_check_branch
        %177 = sbr.rel (%p174) target = $region32
      $region31: #{bert_self_attention.2} parent=5 // pred_region
        %s178 = ssub.s32 %s13, 1
        %s179 = sand.u32 %s26, 1
        %s180 = scalar_lea.sflag [#allocation3], %s179
        %s181 = sand.u32 %s26, 1
        %s182 = smul.addr %s181, 512
        %s183 = scalar_lea.vmem [#allocation2], %s182
        // Predicated region
        $region33: #{bert_self_attention.2} parent=31 // pred_check
          %p184 = pneg %p39
        $region34: #{bert_self_attention.2} parent=31 // pred_check_branch
          %186 = sbr.rel (%p184) target = $region36
        $region35: #{bert_self_attention.2} parent=31 // pred_region
          %187 = dma.done %s180, 8192
        $region36: #{bert_self_attention.2} parent=31 // pred_fallthru
          _
        // Predicated region
        $region37: #{bert_self_attention.2} parent=31 // pred_check
          %p188 = pneg %p60
        $region38: #{bert_self_attention.2} parent=31 // pred_check_branch
          %190 = sbr.rel (%p188) target = $region40
        $region39: #{bert_self_attention.2} parent=31 // pred_region
          %191 = dma.done [#allocation5], 49152
        $region40: #{bert_self_attention.2} parent=31 // pred_fallthru
          _
        // Predicated region
        $region41: #{bert_self_attention.2} parent=31 // pred_check
          %p192 = pneg %p81
        $region42: #{bert_self_attention.2} parent=31 // pred_check_branch
          %194 = sbr.rel (%p192) target = $region44
        $region43: #{bert_self_attention.2} parent=31 // pred_region
          %195 = dma.done [#allocation5], 192
        $region44: #{bert_self_attention.2} parent=31 // pred_fallthru
          _
        %s196 = sand.u32 %s26, 1
        %s197 = scalar_lea.sflag [#allocation3], %s196
        %s198 = sand.u32 %s26, 1
        %s199 = smul.addr %s198, 512
        %s200 = scalar_lea.vmem [#allocation2], %s199
        %p201 = pneg %p39
        %p202 = pneg %p36
        %p203 = pneg %p60
        %p204 = pneg %p57
        %p205 = pneg %p81
        %p206 = pneg %p78
        %p207 = pneg %p107
        %p208 = pneg %p104
        %s209 = smul.u32 16, %s18
        %p210 = scmp.lt.s32.totalorder %s209, 31
        %s211 = scalar_select %p210, %s209, 31
        %s212 = smul.addr %s211, 12
        %s213 = smul.addr %s212, 8
        %s214 = scalar_lea.vmem %s3, %s213
        %s215 = smul.u32 16, %s18
        %s216 = smul.u32 16, %s18
        %p217 = scmp.lt.s32.totalorder %s216, 31
        %s218 = scalar_select %p217, %s216, 31
        %s219 = smul.addr %s218, 12
        %s220 = smul.addr %s219, 8
        %s221 = scalar_lea.vmem %s3, %s220
        %s222 = smul.u32 16, %s18
        %v223 = vld [vmem:[%s183] sm:$0xff]
        %v224 = vld [vmem:[%s183 + $0x8] sm:$0xff]
        %v225 = vld [vmem:[%s183 + $0x10] sm:$0xff]
        %v226 = vld [vmem:[%s183 + $0x18] sm:$0xff]
        %v227 = vld [vmem:[%s183 + $0x20] sm:$0xff]
        %v228 = vld [vmem:[%s183 + $0x28] sm:$0xff]
        %v229 = vld [vmem:[%s183 + $0x30] sm:$0xff]
        %v230 = vld [vmem:[%s183 + $0x38] sm:$0xff]
        %v231 = vld [vmem:[%s183 + $0x40] sm:$0xff]
        %v232 = vld [vmem:[%s183 + $0x48] sm:$0xff]
        %v233 = vld [vmem:[%s183 + $0x50] sm:$0xff]
        %v234 = vld [vmem:[%s183 + $0x58] sm:$0xff]
        %v235 = vld [vmem:[%s183 + $0x60] sm:$0xff]
        %v236 = vld [vmem:[%s183 + $0x68] sm:$0xff]
        %v237 = vld [vmem:[%s183 + $0x70] sm:$0xff]
        %v238 = vld [vmem:[%s183 + $0x78] sm:$0xff]
        %v239 = vld [vmem:[%s183 + $0x80] sm:$0xff]
        %v240 = vld [vmem:[%s183 + $0x88] sm:$0xff]
        %v241 = vld [vmem:[%s183 + $0x90] sm:$0xff]
        %v242 = vld [vmem:[%s183 + $0x98] sm:$0xff]
        %v243 = vld [vmem:[%s183 + $0xa0] sm:$0xff]
        %v244 = vld [vmem:[%s183 + $0xa8] sm:$0xff]
        %v245 = vld [vmem:[%s183 + $0xb0] sm:$0xff]
        %v246 = vld [vmem:[%s183 + $0xb8] sm:$0xff]
        %v247 = vld [vmem:[%s183 + $0xc0] sm:$0xff]
        %v248 = vld [vmem:[%s183 + $0xc8] sm:$0xff]
        %v249 = vld [vmem:[%s183 + $0xd0] sm:$0xff]
        %v250 = vld [vmem:[%s183 + $0xd8] sm:$0xff]
        %v251 = vld [vmem:[%s183 + $0xe0] sm:$0xff]
        %v252 = vld [vmem:[%s183 + $0xe8] sm:$0xff]
        %v253 = vld [vmem:[%s183 + $0xf0] sm:$0xff]
        %v254 = vld [vmem:[%s183 + $0xf8] sm:$0xff]
        %v255 = vld [vmem:[%s183 + $0x100] sm:$0xff]
        %v256 = vld [vmem:[%s183 + $0x108] sm:$0xff]
        %v257 = vld [vmem:[%s183 + $0x110] sm:$0xff]
        %v258 = vld [vmem:[%s183 + $0x118] sm:$0xff]
        %v259 = vld [vmem:[%s183 + $0x120] sm:$0xff]
        %v260 = vld [vmem:[%s183 + $0x128] sm:$0xff]
        %v261 = vld [vmem:[%s183 + $0x130] sm:$0xff]
        %v262 = vld [vmem:[%s183 + $0x138] sm:$0xff]
        %v263 = vld [vmem:[%s183 + $0x140] sm:$0xff]
        %v264 = vld [vmem:[%s183 + $0x148] sm:$0xff]
        %v265 = vld [vmem:[%s183 + $0x150] sm:$0xff]
        %v266 = vld [vmem:[%s183 + $0x158] sm:$0xff]
        %v267 = vld [vmem:[%s183 + $0x160] sm:$0xff]
        %v268 = vld [vmem:[%s183 + $0x168] sm:$0xff]
        %v269 = vld [vmem:[%s183 + $0x170] sm:$0xff]
        %v270 = vld [vmem:[%s183 + $0x178] sm:$0xff]
        %v271 = vld [vmem:[%s183 + $0x180] sm:$0xff]
        %v272 = vld [vmem:[%s183 + $0x188] sm:$0xff]
        %v273 = vld [vmem:[%s183 + $0x190] sm:$0xff]
        %v274 = vld [vmem:[%s183 + $0x198] sm:$0xff]
        %v275 = vld [vmem:[%s183 + $0x1a0] sm:$0xff]
        %v276 = vld [vmem:[%s183 + $0x1a8] sm:$0xff]
        %v277 = vld [vmem:[%s183 + $0x1b0] sm:$0xff]
        %v278 = vld [vmem:[%s183 + $0x1b8] sm:$0xff]
        %v279 = vld [vmem:[%s183 + $0x1c0] sm:$0xff]
        %v280 = vld [vmem:[%s183 + $0x1c8] sm:$0xff]
        %v281 = vld [vmem:[%s183 + $0x1d0] sm:$0xff]
        %v282 = vld [vmem:[%s183 + $0x1d8] sm:$0xff]
        %v283 = vld [vmem:[%s183 + $0x1e0] sm:$0xff]
        %v284 = vld [vmem:[%s183 + $0x1e8] sm:$0xff]
        %v285 = vld [vmem:[%s183 + $0x1f0] sm:$0xff]
        %v286 = vld [vmem:[%s183 + $0x1f8] sm:$0xff]
        %v287 = vpack.c.bf16 %v227, %v223
        %v288 = vpack.c.bf16 %v228, %v224
        %v289 = vpack.c.bf16 %v229, %v225
        %v290 = vpack.c.bf16 %v230, %v226
        %v291 = vpack.c.bf16 %v235, %v231
        %v292 = vpack.c.bf16 %v236, %v232
        %v293 = vpack.c.bf16 %v237, %v233
        %v294 = vpack.c.bf16 %v238, %v234
        %v295 = vpack.c.bf16 %v243, %v239
        %v296 = vpack.c.bf16 %v244, %v240
        %v297 = vpack.c.bf16 %v245, %v241
        %v298 = vpack.c.bf16 %v246, %v242
        %v299 = vpack.c.bf16 %v251, %v247
        %v300 = vpack.c.bf16 %v252, %v248
        %v301 = vpack.c.bf16 %v253, %v249
        %v302 = vpack.c.bf16 %v254, %v250
        %v303 = vpack.c.bf16 %v259, %v255
        %v304 = vpack.c.bf16 %v260, %v256
        %v305 = vpack.c.bf16 %v261, %v257
        %v306 = vpack.c.bf16 %v262, %v258
        %v307 = vpack.c.bf16 %v267, %v263
        %v308 = vpack.c.bf16 %v268, %v264
        %v309 = vpack.c.bf16 %v269, %v265
        %v310 = vpack.c.bf16 %v270, %v266
        %v311 = vpack.c.bf16 %v275, %v271
        %v312 = vpack.c.bf16 %v276, %v272
        %v313 = vpack.c.bf16 %v277, %v273
        %v314 = vpack.c.bf16 %v278, %v274
        %v315 = vpack.c.bf16 %v283, %v279
        %v316 = vpack.c.bf16 %v284, %v280
        %v317 = vpack.c.bf16 %v285, %v281
        %v318 = vpack.c.bf16 %v286, %v282
        %v319 = vld [vmem:[#allocation4] sm:$0xff]
        %v320 = vld [vmem:[#allocation4 + $0x8] sm:$0xff]
        %v321 = vld [vmem:[#allocation4 + $0x10] sm:$0xff]
        %v322 = vld [vmem:[#allocation4 + $0x18] sm:$0xff]
        %v323 = vld [vmem:[#allocation4 + $0x20] sm:$0xff]
        %v324 = vld [vmem:[#allocation4 + $0x28] sm:$0xff]
        %v325 = vld [vmem:[#allocation4 + $0x30] sm:$0xff]
        %v326 = vld [vmem:[#allocation4 + $0x38] sm:$0xff]
        %v327 = vld [vmem:[#allocation4 + $0x40] sm:$0xff]
        %v328 = vld [vmem:[#allocation4 + $0x48] sm:$0xff]
        %v329 = vld [vmem:[#allocation4 + $0x50] sm:$0xff]
        %v330 = vld [vmem:[#allocation4 + $0x58] sm:$0xff]
        %v331 = vld [vmem:[#allocation4 + $0x60] sm:$0xff]
        %v332 = vld [vmem:[#allocation4 + $0x68] sm:$0xff]
        %v333 = vld [vmem:[#allocation4 + $0x70] sm:$0xff]
        %v334 = vld [vmem:[#allocation4 + $0x78] sm:$0xff]
        %v335 = vld [vmem:[#allocation4 + $0x80] sm:$0xff]
        %v336 = vld [vmem:[#allocation4 + $0x88] sm:$0xff]
        %v337 = vld [vmem:[#allocation4 + $0x90] sm:$0xff]
        %v338 = vld [vmem:[#allocation4 + $0x98] sm:$0xff]
        %v339 = vld [vmem:[#allocation4 + $0xa0] sm:$0xff]
        %v340 = vld [vmem:[#allocation4 + $0xa8] sm:$0xff]
        %v341 = vld [vmem:[#allocation4 + $0xb0] sm:$0xff]
        %v342 = vld [vmem:[#allocation4 + $0xb8] sm:$0xff]
        %v343 = vld [vmem:[#allocation4 + $0xc0] sm:$0xff]
        %v344 = vld [vmem:[#allocation4 + $0xc8] sm:$0xff]
        %v345 = vld [vmem:[#allocation4 + $0xd0] sm:$0xff]
        %v346 = vld [vmem:[#allocation4 + $0xd8] sm:$0xff]
        %v347 = vld [vmem:[#allocation4 + $0xe0] sm:$0xff]
        %v348 = vld [vmem:[#allocation4 + $0xe8] sm:$0xff]
        %v349 = vld [vmem:[#allocation4 + $0xf0] sm:$0xff]
        %v350 = vld [vmem:[#allocation4 + $0xf8] sm:$0xff]
        %v351 = vld [vmem:[#allocation4 + $0x100] sm:$0xff]
        %v352 = vld [vmem:[#allocation4 + $0x108] sm:$0xff]
        %v353 = vld [vmem:[#allocation4 + $0x110] sm:$0xff]
        %v354 = vld [vmem:[#allocation4 + $0x118] sm:$0xff]
        %v355 = vld [vmem:[#allocation4 + $0x120] sm:$0xff]
        %v356 = vld [vmem:[#allocation4 + $0x128] sm:$0xff]
        %v357 = vld [vmem:[#allocation4 + $0x130] sm:$0xff]
        %v358 = vld [vmem:[#allocation4 + $0x138] sm:$0xff]
        %v359 = vld [vmem:[#allocation4 + $0x140] sm:$0xff]
        %v360 = vld [vmem:[#allocation4 + $0x148] sm:$0xff]
        %v361 = vld [vmem:[#allocation4 + $0x150] sm:$0xff]
        %v362 = vld [vmem:[#allocation4 + $0x158] sm:$0xff]
        %v363 = vld [vmem:[#allocation4 + $0x160] sm:$0xff]
        %v364 = vld [vmem:[#allocation4 + $0x168] sm:$0xff]
        %v365 = vld [vmem:[#allocation4 + $0x170] sm:$0xff]
        %v366 = vld [vmem:[#allocation4 + $0x178] sm:$0xff]
        %v367 = vld [vmem:[#allocation4 + $0x180] sm:$0xff]
        %v368 = vld [vmem:[#allocation4 + $0x188] sm:$0xff]
        %v369 = vld [vmem:[#allocation4 + $0x190] sm:$0xff]
        %v370 = vld [vmem:[#allocation4 + $0x198] sm:$0xff]
        %v371 = vld [vmem:[#allocation4 + $0x1a0] sm:$0xff]
        %v372 = vld [vmem:[#allocation4 + $0x1a8] sm:$0xff]
        %v373 = vld [vmem:[#allocation4 + $0x1b0] sm:$0xff]
        %v374 = vld [vmem:[#allocation4 + $0x1b8] sm:$0xff]
        %v375 = vld [vmem:[#allocation4 + $0x1c0] sm:$0xff]
        %v376 = vld [vmem:[#allocation4 + $0x1c8] sm:$0xff]
        %v377 = vld [vmem:[#allocation4 + $0x1d0] sm:$0xff]
        %v378 = vld [vmem:[#allocation4 + $0x1d8] sm:$0xff]
        %v379 = vld [vmem:[#allocation4 + $0x1e0] sm:$0xff]
        %v380 = vld [vmem:[#allocation4 + $0x1e8] sm:$0xff]
        %v381 = vld [vmem:[#allocation4 + $0x1f0] sm:$0xff]
        %v382 = vld [vmem:[#allocation4 + $0x1f8] sm:$0xff]
        %v383 = vld [vmem:[#allocation4 + $0x200] sm:$0xff]
        %v384 = vld [vmem:[#allocation4 + $0x208] sm:$0xff]
        %v385 = vld [vmem:[#allocation4 + $0x210] sm:$0xff]
        %v386 = vld [vmem:[#allocation4 + $0x218] sm:$0xff]
        %v387 = vld [vmem:[#allocation4 + $0x220] sm:$0xff]
        %v388 = vld [vmem:[#allocation4 + $0x228] sm:$0xff]
        %v389 = vld [vmem:[#allocation4 + $0x230] sm:$0xff]
        %v390 = vld [vmem:[#allocation4 + $0x238] sm:$0xff]
        %v391 = vld [vmem:[#allocation4 + $0x240] sm:$0xff]
        %v392 = vld [vmem:[#allocation4 + $0x248] sm:$0xff]
        %v393 = vld [vmem:[#allocation4 + $0x250] sm:$0xff]
        %v394 = vld [vmem:[#allocation4 + $0x258] sm:$0xff]
        %v395 = vld [vmem:[#allocation4 + $0x260] sm:$0xff]
        %v396 = vld [vmem:[#allocation4 + $0x268] sm:$0xff]
        %v397 = vld [vmem:[#allocation4 + $0x270] sm:$0xff]
        %v398 = vld [vmem:[#allocation4 + $0x278] sm:$0xff]
        %v399 = vld [vmem:[#allocation4 + $0x280] sm:$0xff]
        %v400 = vld [vmem:[#allocation4 + $0x288] sm:$0xff]
        %v401 = vld [vmem:[#allocation4 + $0x290] sm:$0xff]
        %v402 = vld [vmem:[#allocation4 + $0x298] sm:$0xff]
        %v403 = vld [vmem:[#allocation4 + $0x2a0] sm:$0xff]
        %v404 = vld [vmem:[#allocation4 + $0x2a8] sm:$0xff]
        %v405 = vld [vmem:[#allocation4 + $0x2b0] sm:$0xff]
        %v406 = vld [vmem:[#allocation4 + $0x2b8] sm:$0xff]
        %v407 = vld [vmem:[#allocation4 + $0x2c0] sm:$0xff]
        %v408 = vld [vmem:[#allocation4 + $0x2c8] sm:$0xff]
        %v409 = vld [vmem:[#allocation4 + $0x2d0] sm:$0xff]
        %v410 = vld [vmem:[#allocation4 + $0x2d8] sm:$0xff]
        %v411 = vld [vmem:[#allocation4 + $0x2e0] sm:$0xff]
        %v412 = vld [vmem:[#allocation4 + $0x2e8] sm:$0xff]
        %v413 = vld [vmem:[#allocation4 + $0x2f0] sm:$0xff]
        %v414 = vld [vmem:[#allocation4 + $0x2f8] sm:$0xff]
        %v415 = vld [vmem:[#allocation4 + $0x300] sm:$0xff]
        %v416 = vld [vmem:[#allocation4 + $0x308] sm:$0xff]
        %v417 = vld [vmem:[#allocation4 + $0x310] sm:$0xff]
        %v418 = vld [vmem:[#allocation4 + $0x318] sm:$0xff]
        %v419 = vld [vmem:[#allocation4 + $0x320] sm:$0xff]
        %v420 = vld [vmem:[#allocation4 + $0x328] sm:$0xff]
        %v421 = vld [vmem:[#allocation4 + $0x330] sm:$0xff]
        %v422 = vld [vmem:[#allocation4 + $0x338] sm:$0xff]
        %v423 = vld [vmem:[#allocation4 + $0x340] sm:$0xff]
        %v424 = vld [vmem:[#allocation4 + $0x348] sm:$0xff]
        %v425 = vld [vmem:[#allocation4 + $0x350] sm:$0xff]
        %v426 = vld [vmem:[#allocation4 + $0x358] sm:$0xff]
        %v427 = vld [vmem:[#allocation4 + $0x360] sm:$0xff]
        %v428 = vld [vmem:[#allocation4 + $0x368] sm:$0xff]
        %v429 = vld [vmem:[#allocation4 + $0x370] sm:$0xff]
        %v430 = vld [vmem:[#allocation4 + $0x378] sm:$0xff]
        %v431 = vld [vmem:[#allocation4 + $0x380] sm:$0xff]
        %v432 = vld [vmem:[#allocation4 + $0x388] sm:$0xff]
        %v433 = vld [vmem:[#allocation4 + $0x390] sm:$0xff]
        %v434 = vld [vmem:[#allocation4 + $0x398] sm:$0xff]
        %v435 = vld [vmem:[#allocation4 + $0x3a0] sm:$0xff]
        %v436 = vld [vmem:[#allocation4 + $0x3a8] sm:$0xff]
        %v437 = vld [vmem:[#allocation4 + $0x3b0] sm:$0xff]
        %v438 = vld [vmem:[#allocation4 + $0x3b8] sm:$0xff]
        %v439 = vld [vmem:[#allocation4 + $0x3c0] sm:$0xff]
        %v440 = vld [vmem:[#allocation4 + $0x3c8] sm:$0xff]
        %v441 = vld [vmem:[#allocation4 + $0x3d0] sm:$0xff]
        %v442 = vld [vmem:[#allocation4 + $0x3d8] sm:$0xff]
        %v443 = vld [vmem:[#allocation4 + $0x3e0] sm:$0xff]
        %v444 = vld [vmem:[#allocation4 + $0x3e8] sm:$0xff]
        %v445 = vld [vmem:[#allocation4 + $0x3f0] sm:$0xff]
        %v446 = vld [vmem:[#allocation4 + $0x3f8] sm:$0xff]
        %v447 = vld [vmem:[#allocation4 + $0x400] sm:$0xff]
        %v448 = vld [vmem:[#allocation4 + $0x408] sm:$0xff]
        %v449 = vld [vmem:[#allocation4 + $0x410] sm:$0xff]
        %v450 = vld [vmem:[#allocation4 + $0x418] sm:$0xff]
        %v451 = vld [vmem:[#allocation4 + $0x420] sm:$0xff]
        %v452 = vld [vmem:[#allocation4 + $0x428] sm:$0xff]
        %v453 = vld [vmem:[#allocation4 + $0x430] sm:$0xff]
        %v454 = vld [vmem:[#allocation4 + $0x438] sm:$0xff]
        %v455 = vld [vmem:[#allocation4 + $0x440] sm:$0xff]
        %v456 = vld [vmem:[#allocation4 + $0x448] sm:$0xff]
        %v457 = vld [vmem:[#allocation4 + $0x450] sm:$0xff]
        %v458 = vld [vmem:[#allocation4 + $0x458] sm:$0xff]
        %v459 = vld [vmem:[#allocation4 + $0x460] sm:$0xff]
        %v460 = vld [vmem:[#allocation4 + $0x468] sm:$0xff]
        %v461 = vld [vmem:[#allocation4 + $0x470] sm:$0xff]
        %v462 = vld [vmem:[#allocation4 + $0x478] sm:$0xff]
        %v463 = vld [vmem:[#allocation4 + $0x480] sm:$0xff]
        %v464 = vld [vmem:[#allocation4 + $0x488] sm:$0xff]
        %v465 = vld [vmem:[#allocation4 + $0x490] sm:$0xff]
        %v466 = vld [vmem:[#allocation4 + $0x498] sm:$0xff]
        %v467 = vld [vmem:[#allocation4 + $0x4a0] sm:$0xff]
        %v468 = vld [vmem:[#allocation4 + $0x4a8] sm:$0xff]
        %v469 = vld [vmem:[#allocation4 + $0x4b0] sm:$0xff]
        %v470 = vld [vmem:[#allocation4 + $0x4b8] sm:$0xff]
        %v471 = vld [vmem:[#allocation4 + $0x4c0] sm:$0xff]
        %v472 = vld [vmem:[#allocation4 + $0x4c8] sm:$0xff]
        %v473 = vld [vmem:[#allocation4 + $0x4d0] sm:$0xff]
        %v474 = vld [vmem:[#allocation4 + $0x4d8] sm:$0xff]
        %v475 = vld [vmem:[#allocation4 + $0x4e0] sm:$0xff]
        %v476 = vld [vmem:[#allocation4 + $0x4e8] sm:$0xff]
        %v477 = vld [vmem:[#allocation4 + $0x4f0] sm:$0xff]
        %v478 = vld [vmem:[#allocation4 + $0x4f8] sm:$0xff]
        %v479 = vld [vmem:[#allocation4 + $0x500] sm:$0xff]
        %v480 = vld [vmem:[#allocation4 + $0x508] sm:$0xff]
        %v481 = vld [vmem:[#allocation4 + $0x510] sm:$0xff]
        %v482 = vld [vmem:[#allocation4 + $0x518] sm:$0xff]
        %v483 = vld [vmem:[#allocation4 + $0x520] sm:$0xff]
        %v484 = vld [vmem:[#allocation4 + $0x528] sm:$0xff]
        %v485 = vld [vmem:[#allocation4 + $0x530] sm:$0xff]
        %v486 = vld [vmem:[#allocation4 + $0x538] sm:$0xff]
        %v487 = vld [vmem:[#allocation4 + $0x540] sm:$0xff]
        %v488 = vld [vmem:[#allocation4 + $0x548] sm:$0xff]
        %v489 = vld [vmem:[#allocation4 + $0x550] sm:$0xff]
        %v490 = vld [vmem:[#allocation4 + $0x558] sm:$0xff]
        %v491 = vld [vmem:[#allocation4 + $0x560] sm:$0xff]
        %v492 = vld [vmem:[#allocation4 + $0x568] sm:$0xff]
        %v493 = vld [vmem:[#allocation4 + $0x570] sm:$0xff]
        %v494 = vld [vmem:[#allocation4 + $0x578] sm:$0xff]
        %v495 = vld [vmem:[#allocation4 + $0x580] sm:$0xff]
        %v496 = vld [vmem:[#allocation4 + $0x588] sm:$0xff]
        %v497 = vld [vmem:[#allocation4 + $0x590] sm:$0xff]
        %v498 = vld [vmem:[#allocation4 + $0x598] sm:$0xff]
        %v499 = vld [vmem:[#allocation4 + $0x5a0] sm:$0xff]
        %v500 = vld [vmem:[#allocation4 + $0x5a8] sm:$0xff]
        %v501 = vld [vmem:[#allocation4 + $0x5b0] sm:$0xff]
        %v502 = vld [vmem:[#allocation4 + $0x5b8] sm:$0xff]
        %v503 = vld [vmem:[#allocation4 + $0x5c0] sm:$0xff]
        %v504 = vld [vmem:[#allocation4 + $0x5c8] sm:$0xff]
        %v505 = vld [vmem:[#allocation4 + $0x5d0] sm:$0xff]
        %v506 = vld [vmem:[#allocation4 + $0x5d8] sm:$0xff]
        %v507 = vld [vmem:[#allocation4 + $0x5e0] sm:$0xff]
        %v508 = vld [vmem:[#allocation4 + $0x5e8] sm:$0xff]
        %v509 = vld [vmem:[#allocation4 + $0x5f0] sm:$0xff]
        %v510 = vld [vmem:[#allocation4 + $0x5f8] sm:$0xff]
        %v511 = vld [vmem:[#allocation4 + $0x600] sm:$0xff]
        %v512 = vld [vmem:[#allocation4 + $0x608] sm:$0xff]
        %v513 = vld [vmem:[#allocation4 + $0x610] sm:$0xff]
        %v514 = vld [vmem:[#allocation4 + $0x618] sm:$0xff]
        %v515 = vld [vmem:[#allocation4 + $0x620] sm:$0xff]
        %v516 = vld [vmem:[#allocation4 + $0x628] sm:$0xff]
        %v517 = vld [vmem:[#allocation4 + $0x630] sm:$0xff]
        %v518 = vld [vmem:[#allocation4 + $0x638] sm:$0xff]
        %v519 = vld [vmem:[#allocation4 + $0x640] sm:$0xff]
        %v520 = vld [vmem:[#allocation4 + $0x648] sm:$0xff]
        %v521 = vld [vmem:[#allocation4 + $0x650] sm:$0xff]
        %v522 = vld [vmem:[#allocation4 + $0x658] sm:$0xff]
        %v523 = vld [vmem:[#allocation4 + $0x660] sm:$0xff]
        %v524 = vld [vmem:[#allocation4 + $0x668] sm:$0xff]
        %v525 = vld [vmem:[#allocation4 + $0x670] sm:$0xff]
        %v526 = vld [vmem:[#allocation4 + $0x678] sm:$0xff]
        %v527 = vld [vmem:[#allocation4 + $0x680] sm:$0xff]
        %v528 = vld [vmem:[#allocation4 + $0x688] sm:$0xff]
        %v529 = vld [vmem:[#allocation4 + $0x690] sm:$0xff]
        %v530 = vld [vmem:[#allocation4 + $0x698] sm:$0xff]
        %v531 = vld [vmem:[#allocation4 + $0x6a0] sm:$0xff]
        %v532 = vld [vmem:[#allocation4 + $0x6a8] sm:$0xff]
        %v533 = vld [vmem:[#allocation4 + $0x6b0] sm:$0xff]
        %v534 = vld [vmem:[#allocation4 + $0x6b8] sm:$0xff]
        %v535 = vld [vmem:[#allocation4 + $0x6c0] sm:$0xff]
        %v536 = vld [vmem:[#allocation4 + $0x6c8] sm:$0xff]
        %v537 = vld [vmem:[#allocation4 + $0x6d0] sm:$0xff]
        %v538 = vld [vmem:[#allocation4 + $0x6d8] sm:$0xff]
        %v539 = vld [vmem:[#allocation4 + $0x6e0] sm:$0xff]
        %v540 = vld [vmem:[#allocation4 + $0x6e8] sm:$0xff]
        %v541 = vld [vmem:[#allocation4 + $0x6f0] sm:$0xff]
        %v542 = vld [vmem:[#allocation4 + $0x6f8] sm:$0xff]
        %v543 = vld [vmem:[#allocation4 + $0x700] sm:$0xff]
        %v544 = vld [vmem:[#allocation4 + $0x708] sm:$0xff]
        %v545 = vld [vmem:[#allocation4 + $0x710] sm:$0xff]
        %v546 = vld [vmem:[#allocation4 + $0x718] sm:$0xff]
        %v547 = vld [vmem:[#allocation4 + $0x720] sm:$0xff]
        %v548 = vld [vmem:[#allocation4 + $0x728] sm:$0xff]
        %v549 = vld [vmem:[#allocation4 + $0x730] sm:$0xff]
        %v550 = vld [vmem:[#allocation4 + $0x738] sm:$0xff]
        %v551 = vld [vmem:[#allocation4 + $0x740] sm:$0xff]
        %v552 = vld [vmem:[#allocation4 + $0x748] sm:$0xff]
        %v553 = vld [vmem:[#allocation4 + $0x750] sm:$0xff]
        %v554 = vld [vmem:[#allocation4 + $0x758] sm:$0xff]
        %v555 = vld [vmem:[#allocation4 + $0x760] sm:$0xff]
        %v556 = vld [vmem:[#allocation4 + $0x768] sm:$0xff]
        %v557 = vld [vmem:[#allocation4 + $0x770] sm:$0xff]
        %v558 = vld [vmem:[#allocation4 + $0x778] sm:$0xff]
        %v559 = vld [vmem:[#allocation4 + $0x780] sm:$0xff]
        %v560 = vld [vmem:[#allocation4 + $0x788] sm:$0xff]
        %v561 = vld [vmem:[#allocation4 + $0x790] sm:$0xff]
        %v562 = vld [vmem:[#allocation4 + $0x798] sm:$0xff]
        %v563 = vld [vmem:[#allocation4 + $0x7a0] sm:$0xff]
        %v564 = vld [vmem:[#allocation4 + $0x7a8] sm:$0xff]
        %v565 = vld [vmem:[#allocation4 + $0x7b0] sm:$0xff]
        %v566 = vld [vmem:[#allocation4 + $0x7b8] sm:$0xff]
        %v567 = vld [vmem:[#allocation4 + $0x7c0] sm:$0xff]
        %v568 = vld [vmem:[#allocation4 + $0x7c8] sm:$0xff]
        %v569 = vld [vmem:[#allocation4 + $0x7d0] sm:$0xff]
        %v570 = vld [vmem:[#allocation4 + $0x7d8] sm:$0xff]
        %v571 = vld [vmem:[#allocation4 + $0x7e0] sm:$0xff]
        %v572 = vld [vmem:[#allocation4 + $0x7e8] sm:$0xff]
        %v573 = vld [vmem:[#allocation4 + $0x7f0] sm:$0xff]
        %v574 = vld [vmem:[#allocation4 + $0x7f8] sm:$0xff]
        %v575 = vld [vmem:[#allocation4 + $0x800] sm:$0xff]
        %v576 = vld [vmem:[#allocation4 + $0x808] sm:$0xff]
        %v577 = vld [vmem:[#allocation4 + $0x810] sm:$0xff]
        %v578 = vld [vmem:[#allocation4 + $0x818] sm:$0xff]
        %v579 = vld [vmem:[#allocation4 + $0x820] sm:$0xff]
        %v580 = vld [vmem:[#allocation4 + $0x828] sm:$0xff]
        %v581 = vld [vmem:[#allocation4 + $0x830] sm:$0xff]
        %v582 = vld [vmem:[#allocation4 + $0x838] sm:$0xff]
        %v583 = vld [vmem:[#allocation4 + $0x840] sm:$0xff]
        %v584 = vld [vmem:[#allocation4 + $0x848] sm:$0xff]
        %v585 = vld [vmem:[#allocation4 + $0x850] sm:$0xff]
        %v586 = vld [vmem:[#allocation4 + $0x858] sm:$0xff]
        %v587 = vld [vmem:[#allocation4 + $0x860] sm:$0xff]
        %v588 = vld [vmem:[#allocation4 + $0x868] sm:$0xff]
        %v589 = vld [vmem:[#allocation4 + $0x870] sm:$0xff]
        %v590 = vld [vmem:[#allocation4 + $0x878] sm:$0xff]
        %v591 = vld [vmem:[#allocation4 + $0x880] sm:$0xff]
        %v592 = vld [vmem:[#allocation4 + $0x888] sm:$0xff]
        %v593 = vld [vmem:[#allocation4 + $0x890] sm:$0xff]
        %v594 = vld [vmem:[#allocation4 + $0x898] sm:$0xff]
        %v595 = vld [vmem:[#allocation4 + $0x8a0] sm:$0xff]
        %v596 = vld [vmem:[#allocation4 + $0x8a8] sm:$0xff]
        %v597 = vld [vmem:[#allocation4 + $0x8b0] sm:$0xff]
        %v598 = vld [vmem:[#allocation4 + $0x8b8] sm:$0xff]
        %v599 = vld [vmem:[#allocation4 + $0x8c0] sm:$0xff]
        %v600 = vld [vmem:[#allocation4 + $0x8c8] sm:$0xff]
        %v601 = vld [vmem:[#allocation4 + $0x8d0] sm:$0xff]
        %v602 = vld [vmem:[#allocation4 + $0x8d8] sm:$0xff]
        %v603 = vld [vmem:[#allocation4 + $0x8e0] sm:$0xff]
        %v604 = vld [vmem:[#allocation4 + $0x8e8] sm:$0xff]
        %v605 = vld [vmem:[#allocation4 + $0x8f0] sm:$0xff]
        %v606 = vld [vmem:[#allocation4 + $0x8f8] sm:$0xff]
        %v607 = vld [vmem:[#allocation4 + $0x900] sm:$0xff]
        %v608 = vld [vmem:[#allocation4 + $0x908] sm:$0xff]
        %v609 = vld [vmem:[#allocation4 + $0x910] sm:$0xff]
        %v610 = vld [vmem:[#allocation4 + $0x918] sm:$0xff]
        %v611 = vld [vmem:[#allocation4 + $0x920] sm:$0xff]
        %v612 = vld [vmem:[#allocation4 + $0x928] sm:$0xff]
        %v613 = vld [vmem:[#allocation4 + $0x930] sm:$0xff]
        %v614 = vld [vmem:[#allocation4 + $0x938] sm:$0xff]
        %v615 = vld [vmem:[#allocation4 + $0x940] sm:$0xff]
        %v616 = vld [vmem:[#allocation4 + $0x948] sm:$0xff]
        %v617 = vld [vmem:[#allocation4 + $0x950] sm:$0xff]
        %v618 = vld [vmem:[#allocation4 + $0x958] sm:$0xff]
        %v619 = vld [vmem:[#allocation4 + $0x960] sm:$0xff]
        %v620 = vld [vmem:[#allocation4 + $0x968] sm:$0xff]
        %v621 = vld [vmem:[#allocation4 + $0x970] sm:$0xff]
        %v622 = vld [vmem:[#allocation4 + $0x978] sm:$0xff]
        %v623 = vld [vmem:[#allocation4 + $0x980] sm:$0xff]
        %v624 = vld [vmem:[#allocation4 + $0x988] sm:$0xff]
        %v625 = vld [vmem:[#allocation4 + $0x990] sm:$0xff]
        %v626 = vld [vmem:[#allocation4 + $0x998] sm:$0xff]
        %v627 = vld [vmem:[#allocation4 + $0x9a0] sm:$0xff]
        %v628 = vld [vmem:[#allocation4 + $0x9a8] sm:$0xff]
        %v629 = vld [vmem:[#allocation4 + $0x9b0] sm:$0xff]
        %v630 = vld [vmem:[#allocation4 + $0x9b8] sm:$0xff]
        %v631 = vld [vmem:[#allocation4 + $0x9c0] sm:$0xff]
        %v632 = vld [vmem:[#allocation4 + $0x9c8] sm:$0xff]
        %v633 = vld [vmem:[#allocation4 + $0x9d0] sm:$0xff]
        %v634 = vld [vmem:[#allocation4 + $0x9d8] sm:$0xff]
        %v635 = vld [vmem:[#allocation4 + $0x9e0] sm:$0xff]
        %v636 = vld [vmem:[#allocation4 + $0x9e8] sm:$0xff]
        %v637 = vld [vmem:[#allocation4 + $0x9f0] sm:$0xff]
        %v638 = vld [vmem:[#allocation4 + $0x9f8] sm:$0xff]
        %v639 = vld [vmem:[#allocation4 + $0xa00] sm:$0xff]
        %v640 = vld [vmem:[#allocation4 + $0xa08] sm:$0xff]
        %v641 = vld [vmem:[#allocation4 + $0xa10] sm:$0xff]
        %v642 = vld [vmem:[#allocation4 + $0xa18] sm:$0xff]
        %v643 = vld [vmem:[#allocation4 + $0xa20] sm:$0xff]
        %v644 = vld [vmem:[#allocation4 + $0xa28] sm:$0xff]
        %v645 = vld [vmem:[#allocation4 + $0xa30] sm:$0xff]
        %v646 = vld [vmem:[#allocation4 + $0xa38] sm:$0xff]
        %v647 = vld [vmem:[#allocation4 + $0xa40] sm:$0xff]
        %v648 = vld [vmem:[#allocation4 + $0xa48] sm:$0xff]
        %v649 = vld [vmem:[#allocation4 + $0xa50] sm:$0xff]
        %v650 = vld [vmem:[#allocation4 + $0xa58] sm:$0xff]
        %v651 = vld [vmem:[#allocation4 + $0xa60] sm:$0xff]
        %v652 = vld [vmem:[#allocation4 + $0xa68] sm:$0xff]
        %v653 = vld [vmem:[#allocation4 + $0xa70] sm:$0xff]
        %v654 = vld [vmem:[#allocation4 + $0xa78] sm:$0xff]
        %v655 = vld [vmem:[#allocation4 + $0xa80] sm:$0xff]
        %v656 = vld [vmem:[#allocation4 + $0xa88] sm:$0xff]
        %v657 = vld [vmem:[#allocation4 + $0xa90] sm:$0xff]
        %v658 = vld [vmem:[#allocation4 + $0xa98] sm:$0xff]
        %v659 = vld [vmem:[#allocation4 + $0xaa0] sm:$0xff]
        %v660 = vld [vmem:[#allocation4 + $0xaa8] sm:$0xff]
        %v661 = vld [vmem:[#allocation4 + $0xab0] sm:$0xff]
        %v662 = vld [vmem:[#allocation4 + $0xab8] sm:$0xff]
        %v663 = vld [vmem:[#allocation4 + $0xac0] sm:$0xff]
        %v664 = vld [vmem:[#allocation4 + $0xac8] sm:$0xff]
        %v665 = vld [vmem:[#allocation4 + $0xad0] sm:$0xff]
        %v666 = vld [vmem:[#allocation4 + $0xad8] sm:$0xff]
        %v667 = vld [vmem:[#allocation4 + $0xae0] sm:$0xff]
        %v668 = vld [vmem:[#allocation4 + $0xae8] sm:$0xff]
        %v669 = vld [vmem:[#allocation4 + $0xaf0] sm:$0xff]
        %v670 = vld [vmem:[#allocation4 + $0xaf8] sm:$0xff]
        %v671 = vld [vmem:[#allocation4 + $0xb00] sm:$0xff]
        %v672 = vld [vmem:[#allocation4 + $0xb08] sm:$0xff]
        %v673 = vld [vmem:[#allocation4 + $0xb10] sm:$0xff]
        %v674 = vld [vmem:[#allocation4 + $0xb18] sm:$0xff]
        %v675 = vld [vmem:[#allocation4 + $0xb20] sm:$0xff]
        %v676 = vld [vmem:[#allocation4 + $0xb28] sm:$0xff]
        %v677 = vld [vmem:[#allocation4 + $0xb30] sm:$0xff]
        %v678 = vld [vmem:[#allocation4 + $0xb38] sm:$0xff]
        %v679 = vld [vmem:[#allocation4 + $0xb40] sm:$0xff]
        %v680 = vld [vmem:[#allocation4 + $0xb48] sm:$0xff]
        %v681 = vld [vmem:[#allocation4 + $0xb50] sm:$0xff]
        %v682 = vld [vmem:[#allocation4 + $0xb58] sm:$0xff]
        %v683 = vld [vmem:[#allocation4 + $0xb60] sm:$0xff]
        %v684 = vld [vmem:[#allocation4 + $0xb68] sm:$0xff]
        %v685 = vld [vmem:[#allocation4 + $0xb70] sm:$0xff]
        %v686 = vld [vmem:[#allocation4 + $0xb78] sm:$0xff]
        %v687 = vld [vmem:[#allocation4 + $0xb80] sm:$0xff]
        %v688 = vld [vmem:[#allocation4 + $0xb88] sm:$0xff]
        %v689 = vld [vmem:[#allocation4 + $0xb90] sm:$0xff]
        %v690 = vld [vmem:[#allocation4 + $0xb98] sm:$0xff]
        %v691 = vld [vmem:[#allocation4 + $0xba0] sm:$0xff]
        %v692 = vld [vmem:[#allocation4 + $0xba8] sm:$0xff]
        %v693 = vld [vmem:[#allocation4 + $0xbb0] sm:$0xff]
        %v694 = vld [vmem:[#allocation4 + $0xbb8] sm:$0xff]
        %v695 = vld [vmem:[#allocation4 + $0xbc0] sm:$0xff]
        %v696 = vld [vmem:[#allocation4 + $0xbc8] sm:$0xff]
        %v697 = vld [vmem:[#allocation4 + $0xbd0] sm:$0xff]
        %v698 = vld [vmem:[#allocation4 + $0xbd8] sm:$0xff]
        %v699 = vld [vmem:[#allocation4 + $0xbe0] sm:$0xff]
        %v700 = vld [vmem:[#allocation4 + $0xbe8] sm:$0xff]
        %v701 = vld [vmem:[#allocation4 + $0xbf0] sm:$0xff]
        %v702 = vld [vmem:[#allocation4 + $0xbf8] sm:$0xff]
        %v703 = vld [vmem:[#allocation6] sm:$0xff]
        %v704 = vld [vmem:[#allocation6 + $0x8] sm:$0xf]
        %v707 = vlaneseq
        %v708 = vshrl.u32 %v707, 7
        %v709 = vsub.s32 0, %v708
        %v710 = vrot.slane %v703, %v709
        %v711 = vlaneseq
        %v712 = vshrl.u32 %v711, 7
        %v713 = vsub.s32 1, %v712
        %v714 = vrot.slane %v703, %v713
        %v715 = vlaneseq
        %v716 = vshrl.u32 %v715, 7
        %v717 = vsub.s32 2, %v716
        %v718 = vrot.slane %v703, %v717
        %v719 = vlaneseq
        %v720 = vshrl.u32 %v719, 7
        %v721 = vsub.s32 3, %v720
        %v722 = vrot.slane %v703, %v721
        %v723 = vlaneseq
        %v724 = vshrl.u32 %v723, 7
        %v725 = vsub.s32 4, %v724
        %v726 = vrot.slane %v703, %v725
        %v727 = vlaneseq
        %v728 = vshrl.u32 %v727, 7
        %v729 = vsub.s32 5, %v728
        %v730 = vrot.slane %v703, %v729
        %v731 = vlaneseq
        %v732 = vshrl.u32 %v731, 7
        %v733 = vsub.s32 6, %v732
        %v734 = vrot.slane %v703, %v733
        %v735 = vlaneseq
        %v736 = vshrl.u32 %v735, 7
        %v737 = vsub.s32 7, %v736
        %v738 = vrot.slane %v703, %v737
        %v739 = vlaneseq
        %v740 = vshrl.u32 %v739, 7
        %v741 = vsub.s32 0, %v740
        %v742 = vrot.slane %v704, %v741
        %v743 = vlaneseq
        %v744 = vshrl.u32 %v743, 7
        %v745 = vsub.s32 1, %v744
        %v746 = vrot.slane %v704, %v745
        %v747 = vlaneseq
        %v748 = vshrl.u32 %v747, 7
        %v749 = vsub.s32 2, %v748
        %v750 = vrot.slane %v704, %v749
        %v751 = vlaneseq
        %v752 = vshrl.u32 %v751, 7
        %v753 = vsub.s32 3, %v752
        %v754 = vrot.slane %v704, %v753
        %v1151 = vunpack.c.l.b16 %v319
        %v1152 = vunpack.c.h.b16 %v319
        %v1153 = vunpack.c.l.b16 %v320
        %v1154 = vunpack.c.h.b16 %v320
        %v1155 = vunpack.c.l.b16 %v321
        %v1156 = vunpack.c.h.b16 %v321
        %v1157 = vunpack.c.l.b16 %v322
        %v1158 = vunpack.c.h.b16 %v322
        %v1159 = vunpack.c.l.b16 %v323
        %v1160 = vunpack.c.h.b16 %v323
        %v1161 = vunpack.c.l.b16 %v324
        %v1162 = vunpack.c.h.b16 %v324
        %v1163 = vunpack.c.l.b16 %v325
        %v1164 = vunpack.c.h.b16 %v325
        %v1165 = vunpack.c.l.b16 %v326
        %v1166 = vunpack.c.h.b16 %v326
        %v1167 = vunpack.c.l.b16 %v327
        %v1168 = vunpack.c.h.b16 %v327
        %v1169 = vunpack.c.l.b16 %v328
        %v1170 = vunpack.c.h.b16 %v328
        %v1171 = vunpack.c.l.b16 %v329
        %v1172 = vunpack.c.h.b16 %v329
        %v1173 = vunpack.c.l.b16 %v330
        %v1174 = vunpack.c.h.b16 %v330
        %v1175 = vunpack.c.l.b16 %v331
        %v1176 = vunpack.c.h.b16 %v331
        %v1177 = vunpack.c.l.b16 %v332
        %v1178 = vunpack.c.h.b16 %v332
        %v1179 = vunpack.c.l.b16 %v333
        %v1180 = vunpack.c.h.b16 %v333
        %v1181 = vunpack.c.l.b16 %v334
        %v1182 = vunpack.c.h.b16 %v334
        %v1183 = vunpack.c.l.b16 %v335
        %v1184 = vunpack.c.h.b16 %v335
        %v1185 = vunpack.c.l.b16 %v336
        %v1186 = vunpack.c.h.b16 %v336
        %v1187 = vunpack.c.l.b16 %v337
        %v1188 = vunpack.c.h.b16 %v337
        %v1189 = vunpack.c.l.b16 %v338
        %v1190 = vunpack.c.h.b16 %v338
        %v1191 = vunpack.c.l.b16 %v339
        %v1192 = vunpack.c.h.b16 %v339
        %v1193 = vunpack.c.l.b16 %v340
        %v1194 = vunpack.c.h.b16 %v340
        %v1195 = vunpack.c.l.b16 %v341
        %v1196 = vunpack.c.h.b16 %v341
        %v1197 = vunpack.c.l.b16 %v342
        %v1198 = vunpack.c.h.b16 %v342
        %v1199 = vunpack.c.l.b16 %v343
        %v1200 = vunpack.c.h.b16 %v343
        %v1201 = vunpack.c.l.b16 %v344
        %v1202 = vunpack.c.h.b16 %v344
        %v1203 = vunpack.c.l.b16 %v345
        %v1204 = vunpack.c.h.b16 %v345
        %v1205 = vunpack.c.l.b16 %v346
        %v1206 = vunpack.c.h.b16 %v346
        %v1207 = vunpack.c.l.b16 %v347
        %v1208 = vunpack.c.h.b16 %v347
        %v1209 = vunpack.c.l.b16 %v348
        %v1210 = vunpack.c.h.b16 %v348
        %v1211 = vunpack.c.l.b16 %v349
        %v1212 = vunpack.c.h.b16 %v349
        %v1213 = vunpack.c.l.b16 %v350
        %v1214 = vunpack.c.h.b16 %v350
        %v1215 = vunpack.c.l.b16 %v351
        %v1216 = vunpack.c.h.b16 %v351
        %v1217 = vunpack.c.l.b16 %v352
        %v1218 = vunpack.c.h.b16 %v352
        %v1219 = vunpack.c.l.b16 %v353
        %v1220 = vunpack.c.h.b16 %v353
        %v1221 = vunpack.c.l.b16 %v354
        %v1222 = vunpack.c.h.b16 %v354
        %v1223 = vunpack.c.l.b16 %v355
        %v1224 = vunpack.c.h.b16 %v355
        %v1225 = vunpack.c.l.b16 %v356
        %v1226 = vunpack.c.h.b16 %v356
        %v1227 = vunpack.c.l.b16 %v357
        %v1228 = vunpack.c.h.b16 %v357
        %v1229 = vunpack.c.l.b16 %v358
        %v1230 = vunpack.c.h.b16 %v358
        %v1231 = vunpack.c.l.b16 %v359
        %v1232 = vunpack.c.h.b16 %v359
        %v1233 = vunpack.c.l.b16 %v360
        %v1234 = vunpack.c.h.b16 %v360
        %v1235 = vunpack.c.l.b16 %v361
        %v1236 = vunpack.c.h.b16 %v361
        %v1237 = vunpack.c.l.b16 %v362
        %v1238 = vunpack.c.h.b16 %v362
        %v1239 = vunpack.c.l.b16 %v363
        %v1240 = vunpack.c.h.b16 %v363
        %v1241 = vunpack.c.l.b16 %v364
        %v1242 = vunpack.c.h.b16 %v364
        %v1243 = vunpack.c.l.b16 %v365
        %v1244 = vunpack.c.h.b16 %v365
        %v1245 = vunpack.c.l.b16 %v366
        %v1246 = vunpack.c.h.b16 %v366
        %v1247 = vunpack.c.l.b16 %v367
        %v1248 = vunpack.c.h.b16 %v367
        %v1249 = vunpack.c.l.b16 %v368
        %v1250 = vunpack.c.h.b16 %v368
        %v1251 = vunpack.c.l.b16 %v369
        %v1252 = vunpack.c.h.b16 %v369
        %v1253 = vunpack.c.l.b16 %v370
        %v1254 = vunpack.c.h.b16 %v370
        %v1255 = vunpack.c.l.b16 %v371
        %v1256 = vunpack.c.h.b16 %v371
        %v1257 = vunpack.c.l.b16 %v372
        %v1258 = vunpack.c.h.b16 %v372
        %v1259 = vunpack.c.l.b16 %v373
        %v1260 = vunpack.c.h.b16 %v373
        %v1261 = vunpack.c.l.b16 %v374
        %v1262 = vunpack.c.h.b16 %v374
        %v1263 = vunpack.c.l.b16 %v375
        %v1264 = vunpack.c.h.b16 %v375
        %v1265 = vunpack.c.l.b16 %v376
        %v1266 = vunpack.c.h.b16 %v376
        %v1267 = vunpack.c.l.b16 %v377
        %v1268 = vunpack.c.h.b16 %v377
        %v1269 = vunpack.c.l.b16 %v378
        %v1270 = vunpack.c.h.b16 %v378
        %v1271 = vunpack.c.l.b16 %v379
        %v1272 = vunpack.c.h.b16 %v379
        %v1273 = vunpack.c.l.b16 %v380
        %v1274 = vunpack.c.h.b16 %v380
        %v1275 = vunpack.c.l.b16 %v381
        %v1276 = vunpack.c.h.b16 %v381
        %v1277 = vunpack.c.l.b16 %v382
        %v1278 = vunpack.c.h.b16 %v382
        %v1279 = vunpack.c.l.b16 %v383
        %v1280 = vunpack.c.h.b16 %v383
        %v1281 = vunpack.c.l.b16 %v384
        %v1282 = vunpack.c.h.b16 %v384
        %v1283 = vunpack.c.l.b16 %v385
        %v1284 = vunpack.c.h.b16 %v385
        %v1285 = vunpack.c.l.b16 %v386
        %v1286 = vunpack.c.h.b16 %v386
        %v1287 = vunpack.c.l.b16 %v387
        %v1288 = vunpack.c.h.b16 %v387
        %v1289 = vunpack.c.l.b16 %v388
        %v1290 = vunpack.c.h.b16 %v388
        %v1291 = vunpack.c.l.b16 %v389
        %v1292 = vunpack.c.h.b16 %v389
        %v1293 = vunpack.c.l.b16 %v390
        %v1294 = vunpack.c.h.b16 %v390
        %v1295 = vunpack.c.l.b16 %v391
        %v1296 = vunpack.c.h.b16 %v391
        %v1297 = vunpack.c.l.b16 %v392
        %v1298 = vunpack.c.h.b16 %v392
        %v1299 = vunpack.c.l.b16 %v393
        %v1300 = vunpack.c.h.b16 %v393
        %v1301 = vunpack.c.l.b16 %v394
        %v1302 = vunpack.c.h.b16 %v394
        %v1303 = vunpack.c.l.b16 %v395
        %v1304 = vunpack.c.h.b16 %v395
        %v1305 = vunpack.c.l.b16 %v396
        %v1306 = vunpack.c.h.b16 %v396
        %v1307 = vunpack.c.l.b16 %v397
        %v1308 = vunpack.c.h.b16 %v397
        %v1309 = vunpack.c.l.b16 %v398
        %v1310 = vunpack.c.h.b16 %v398
        %v1311 = vunpack.c.l.b16 %v399
        %v1312 = vunpack.c.h.b16 %v399
        %v1313 = vunpack.c.l.b16 %v400
        %v1314 = vunpack.c.h.b16 %v400
        %v1315 = vunpack.c.l.b16 %v401
        %v1316 = vunpack.c.h.b16 %v401
        %v1317 = vunpack.c.l.b16 %v402
        %v1318 = vunpack.c.h.b16 %v402
        %v1319 = vunpack.c.l.b16 %v403
        %v1320 = vunpack.c.h.b16 %v403
        %v1321 = vunpack.c.l.b16 %v404
        %v1322 = vunpack.c.h.b16 %v404
        %v1323 = vunpack.c.l.b16 %v405
        %v1324 = vunpack.c.h.b16 %v405
        %v1325 = vunpack.c.l.b16 %v406
        %v1326 = vunpack.c.h.b16 %v406
        %v1327 = vunpack.c.l.b16 %v407
        %v1328 = vunpack.c.h.b16 %v407
        %v1329 = vunpack.c.l.b16 %v408
        %v1330 = vunpack.c.h.b16 %v408
        %v1331 = vunpack.c.l.b16 %v409
        %v1332 = vunpack.c.h.b16 %v409
        %v1333 = vunpack.c.l.b16 %v410
        %v1334 = vunpack.c.h.b16 %v410
        %v1335 = vunpack.c.l.b16 %v411
        %v1336 = vunpack.c.h.b16 %v411
        %v1337 = vunpack.c.l.b16 %v412
        %v1338 = vunpack.c.h.b16 %v412
        %v1339 = vunpack.c.l.b16 %v413
        %v1340 = vunpack.c.h.b16 %v413
        %v1341 = vunpack.c.l.b16 %v414
        %v1342 = vunpack.c.h.b16 %v414
        %v1343 = vunpack.c.l.b16 %v415
        %v1344 = vunpack.c.h.b16 %v415
        %v1345 = vunpack.c.l.b16 %v416
        %v1346 = vunpack.c.h.b16 %v416
        %v1347 = vunpack.c.l.b16 %v417
        %v1348 = vunpack.c.h.b16 %v417
        %v1349 = vunpack.c.l.b16 %v418
        %v1350 = vunpack.c.h.b16 %v418
        %v1351 = vunpack.c.l.b16 %v419
        %v1352 = vunpack.c.h.b16 %v419
        %v1353 = vunpack.c.l.b16 %v420
        %v1354 = vunpack.c.h.b16 %v420
        %v1355 = vunpack.c.l.b16 %v421
        %v1356 = vunpack.c.h.b16 %v421
        %v1357 = vunpack.c.l.b16 %v422
        %v1358 = vunpack.c.h.b16 %v422
        %v1359 = vunpack.c.l.b16 %v423
        %v1360 = vunpack.c.h.b16 %v423
        %v1361 = vunpack.c.l.b16 %v424
        %v1362 = vunpack.c.h.b16 %v424
        %v1363 = vunpack.c.l.b16 %v425
        %v1364 = vunpack.c.h.b16 %v425
        %v1365 = vunpack.c.l.b16 %v426
        %v1366 = vunpack.c.h.b16 %v426
        %v1367 = vunpack.c.l.b16 %v427
        %v1368 = vunpack.c.h.b16 %v427
        %v1369 = vunpack.c.l.b16 %v428
        %v1370 = vunpack.c.h.b16 %v428
        %v1371 = vunpack.c.l.b16 %v429
        %v1372 = vunpack.c.h.b16 %v429
        %v1373 = vunpack.c.l.b16 %v430
        %v1374 = vunpack.c.h.b16 %v430
        %v1375 = vunpack.c.l.b16 %v431
        %v1376 = vunpack.c.h.b16 %v431
        %v1377 = vunpack.c.l.b16 %v432
        %v1378 = vunpack.c.h.b16 %v432
        %v1379 = vunpack.c.l.b16 %v433
        %v1380 = vunpack.c.h.b16 %v433
        %v1381 = vunpack.c.l.b16 %v434
        %v1382 = vunpack.c.h.b16 %v434
        %v1383 = vunpack.c.l.b16 %v435
        %v1384 = vunpack.c.h.b16 %v435
        %v1385 = vunpack.c.l.b16 %v436
        %v1386 = vunpack.c.h.b16 %v436
        %v1387 = vunpack.c.l.b16 %v437
        %v1388 = vunpack.c.h.b16 %v437
        %v1389 = vunpack.c.l.b16 %v438
        %v1390 = vunpack.c.h.b16 %v438
        %v1391 = vunpack.c.l.b16 %v439
        %v1392 = vunpack.c.h.b16 %v439
        %v1393 = vunpack.c.l.b16 %v440
        %v1394 = vunpack.c.h.b16 %v440
        %v1395 = vunpack.c.l.b16 %v441
        %v1396 = vunpack.c.h.b16 %v441
        %v1397 = vunpack.c.l.b16 %v442
        %v1398 = vunpack.c.h.b16 %v442
        %v1399 = vunpack.c.l.b16 %v443
        %v1400 = vunpack.c.h.b16 %v443
        %v1401 = vunpack.c.l.b16 %v444
        %v1402 = vunpack.c.h.b16 %v444
        %v1403 = vunpack.c.l.b16 %v445
        %v1404 = vunpack.c.h.b16 %v445
        %v1405 = vunpack.c.l.b16 %v446
        %v1406 = vunpack.c.h.b16 %v446
        %v1407 = vunpack.c.l.b16 %v447
        %v1408 = vunpack.c.h.b16 %v447
        %v1409 = vunpack.c.l.b16 %v448
        %v1410 = vunpack.c.h.b16 %v448
        %v1411 = vunpack.c.l.b16 %v449
        %v1412 = vunpack.c.h.b16 %v449
        %v1413 = vunpack.c.l.b16 %v450
        %v1414 = vunpack.c.h.b16 %v450
        %v1415 = vunpack.c.l.b16 %v451
        %v1416 = vunpack.c.h.b16 %v451
        %v1417 = vunpack.c.l.b16 %v452
        %v1418 = vunpack.c.h.b16 %v452
        %v1419 = vunpack.c.l.b16 %v453
        %v1420 = vunpack.c.h.b16 %v453
        %v1421 = vunpack.c.l.b16 %v454
        %v1422 = vunpack.c.h.b16 %v454
        %v1423 = vunpack.c.l.b16 %v455
        %v1424 = vunpack.c.h.b16 %v455
        %v1425 = vunpack.c.l.b16 %v456
        %v1426 = vunpack.c.h.b16 %v456
        %v1427 = vunpack.c.l.b16 %v457
        %v1428 = vunpack.c.h.b16 %v457
        %v1429 = vunpack.c.l.b16 %v458
        %v1430 = vunpack.c.h.b16 %v458
        %v1431 = vunpack.c.l.b16 %v459
        %v1432 = vunpack.c.h.b16 %v459
        %v1433 = vunpack.c.l.b16 %v460
        %v1434 = vunpack.c.h.b16 %v460
        %v1435 = vunpack.c.l.b16 %v461
        %v1436 = vunpack.c.h.b16 %v461
        %v1437 = vunpack.c.l.b16 %v462
        %v1438 = vunpack.c.h.b16 %v462
        %v1439 = vunpack.c.l.b16 %v463
        %v1440 = vunpack.c.h.b16 %v463
        %v1441 = vunpack.c.l.b16 %v464
        %v1442 = vunpack.c.h.b16 %v464
        %v1443 = vunpack.c.l.b16 %v465
        %v1444 = vunpack.c.h.b16 %v465
        %v1445 = vunpack.c.l.b16 %v466
        %v1446 = vunpack.c.h.b16 %v466
        %v1447 = vunpack.c.l.b16 %v467
        %v1448 = vunpack.c.h.b16 %v467
        %v1449 = vunpack.c.l.b16 %v468
        %v1450 = vunpack.c.h.b16 %v468
        %v1451 = vunpack.c.l.b16 %v469
        %v1452 = vunpack.c.h.b16 %v469
        %v1453 = vunpack.c.l.b16 %v470
        %v1454 = vunpack.c.h.b16 %v470
        %v1455 = vunpack.c.l.b16 %v471
        %v1456 = vunpack.c.h.b16 %v471
        %v1457 = vunpack.c.l.b16 %v472
        %v1458 = vunpack.c.h.b16 %v472
        %v1459 = vunpack.c.l.b16 %v473
        %v1460 = vunpack.c.h.b16 %v473
        %v1461 = vunpack.c.l.b16 %v474
        %v1462 = vunpack.c.h.b16 %v474
        %v1463 = vunpack.c.l.b16 %v475
        %v1464 = vunpack.c.h.b16 %v475
        %v1465 = vunpack.c.l.b16 %v476
        %v1466 = vunpack.c.h.b16 %v476
        %v1467 = vunpack.c.l.b16 %v477
        %v1468 = vunpack.c.h.b16 %v477
        %v1469 = vunpack.c.l.b16 %v478
        %v1470 = vunpack.c.h.b16 %v478
        %v1471 = vunpack.c.l.b16 %v479
        %v1472 = vunpack.c.h.b16 %v479
        %v1473 = vunpack.c.l.b16 %v480
        %v1474 = vunpack.c.h.b16 %v480
        %v1475 = vunpack.c.l.b16 %v481
        %v1476 = vunpack.c.h.b16 %v481
        %v1477 = vunpack.c.l.b16 %v482
        %v1478 = vunpack.c.h.b16 %v482
        %v1479 = vunpack.c.l.b16 %v483
        %v1480 = vunpack.c.h.b16 %v483
        %v1481 = vunpack.c.l.b16 %v484
        %v1482 = vunpack.c.h.b16 %v484
        %v1483 = vunpack.c.l.b16 %v485
        %v1484 = vunpack.c.h.b16 %v485
        %v1485 = vunpack.c.l.b16 %v486
        %v1486 = vunpack.c.h.b16 %v486
        %v1487 = vunpack.c.l.b16 %v487
        %v1488 = vunpack.c.h.b16 %v487
        %v1489 = vunpack.c.l.b16 %v488
        %v1490 = vunpack.c.h.b16 %v488
        %v1491 = vunpack.c.l.b16 %v489
        %v1492 = vunpack.c.h.b16 %v489
        %v1493 = vunpack.c.l.b16 %v490
        %v1494 = vunpack.c.h.b16 %v490
        %v1495 = vunpack.c.l.b16 %v491
        %v1496 = vunpack.c.h.b16 %v491
        %v1497 = vunpack.c.l.b16 %v492
        %v1498 = vunpack.c.h.b16 %v492
        %v1499 = vunpack.c.l.b16 %v493
        %v1500 = vunpack.c.h.b16 %v493
        %v1501 = vunpack.c.l.b16 %v494
        %v1502 = vunpack.c.h.b16 %v494
        %v1503 = vunpack.c.l.b16 %v495
        %v1504 = vunpack.c.h.b16 %v495
        %v1505 = vunpack.c.l.b16 %v496
        %v1506 = vunpack.c.h.b16 %v496
        %v1507 = vunpack.c.l.b16 %v497
        %v1508 = vunpack.c.h.b16 %v497
        %v1509 = vunpack.c.l.b16 %v498
        %v1510 = vunpack.c.h.b16 %v498
        %v1511 = vunpack.c.l.b16 %v499
        %v1512 = vunpack.c.h.b16 %v499
        %v1513 = vunpack.c.l.b16 %v500
        %v1514 = vunpack.c.h.b16 %v500
        %v1515 = vunpack.c.l.b16 %v501
        %v1516 = vunpack.c.h.b16 %v501
        %v1517 = vunpack.c.l.b16 %v502
        %v1518 = vunpack.c.h.b16 %v502
        %v1519 = vunpack.c.l.b16 %v503
        %v1520 = vunpack.c.h.b16 %v503
        %v1521 = vunpack.c.l.b16 %v504
        %v1522 = vunpack.c.h.b16 %v504
        %v1523 = vunpack.c.l.b16 %v505
        %v1524 = vunpack.c.h.b16 %v505
        %v1525 = vunpack.c.l.b16 %v506
        %v1526 = vunpack.c.h.b16 %v506
        %v1527 = vunpack.c.l.b16 %v507
        %v1528 = vunpack.c.h.b16 %v507
        %v1529 = vunpack.c.l.b16 %v508
        %v1530 = vunpack.c.h.b16 %v508
        %v1531 = vunpack.c.l.b16 %v509
        %v1532 = vunpack.c.h.b16 %v509
        %v1533 = vunpack.c.l.b16 %v510
        %v1534 = vunpack.c.h.b16 %v510
        %v1535 = vunpack.c.l.b16 %v511
        %v1536 = vunpack.c.h.b16 %v511
        %v1537 = vunpack.c.l.b16 %v512
        %v1538 = vunpack.c.h.b16 %v512
        %v1539 = vunpack.c.l.b16 %v513
        %v1540 = vunpack.c.h.b16 %v513
        %v1541 = vunpack.c.l.b16 %v514
        %v1542 = vunpack.c.h.b16 %v514
        %v1543 = vunpack.c.l.b16 %v515
        %v1544 = vunpack.c.h.b16 %v515
        %v1545 = vunpack.c.l.b16 %v516
        %v1546 = vunpack.c.h.b16 %v516
        %v1547 = vunpack.c.l.b16 %v517
        %v1548 = vunpack.c.h.b16 %v517
        %v1549 = vunpack.c.l.b16 %v518
        %v1550 = vunpack.c.h.b16 %v518
        %v1551 = vunpack.c.l.b16 %v519
        %v1552 = vunpack.c.h.b16 %v519
        %v1553 = vunpack.c.l.b16 %v520
        %v1554 = vunpack.c.h.b16 %v520
        %v1555 = vunpack.c.l.b16 %v521
        %v1556 = vunpack.c.h.b16 %v521
        %v1557 = vunpack.c.l.b16 %v522
        %v1558 = vunpack.c.h.b16 %v522
        %v1559 = vunpack.c.l.b16 %v523
        %v1560 = vunpack.c.h.b16 %v523
        %v1561 = vunpack.c.l.b16 %v524
        %v1562 = vunpack.c.h.b16 %v524
        %v1563 = vunpack.c.l.b16 %v525
        %v1564 = vunpack.c.h.b16 %v525
        %v1565 = vunpack.c.l.b16 %v526
        %v1566 = vunpack.c.h.b16 %v526
        %v1567 = vunpack.c.l.b16 %v527
        %v1568 = vunpack.c.h.b16 %v527
        %v1569 = vunpack.c.l.b16 %v528
        %v1570 = vunpack.c.h.b16 %v528
        %v1571 = vunpack.c.l.b16 %v529
        %v1572 = vunpack.c.h.b16 %v529
        %v1573 = vunpack.c.l.b16 %v530
        %v1574 = vunpack.c.h.b16 %v530
        %v1575 = vunpack.c.l.b16 %v531
        %v1576 = vunpack.c.h.b16 %v531
        %v1577 = vunpack.c.l.b16 %v532
        %v1578 = vunpack.c.h.b16 %v532
        %v1579 = vunpack.c.l.b16 %v533
        %v1580 = vunpack.c.h.b16 %v533
        %v1581 = vunpack.c.l.b16 %v534
        %v1582 = vunpack.c.h.b16 %v534
        %v1583 = vunpack.c.l.b16 %v535
        %v1584 = vunpack.c.h.b16 %v535
        %v1585 = vunpack.c.l.b16 %v536
        %v1586 = vunpack.c.h.b16 %v536
        %v1587 = vunpack.c.l.b16 %v537
        %v1588 = vunpack.c.h.b16 %v537
        %v1589 = vunpack.c.l.b16 %v538
        %v1590 = vunpack.c.h.b16 %v538
        %v1591 = vunpack.c.l.b16 %v539
        %v1592 = vunpack.c.h.b16 %v539
        %v1593 = vunpack.c.l.b16 %v540
        %v1594 = vunpack.c.h.b16 %v540
        %v1595 = vunpack.c.l.b16 %v541
        %v1596 = vunpack.c.h.b16 %v541
        %v1597 = vunpack.c.l.b16 %v542
        %v1598 = vunpack.c.h.b16 %v542
        %v1599 = vunpack.c.l.b16 %v543
        %v1600 = vunpack.c.h.b16 %v543
        %v1601 = vunpack.c.l.b16 %v544
        %v1602 = vunpack.c.h.b16 %v544
        %v1603 = vunpack.c.l.b16 %v545
        %v1604 = vunpack.c.h.b16 %v545
        %v1605 = vunpack.c.l.b16 %v546
        %v1606 = vunpack.c.h.b16 %v546
        %v1607 = vunpack.c.l.b16 %v547
        %v1608 = vunpack.c.h.b16 %v547
        %v1609 = vunpack.c.l.b16 %v548
        %v1610 = vunpack.c.h.b16 %v548
        %v1611 = vunpack.c.l.b16 %v549
        %v1612 = vunpack.c.h.b16 %v549
        %v1613 = vunpack.c.l.b16 %v550
        %v1614 = vunpack.c.h.b16 %v550
        %v1615 = vunpack.c.l.b16 %v551
        %v1616 = vunpack.c.h.b16 %v551
        %v1617 = vunpack.c.l.b16 %v552
        %v1618 = vunpack.c.h.b16 %v552
        %v1619 = vunpack.c.l.b16 %v553
        %v1620 = vunpack.c.h.b16 %v553
        %v1621 = vunpack.c.l.b16 %v554
        %v1622 = vunpack.c.h.b16 %v554
        %v1623 = vunpack.c.l.b16 %v555
        %v1624 = vunpack.c.h.b16 %v555
        %v1625 = vunpack.c.l.b16 %v556
        %v1626 = vunpack.c.h.b16 %v556
        %v1627 = vunpack.c.l.b16 %v557
        %v1628 = vunpack.c.h.b16 %v557
        %v1629 = vunpack.c.l.b16 %v558
        %v1630 = vunpack.c.h.b16 %v558
        %v1631 = vunpack.c.l.b16 %v559
        %v1632 = vunpack.c.h.b16 %v559
        %v1633 = vunpack.c.l.b16 %v560
        %v1634 = vunpack.c.h.b16 %v560
        %v1635 = vunpack.c.l.b16 %v561
        %v1636 = vunpack.c.h.b16 %v561
        %v1637 = vunpack.c.l.b16 %v562
        %v1638 = vunpack.c.h.b16 %v562
        %v1639 = vunpack.c.l.b16 %v563
        %v1640 = vunpack.c.h.b16 %v563
        %v1641 = vunpack.c.l.b16 %v564
        %v1642 = vunpack.c.h.b16 %v564
        %v1643 = vunpack.c.l.b16 %v565
        %v1644 = vunpack.c.h.b16 %v565
        %v1645 = vunpack.c.l.b16 %v566
        %v1646 = vunpack.c.h.b16 %v566
        %v1647 = vunpack.c.l.b16 %v567
        %v1648 = vunpack.c.h.b16 %v567
        %v1649 = vunpack.c.l.b16 %v568
        %v1650 = vunpack.c.h.b16 %v568
        %v1651 = vunpack.c.l.b16 %v569
        %v1652 = vunpack.c.h.b16 %v569
        %v1653 = vunpack.c.l.b16 %v570
        %v1654 = vunpack.c.h.b16 %v570
        %v1655 = vunpack.c.l.b16 %v571
        %v1656 = vunpack.c.h.b16 %v571
        %v1657 = vunpack.c.l.b16 %v572
        %v1658 = vunpack.c.h.b16 %v572
        %v1659 = vunpack.c.l.b16 %v573
        %v1660 = vunpack.c.h.b16 %v573
        %v1661 = vunpack.c.l.b16 %v574
        %v1662 = vunpack.c.h.b16 %v574
        %v1663 = vunpack.c.l.b16 %v575
        %v1664 = vunpack.c.h.b16 %v575
        %v1665 = vunpack.c.l.b16 %v576
        %v1666 = vunpack.c.h.b16 %v576
        %v1667 = vunpack.c.l.b16 %v577
        %v1668 = vunpack.c.h.b16 %v577
        %v1669 = vunpack.c.l.b16 %v578
        %v1670 = vunpack.c.h.b16 %v578
        %v1671 = vunpack.c.l.b16 %v579
        %v1672 = vunpack.c.h.b16 %v579
        %v1673 = vunpack.c.l.b16 %v580
        %v1674 = vunpack.c.h.b16 %v580
        %v1675 = vunpack.c.l.b16 %v581
        %v1676 = vunpack.c.h.b16 %v581
        %v1677 = vunpack.c.l.b16 %v582
        %v1678 = vunpack.c.h.b16 %v582
        %v1679 = vunpack.c.l.b16 %v583
        %v1680 = vunpack.c.h.b16 %v583
        %v1681 = vunpack.c.l.b16 %v584
        %v1682 = vunpack.c.h.b16 %v584
        %v1683 = vunpack.c.l.b16 %v585
        %v1684 = vunpack.c.h.b16 %v585
        %v1685 = vunpack.c.l.b16 %v586
        %v1686 = vunpack.c.h.b16 %v586
        %v1687 = vunpack.c.l.b16 %v587
        %v1688 = vunpack.c.h.b16 %v587
        %v1689 = vunpack.c.l.b16 %v588
        %v1690 = vunpack.c.h.b16 %v588
        %v1691 = vunpack.c.l.b16 %v589
        %v1692 = vunpack.c.h.b16 %v589
        %v1693 = vunpack.c.l.b16 %v590
        %v1694 = vunpack.c.h.b16 %v590
        %v1695 = vunpack.c.l.b16 %v591
        %v1696 = vunpack.c.h.b16 %v591
        %v1697 = vunpack.c.l.b16 %v592
        %v1698 = vunpack.c.h.b16 %v592
        %v1699 = vunpack.c.l.b16 %v593
        %v1700 = vunpack.c.h.b16 %v593
        %v1701 = vunpack.c.l.b16 %v594
        %v1702 = vunpack.c.h.b16 %v594
        %v1703 = vunpack.c.l.b16 %v595
        %v1704 = vunpack.c.h.b16 %v595
        %v1705 = vunpack.c.l.b16 %v596
        %v1706 = vunpack.c.h.b16 %v596
        %v1707 = vunpack.c.l.b16 %v597
        %v1708 = vunpack.c.h.b16 %v597
        %v1709 = vunpack.c.l.b16 %v598
        %v1710 = vunpack.c.h.b16 %v598
        %v1711 = vunpack.c.l.b16 %v599
        %v1712 = vunpack.c.h.b16 %v599
        %v1713 = vunpack.c.l.b16 %v600
        %v1714 = vunpack.c.h.b16 %v600
        %v1715 = vunpack.c.l.b16 %v601
        %v1716 = vunpack.c.h.b16 %v601
        %v1717 = vunpack.c.l.b16 %v602
        %v1718 = vunpack.c.h.b16 %v602
        %v1719 = vunpack.c.l.b16 %v603
        %v1720 = vunpack.c.h.b16 %v603
        %v1721 = vunpack.c.l.b16 %v604
        %v1722 = vunpack.c.h.b16 %v604
        %v1723 = vunpack.c.l.b16 %v605
        %v1724 = vunpack.c.h.b16 %v605
        %v1725 = vunpack.c.l.b16 %v606
        %v1726 = vunpack.c.h.b16 %v606
        %v1727 = vunpack.c.l.b16 %v607
        %v1728 = vunpack.c.h.b16 %v607
        %v1729 = vunpack.c.l.b16 %v608
        %v1730 = vunpack.c.h.b16 %v608
        %v1731 = vunpack.c.l.b16 %v609
        %v1732 = vunpack.c.h.b16 %v609
        %v1733 = vunpack.c.l.b16 %v610
        %v1734 = vunpack.c.h.b16 %v610
        %v1735 = vunpack.c.l.b16 %v611
        %v1736 = vunpack.c.h.b16 %v611
        %v1737 = vunpack.c.l.b16 %v612
        %v1738 = vunpack.c.h.b16 %v612
        %v1739 = vunpack.c.l.b16 %v613
        %v1740 = vunpack.c.h.b16 %v613
        %v1741 = vunpack.c.l.b16 %v614
        %v1742 = vunpack.c.h.b16 %v614
        %v1743 = vunpack.c.l.b16 %v615
        %v1744 = vunpack.c.h.b16 %v615
        %v1745 = vunpack.c.l.b16 %v616
        %v1746 = vunpack.c.h.b16 %v616
        %v1747 = vunpack.c.l.b16 %v617
        %v1748 = vunpack.c.h.b16 %v617
        %v1749 = vunpack.c.l.b16 %v618
        %v1750 = vunpack.c.h.b16 %v618
        %v1751 = vunpack.c.l.b16 %v619
        %v1752 = vunpack.c.h.b16 %v619
        %v1753 = vunpack.c.l.b16 %v620
        %v1754 = vunpack.c.h.b16 %v620
        %v1755 = vunpack.c.l.b16 %v621
        %v1756 = vunpack.c.h.b16 %v621
        %v1757 = vunpack.c.l.b16 %v622
        %v1758 = vunpack.c.h.b16 %v622
        %v1759 = vunpack.c.l.b16 %v623
        %v1760 = vunpack.c.h.b16 %v623
        %v1761 = vunpack.c.l.b16 %v624
        %v1762 = vunpack.c.h.b16 %v624
        %v1763 = vunpack.c.l.b16 %v625
        %v1764 = vunpack.c.h.b16 %v625
        %v1765 = vunpack.c.l.b16 %v626
        %v1766 = vunpack.c.h.b16 %v626
        %v1767 = vunpack.c.l.b16 %v627
        %v1768 = vunpack.c.h.b16 %v627
        %v1769 = vunpack.c.l.b16 %v628
        %v1770 = vunpack.c.h.b16 %v628
        %v1771 = vunpack.c.l.b16 %v629
        %v1772 = vunpack.c.h.b16 %v629
        %v1773 = vunpack.c.l.b16 %v630
        %v1774 = vunpack.c.h.b16 %v630
        %v1775 = vunpack.c.l.b16 %v631
        %v1776 = vunpack.c.h.b16 %v631
        %v1777 = vunpack.c.l.b16 %v632
        %v1778 = vunpack.c.h.b16 %v632
        %v1779 = vunpack.c.l.b16 %v633
        %v1780 = vunpack.c.h.b16 %v633
        %v1781 = vunpack.c.l.b16 %v634
        %v1782 = vunpack.c.h.b16 %v634
        %v1783 = vunpack.c.l.b16 %v635
        %v1784 = vunpack.c.h.b16 %v635
        %v1785 = vunpack.c.l.b16 %v636
        %v1786 = vunpack.c.h.b16 %v636
        %v1787 = vunpack.c.l.b16 %v637
        %v1788 = vunpack.c.h.b16 %v637
        %v1789 = vunpack.c.l.b16 %v638
        %v1790 = vunpack.c.h.b16 %v638
        %v1791 = vunpack.c.l.b16 %v639
        %v1792 = vunpack.c.h.b16 %v639
        %v1793 = vunpack.c.l.b16 %v640
        %v1794 = vunpack.c.h.b16 %v640
        %v1795 = vunpack.c.l.b16 %v641
        %v1796 = vunpack.c.h.b16 %v641
        %v1797 = vunpack.c.l.b16 %v642
        %v1798 = vunpack.c.h.b16 %v642
        %v1799 = vunpack.c.l.b16 %v643
        %v1800 = vunpack.c.h.b16 %v643
        %v1801 = vunpack.c.l.b16 %v644
        %v1802 = vunpack.c.h.b16 %v644
        %v1803 = vunpack.c.l.b16 %v645
        %v1804 = vunpack.c.h.b16 %v645
        %v1805 = vunpack.c.l.b16 %v646
        %v1806 = vunpack.c.h.b16 %v646
        %v1807 = vunpack.c.l.b16 %v647
        %v1808 = vunpack.c.h.b16 %v647
        %v1809 = vunpack.c.l.b16 %v648
        %v1810 = vunpack.c.h.b16 %v648
        %v1811 = vunpack.c.l.b16 %v649
        %v1812 = vunpack.c.h.b16 %v649
        %v1813 = vunpack.c.l.b16 %v650
        %v1814 = vunpack.c.h.b16 %v650
        %v1815 = vunpack.c.l.b16 %v651
        %v1816 = vunpack.c.h.b16 %v651
        %v1817 = vunpack.c.l.b16 %v652
        %v1818 = vunpack.c.h.b16 %v652
        %v1819 = vunpack.c.l.b16 %v653
        %v1820 = vunpack.c.h.b16 %v653
        %v1821 = vunpack.c.l.b16 %v654
        %v1822 = vunpack.c.h.b16 %v654
        %v1823 = vunpack.c.l.b16 %v655
        %v1824 = vunpack.c.h.b16 %v655
        %v1825 = vunpack.c.l.b16 %v656
        %v1826 = vunpack.c.h.b16 %v656
        %v1827 = vunpack.c.l.b16 %v657
        %v1828 = vunpack.c.h.b16 %v657
        %v1829 = vunpack.c.l.b16 %v658
        %v1830 = vunpack.c.h.b16 %v658
        %v1831 = vunpack.c.l.b16 %v659
        %v1832 = vunpack.c.h.b16 %v659
        %v1833 = vunpack.c.l.b16 %v660
        %v1834 = vunpack.c.h.b16 %v660
        %v1835 = vunpack.c.l.b16 %v661
        %v1836 = vunpack.c.h.b16 %v661
        %v1837 = vunpack.c.l.b16 %v662
        %v1838 = vunpack.c.h.b16 %v662
        %v1839 = vunpack.c.l.b16 %v663
        %v1840 = vunpack.c.h.b16 %v663
        %v1841 = vunpack.c.l.b16 %v664
        %v1842 = vunpack.c.h.b16 %v664
        %v1843 = vunpack.c.l.b16 %v665
        %v1844 = vunpack.c.h.b16 %v665
        %v1845 = vunpack.c.l.b16 %v666
        %v1846 = vunpack.c.h.b16 %v666
        %v1847 = vunpack.c.l.b16 %v667
        %v1848 = vunpack.c.h.b16 %v667
        %v1849 = vunpack.c.l.b16 %v668
        %v1850 = vunpack.c.h.b16 %v668
        %v1851 = vunpack.c.l.b16 %v669
        %v1852 = vunpack.c.h.b16 %v669
        %v1853 = vunpack.c.l.b16 %v670
        %v1854 = vunpack.c.h.b16 %v670
        %v1855 = vunpack.c.l.b16 %v671
        %v1856 = vunpack.c.h.b16 %v671
        %v1857 = vunpack.c.l.b16 %v672
        %v1858 = vunpack.c.h.b16 %v672
        %v1859 = vunpack.c.l.b16 %v673
        %v1860 = vunpack.c.h.b16 %v673
        %v1861 = vunpack.c.l.b16 %v674
        %v1862 = vunpack.c.h.b16 %v674
        %v1863 = vunpack.c.l.b16 %v675
        %v1864 = vunpack.c.h.b16 %v675
        %v1865 = vunpack.c.l.b16 %v676
        %v1866 = vunpack.c.h.b16 %v676
        %v1867 = vunpack.c.l.b16 %v677
        %v1868 = vunpack.c.h.b16 %v677
        %v1869 = vunpack.c.l.b16 %v678
        %v1870 = vunpack.c.h.b16 %v678
        %v1871 = vunpack.c.l.b16 %v679
        %v1872 = vunpack.c.h.b16 %v679
        %v1873 = vunpack.c.l.b16 %v680
        %v1874 = vunpack.c.h.b16 %v680
        %v1875 = vunpack.c.l.b16 %v681
        %v1876 = vunpack.c.h.b16 %v681
        %v1877 = vunpack.c.l.b16 %v682
        %v1878 = vunpack.c.h.b16 %v682
        %v1879 = vunpack.c.l.b16 %v683
        %v1880 = vunpack.c.h.b16 %v683
        %v1881 = vunpack.c.l.b16 %v684
        %v1882 = vunpack.c.h.b16 %v684
        %v1883 = vunpack.c.l.b16 %v685
        %v1884 = vunpack.c.h.b16 %v685
        %v1885 = vunpack.c.l.b16 %v686
        %v1886 = vunpack.c.h.b16 %v686
        %v1887 = vunpack.c.l.b16 %v687
        %v1888 = vunpack.c.h.b16 %v687
        %v1889 = vunpack.c.l.b16 %v688
        %v1890 = vunpack.c.h.b16 %v688
        %v1891 = vunpack.c.l.b16 %v689
        %v1892 = vunpack.c.h.b16 %v689
        %v1893 = vunpack.c.l.b16 %v690
        %v1894 = vunpack.c.h.b16 %v690
        %v1895 = vunpack.c.l.b16 %v691
        %v1896 = vunpack.c.h.b16 %v691
        %v1897 = vunpack.c.l.b16 %v692
        %v1898 = vunpack.c.h.b16 %v692
        %v1899 = vunpack.c.l.b16 %v693
        %v1900 = vunpack.c.h.b16 %v693
        %v1901 = vunpack.c.l.b16 %v694
        %v1902 = vunpack.c.h.b16 %v694
        %v1903 = vunpack.c.l.b16 %v695
        %v1904 = vunpack.c.h.b16 %v695
        %v1905 = vunpack.c.l.b16 %v696
        %v1906 = vunpack.c.h.b16 %v696
        %v1907 = vunpack.c.l.b16 %v697
        %v1908 = vunpack.c.h.b16 %v697
        %v1909 = vunpack.c.l.b16 %v698
        %v1910 = vunpack.c.h.b16 %v698
        %v1911 = vunpack.c.l.b16 %v699
        %v1912 = vunpack.c.h.b16 %v699
        %v1913 = vunpack.c.l.b16 %v700
        %v1914 = vunpack.c.h.b16 %v700
        %v1915 = vunpack.c.l.b16 %v701
        %v1916 = vunpack.c.h.b16 %v701
        %v1917 = vunpack.c.l.b16 %v702
        %v1918 = vunpack.c.h.b16 %v702
        %v1919 = vpack.c.b16 %v1163, %v1151
        %v1920 = vpack.c.b16 %v1164, %v1152
        %v1921 = vpack.c.b16 %v1165, %v1153
        %v1922 = vpack.c.b16 %v1166, %v1154
        %v1923 = vpack.c.b16 %v1167, %v1155
        %v1924 = vpack.c.b16 %v1168, %v1156
        %v1925 = vpack.c.b16 %v1169, %v1157
        %v1926 = vpack.c.b16 %v1170, %v1158
        %v1927 = vpack.c.b16 %v1171, %v1159
        %v1928 = vpack.c.b16 %v1172, %v1160
        %v1929 = vpack.c.b16 %v1173, %v1161
        %v1930 = vpack.c.b16 %v1174, %v1162
        %v1931 = vpack.c.b16 %v1187, %v1175
        %v1932 = vpack.c.b16 %v1188, %v1176
        %v1933 = vpack.c.b16 %v1189, %v1177
        %v1934 = vpack.c.b16 %v1190, %v1178
        %v1935 = vpack.c.b16 %v1191, %v1179
        %v1936 = vpack.c.b16 %v1192, %v1180
        %v1937 = vpack.c.b16 %v1193, %v1181
        %v1938 = vpack.c.b16 %v1194, %v1182
        %v1939 = vpack.c.b16 %v1195, %v1183
        %v1940 = vpack.c.b16 %v1196, %v1184
        %v1941 = vpack.c.b16 %v1197, %v1185
        %v1942 = vpack.c.b16 %v1198, %v1186
        %v1943 = vpack.c.b16 %v1211, %v1199
        %v1944 = vpack.c.b16 %v1212, %v1200
        %v1945 = vpack.c.b16 %v1213, %v1201
        %v1946 = vpack.c.b16 %v1214, %v1202
        %v1947 = vpack.c.b16 %v1215, %v1203
        %v1948 = vpack.c.b16 %v1216, %v1204
        %v1949 = vpack.c.b16 %v1217, %v1205
        %v1950 = vpack.c.b16 %v1218, %v1206
        %v1951 = vpack.c.b16 %v1219, %v1207
        %v1952 = vpack.c.b16 %v1220, %v1208
        %v1953 = vpack.c.b16 %v1221, %v1209
        %v1954 = vpack.c.b16 %v1222, %v1210
        %v1955 = vpack.c.b16 %v1235, %v1223
        %v1956 = vpack.c.b16 %v1236, %v1224
        %v1957 = vpack.c.b16 %v1237, %v1225
        %v1958 = vpack.c.b16 %v1238, %v1226
        %v1959 = vpack.c.b16 %v1239, %v1227
        %v1960 = vpack.c.b16 %v1240, %v1228
        %v1961 = vpack.c.b16 %v1241, %v1229
        %v1962 = vpack.c.b16 %v1242, %v1230
        %v1963 = vpack.c.b16 %v1243, %v1231
        %v1964 = vpack.c.b16 %v1244, %v1232
        %v1965 = vpack.c.b16 %v1245, %v1233
        %v1966 = vpack.c.b16 %v1246, %v1234
        %v1967 = vpack.c.b16 %v1259, %v1247
        %v1968 = vpack.c.b16 %v1260, %v1248
        %v1969 = vpack.c.b16 %v1261, %v1249
        %v1970 = vpack.c.b16 %v1262, %v1250
        %v1971 = vpack.c.b16 %v1263, %v1251
        %v1972 = vpack.c.b16 %v1264, %v1252
        %v1973 = vpack.c.b16 %v1265, %v1253
        %v1974 = vpack.c.b16 %v1266, %v1254
        %v1975 = vpack.c.b16 %v1267, %v1255
        %v1976 = vpack.c.b16 %v1268, %v1256
        %v1977 = vpack.c.b16 %v1269, %v1257
        %v1978 = vpack.c.b16 %v1270, %v1258
        %v1979 = vpack.c.b16 %v1283, %v1271
        %v1980 = vpack.c.b16 %v1284, %v1272
        %v1981 = vpack.c.b16 %v1285, %v1273
        %v1982 = vpack.c.b16 %v1286, %v1274
        %v1983 = vpack.c.b16 %v1287, %v1275
        %v1984 = vpack.c.b16 %v1288, %v1276
        %v1985 = vpack.c.b16 %v1289, %v1277
        %v1986 = vpack.c.b16 %v1290, %v1278
        %v1987 = vpack.c.b16 %v1291, %v1279
        %v1988 = vpack.c.b16 %v1292, %v1280
        %v1989 = vpack.c.b16 %v1293, %v1281
        %v1990 = vpack.c.b16 %v1294, %v1282
        %v1991 = vpack.c.b16 %v1307, %v1295
        %v1992 = vpack.c.b16 %v1308, %v1296
        %v1993 = vpack.c.b16 %v1309, %v1297
        %v1994 = vpack.c.b16 %v1310, %v1298
        %v1995 = vpack.c.b16 %v1311, %v1299
        %v1996 = vpack.c.b16 %v1312, %v1300
        %v1997 = vpack.c.b16 %v1313, %v1301
        %v1998 = vpack.c.b16 %v1314, %v1302
        %v1999 = vpack.c.b16 %v1315, %v1303
        %v2000 = vpack.c.b16 %v1316, %v1304
        %v2001 = vpack.c.b16 %v1317, %v1305
        %v2002 = vpack.c.b16 %v1318, %v1306
        %v2003 = vpack.c.b16 %v1331, %v1319
        %v2004 = vpack.c.b16 %v1332, %v1320
        %v2005 = vpack.c.b16 %v1333, %v1321
        %v2006 = vpack.c.b16 %v1334, %v1322
        %v2007 = vpack.c.b16 %v1335, %v1323
        %v2008 = vpack.c.b16 %v1336, %v1324
        %v2009 = vpack.c.b16 %v1337, %v1325
        %v2010 = vpack.c.b16 %v1338, %v1326
        %v2011 = vpack.c.b16 %v1339, %v1327
        %v2012 = vpack.c.b16 %v1340, %v1328
        %v2013 = vpack.c.b16 %v1341, %v1329
        %v2014 = vpack.c.b16 %v1342, %v1330
        %v2015 = vpack.c.b16 %v1355, %v1343
        %v2016 = vpack.c.b16 %v1356, %v1344
        %v2017 = vpack.c.b16 %v1357, %v1345
        %v2018 = vpack.c.b16 %v1358, %v1346
        %v2019 = vpack.c.b16 %v1359, %v1347
        %v2020 = vpack.c.b16 %v1360, %v1348
        %v2021 = vpack.c.b16 %v1361, %v1349
        %v2022 = vpack.c.b16 %v1362, %v1350
        %v2023 = vpack.c.b16 %v1363, %v1351
        %v2024 = vpack.c.b16 %v1364, %v1352
        %v2025 = vpack.c.b16 %v1365, %v1353
        %v2026 = vpack.c.b16 %v1366, %v1354
        %v2027 = vpack.c.b16 %v1379, %v1367
        %v2028 = vpack.c.b16 %v1380, %v1368
        %v2029 = vpack.c.b16 %v1381, %v1369
        %v2030 = vpack.c.b16 %v1382, %v1370
        %v2031 = vpack.c.b16 %v1383, %v1371
        %v2032 = vpack.c.b16 %v1384, %v1372
        %v2033 = vpack.c.b16 %v1385, %v1373
        %v2034 = vpack.c.b16 %v1386, %v1374
        %v2035 = vpack.c.b16 %v1387, %v1375
        %v2036 = vpack.c.b16 %v1388, %v1376
        %v2037 = vpack.c.b16 %v1389, %v1377
        %v2038 = vpack.c.b16 %v1390, %v1378
        %v2039 = vpack.c.b16 %v1403, %v1391
        %v2040 = vpack.c.b16 %v1404, %v1392
        %v2041 = vpack.c.b16 %v1405, %v1393
        %v2042 = vpack.c.b16 %v1406, %v1394
        %v2043 = vpack.c.b16 %v1407, %v1395
        %v2044 = vpack.c.b16 %v1408, %v1396
        %v2045 = vpack.c.b16 %v1409, %v1397
        %v2046 = vpack.c.b16 %v1410, %v1398
        %v2047 = vpack.c.b16 %v1411, %v1399
        %v2048 = vpack.c.b16 %v1412, %v1400
        %v2049 = vpack.c.b16 %v1413, %v1401
        %v2050 = vpack.c.b16 %v1414, %v1402
        %v2051 = vpack.c.b16 %v1427, %v1415
        %v2052 = vpack.c.b16 %v1428, %v1416
        %v2053 = vpack.c.b16 %v1429, %v1417
        %v2054 = vpack.c.b16 %v1430, %v1418
        %v2055 = vpack.c.b16 %v1431, %v1419
        %v2056 = vpack.c.b16 %v1432, %v1420
        %v2057 = vpack.c.b16 %v1433, %v1421
        %v2058 = vpack.c.b16 %v1434, %v1422
        %v2059 = vpack.c.b16 %v1435, %v1423
        %v2060 = vpack.c.b16 %v1436, %v1424
        %v2061 = vpack.c.b16 %v1437, %v1425
        %v2062 = vpack.c.b16 %v1438, %v1426
        %v2063 = vpack.c.b16 %v1451, %v1439
        %v2064 = vpack.c.b16 %v1452, %v1440
        %v2065 = vpack.c.b16 %v1453, %v1441
        %v2066 = vpack.c.b16 %v1454, %v1442
        %v2067 = vpack.c.b16 %v1455, %v1443
        %v2068 = vpack.c.b16 %v1456, %v1444
        %v2069 = vpack.c.b16 %v1457, %v1445
        %v2070 = vpack.c.b16 %v1458, %v1446
        %v2071 = vpack.c.b16 %v1459, %v1447
        %v2072 = vpack.c.b16 %v1460, %v1448
        %v2073 = vpack.c.b16 %v1461, %v1449
        %v2074 = vpack.c.b16 %v1462, %v1450
        %v2075 = vpack.c.b16 %v1475, %v1463
        %v2076 = vpack.c.b16 %v1476, %v1464
        %v2077 = vpack.c.b16 %v1477, %v1465
        %v2078 = vpack.c.b16 %v1478, %v1466
        %v2079 = vpack.c.b16 %v1479, %v1467
        %v2080 = vpack.c.b16 %v1480, %v1468
        %v2081 = vpack.c.b16 %v1481, %v1469
        %v2082 = vpack.c.b16 %v1482, %v1470
        %v2083 = vpack.c.b16 %v1483, %v1471
        %v2084 = vpack.c.b16 %v1484, %v1472
        %v2085 = vpack.c.b16 %v1485, %v1473
        %v2086 = vpack.c.b16 %v1486, %v1474
        %v2087 = vpack.c.b16 %v1499, %v1487
        %v2088 = vpack.c.b16 %v1500, %v1488
        %v2089 = vpack.c.b16 %v1501, %v1489
        %v2090 = vpack.c.b16 %v1502, %v1490
        %v2091 = vpack.c.b16 %v1503, %v1491
        %v2092 = vpack.c.b16 %v1504, %v1492
        %v2093 = vpack.c.b16 %v1505, %v1493
        %v2094 = vpack.c.b16 %v1506, %v1494
        %v2095 = vpack.c.b16 %v1507, %v1495
        %v2096 = vpack.c.b16 %v1508, %v1496
        %v2097 = vpack.c.b16 %v1509, %v1497
        %v2098 = vpack.c.b16 %v1510, %v1498
        %v2099 = vpack.c.b16 %v1523, %v1511
        %v2100 = vpack.c.b16 %v1524, %v1512
        %v2101 = vpack.c.b16 %v1525, %v1513
        %v2102 = vpack.c.b16 %v1526, %v1514
        %v2103 = vpack.c.b16 %v1527, %v1515
        %v2104 = vpack.c.b16 %v1528, %v1516
        %v2105 = vpack.c.b16 %v1529, %v1517
        %v2106 = vpack.c.b16 %v1530, %v1518
        %v2107 = vpack.c.b16 %v1531, %v1519
        %v2108 = vpack.c.b16 %v1532, %v1520
        %v2109 = vpack.c.b16 %v1533, %v1521
        %v2110 = vpack.c.b16 %v1534, %v1522
        %v2111 = vpack.c.b16 %v1547, %v1535
        %v2112 = vpack.c.b16 %v1548, %v1536
        %v2113 = vpack.c.b16 %v1549, %v1537
        %v2114 = vpack.c.b16 %v1550, %v1538
        %v2115 = vpack.c.b16 %v1551, %v1539
        %v2116 = vpack.c.b16 %v1552, %v1540
        %v2117 = vpack.c.b16 %v1553, %v1541
        %v2118 = vpack.c.b16 %v1554, %v1542
        %v2119 = vpack.c.b16 %v1555, %v1543
        %v2120 = vpack.c.b16 %v1556, %v1544
        %v2121 = vpack.c.b16 %v1557, %v1545
        %v2122 = vpack.c.b16 %v1558, %v1546
        %v2123 = vpack.c.b16 %v1571, %v1559
        %v2124 = vpack.c.b16 %v1572, %v1560
        %v2125 = vpack.c.b16 %v1573, %v1561
        %v2126 = vpack.c.b16 %v1574, %v1562
        %v2127 = vpack.c.b16 %v1575, %v1563
        %v2128 = vpack.c.b16 %v1576, %v1564
        %v2129 = vpack.c.b16 %v1577, %v1565
        %v2130 = vpack.c.b16 %v1578, %v1566
        %v2131 = vpack.c.b16 %v1579, %v1567
        %v2132 = vpack.c.b16 %v1580, %v1568
        %v2133 = vpack.c.b16 %v1581, %v1569
        %v2134 = vpack.c.b16 %v1582, %v1570
        %v2135 = vpack.c.b16 %v1595, %v1583
        %v2136 = vpack.c.b16 %v1596, %v1584
        %v2137 = vpack.c.b16 %v1597, %v1585
        %v2138 = vpack.c.b16 %v1598, %v1586
        %v2139 = vpack.c.b16 %v1599, %v1587
        %v2140 = vpack.c.b16 %v1600, %v1588
        %v2141 = vpack.c.b16 %v1601, %v1589
        %v2142 = vpack.c.b16 %v1602, %v1590
        %v2143 = vpack.c.b16 %v1603, %v1591
        %v2144 = vpack.c.b16 %v1604, %v1592
        %v2145 = vpack.c.b16 %v1605, %v1593
        %v2146 = vpack.c.b16 %v1606, %v1594
        %v2147 = vpack.c.b16 %v1619, %v1607
        %v2148 = vpack.c.b16 %v1620, %v1608
        %v2149 = vpack.c.b16 %v1621, %v1609
        %v2150 = vpack.c.b16 %v1622, %v1610
        %v2151 = vpack.c.b16 %v1623, %v1611
        %v2152 = vpack.c.b16 %v1624, %v1612
        %v2153 = vpack.c.b16 %v1625, %v1613
        %v2154 = vpack.c.b16 %v1626, %v1614
        %v2155 = vpack.c.b16 %v1627, %v1615
        %v2156 = vpack.c.b16 %v1628, %v1616
        %v2157 = vpack.c.b16 %v1629, %v1617
        %v2158 = vpack.c.b16 %v1630, %v1618
        %v2159 = vpack.c.b16 %v1643, %v1631
        %v2160 = vpack.c.b16 %v1644, %v1632
        %v2161 = vpack.c.b16 %v1645, %v1633
        %v2162 = vpack.c.b16 %v1646, %v1634
        %v2163 = vpack.c.b16 %v1647, %v1635
        %v2164 = vpack.c.b16 %v1648, %v1636
        %v2165 = vpack.c.b16 %v1649, %v1637
        %v2166 = vpack.c.b16 %v1650, %v1638
        %v2167 = vpack.c.b16 %v1651, %v1639
        %v2168 = vpack.c.b16 %v1652, %v1640
        %v2169 = vpack.c.b16 %v1653, %v1641
        %v2170 = vpack.c.b16 %v1654, %v1642
        %v2171 = vpack.c.b16 %v1667, %v1655
        %v2172 = vpack.c.b16 %v1668, %v1656
        %v2173 = vpack.c.b16 %v1669, %v1657
        %v2174 = vpack.c.b16 %v1670, %v1658
        %v2175 = vpack.c.b16 %v1671, %v1659
        %v2176 = vpack.c.b16 %v1672, %v1660
        %v2177 = vpack.c.b16 %v1673, %v1661
        %v2178 = vpack.c.b16 %v1674, %v1662
        %v2179 = vpack.c.b16 %v1675, %v1663
        %v2180 = vpack.c.b16 %v1676, %v1664
        %v2181 = vpack.c.b16 %v1677, %v1665
        %v2182 = vpack.c.b16 %v1678, %v1666
        %v2183 = vpack.c.b16 %v1691, %v1679
        %v2184 = vpack.c.b16 %v1692, %v1680
        %v2185 = vpack.c.b16 %v1693, %v1681
        %v2186 = vpack.c.b16 %v1694, %v1682
        %v2187 = vpack.c.b16 %v1695, %v1683
        %v2188 = vpack.c.b16 %v1696, %v1684
        %v2189 = vpack.c.b16 %v1697, %v1685
        %v2190 = vpack.c.b16 %v1698, %v1686
        %v2191 = vpack.c.b16 %v1699, %v1687
        %v2192 = vpack.c.b16 %v1700, %v1688
        %v2193 = vpack.c.b16 %v1701, %v1689
        %v2194 = vpack.c.b16 %v1702, %v1690
        %v2195 = vpack.c.b16 %v1715, %v1703
        %v2196 = vpack.c.b16 %v1716, %v1704
        %v2197 = vpack.c.b16 %v1717, %v1705
        %v2198 = vpack.c.b16 %v1718, %v1706
        %v2199 = vpack.c.b16 %v1719, %v1707
        %v2200 = vpack.c.b16 %v1720, %v1708
        %v2201 = vpack.c.b16 %v1721, %v1709
        %v2202 = vpack.c.b16 %v1722, %v1710
        %v2203 = vpack.c.b16 %v1723, %v1711
        %v2204 = vpack.c.b16 %v1724, %v1712
        %v2205 = vpack.c.b16 %v1725, %v1713
        %v2206 = vpack.c.b16 %v1726, %v1714
        %v2207 = vpack.c.b16 %v1739, %v1727
        %v2208 = vpack.c.b16 %v1740, %v1728
        %v2209 = vpack.c.b16 %v1741, %v1729
        %v2210 = vpack.c.b16 %v1742, %v1730
        %v2211 = vpack.c.b16 %v1743, %v1731
        %v2212 = vpack.c.b16 %v1744, %v1732
        %v2213 = vpack.c.b16 %v1745, %v1733
        %v2214 = vpack.c.b16 %v1746, %v1734
        %v2215 = vpack.c.b16 %v1747, %v1735
        %v2216 = vpack.c.b16 %v1748, %v1736
        %v2217 = vpack.c.b16 %v1749, %v1737
        %v2218 = vpack.c.b16 %v1750, %v1738
        %v2219 = vpack.c.b16 %v1763, %v1751
        %v2220 = vpack.c.b16 %v1764, %v1752
        %v2221 = vpack.c.b16 %v1765, %v1753
        %v2222 = vpack.c.b16 %v1766, %v1754
        %v2223 = vpack.c.b16 %v1767, %v1755
        %v2224 = vpack.c.b16 %v1768, %v1756
        %v2225 = vpack.c.b16 %v1769, %v1757
        %v2226 = vpack.c.b16 %v1770, %v1758
        %v2227 = vpack.c.b16 %v1771, %v1759
        %v2228 = vpack.c.b16 %v1772, %v1760
        %v2229 = vpack.c.b16 %v1773, %v1761
        %v2230 = vpack.c.b16 %v1774, %v1762
        %v2231 = vpack.c.b16 %v1787, %v1775
        %v2232 = vpack.c.b16 %v1788, %v1776
        %v2233 = vpack.c.b16 %v1789, %v1777
        %v2234 = vpack.c.b16 %v1790, %v1778
        %v2235 = vpack.c.b16 %v1791, %v1779
        %v2236 = vpack.c.b16 %v1792, %v1780
        %v2237 = vpack.c.b16 %v1793, %v1781
        %v2238 = vpack.c.b16 %v1794, %v1782
        %v2239 = vpack.c.b16 %v1795, %v1783
        %v2240 = vpack.c.b16 %v1796, %v1784
        %v2241 = vpack.c.b16 %v1797, %v1785
        %v2242 = vpack.c.b16 %v1798, %v1786
        %v2243 = vpack.c.b16 %v1811, %v1799
        %v2244 = vpack.c.b16 %v1812, %v1800
        %v2245 = vpack.c.b16 %v1813, %v1801
        %v2246 = vpack.c.b16 %v1814, %v1802
        %v2247 = vpack.c.b16 %v1815, %v1803
        %v2248 = vpack.c.b16 %v1816, %v1804
        %v2249 = vpack.c.b16 %v1817, %v1805
        %v2250 = vpack.c.b16 %v1818, %v1806
        %v2251 = vpack.c.b16 %v1819, %v1807
        %v2252 = vpack.c.b16 %v1820, %v1808
        %v2253 = vpack.c.b16 %v1821, %v1809
        %v2254 = vpack.c.b16 %v1822, %v1810
        %v2255 = vpack.c.b16 %v1835, %v1823
        %v2256 = vpack.c.b16 %v1836, %v1824
        %v2257 = vpack.c.b16 %v1837, %v1825
        %v2258 = vpack.c.b16 %v1838, %v1826
        %v2259 = vpack.c.b16 %v1839, %v1827
        %v2260 = vpack.c.b16 %v1840, %v1828
        %v2261 = vpack.c.b16 %v1841, %v1829
        %v2262 = vpack.c.b16 %v1842, %v1830
        %v2263 = vpack.c.b16 %v1843, %v1831
        %v2264 = vpack.c.b16 %v1844, %v1832
        %v2265 = vpack.c.b16 %v1845, %v1833
        %v2266 = vpack.c.b16 %v1846, %v1834
        %v2267 = vpack.c.b16 %v1859, %v1847
        %v2268 = vpack.c.b16 %v1860, %v1848
        %v2269 = vpack.c.b16 %v1861, %v1849
        %v2270 = vpack.c.b16 %v1862, %v1850
        %v2271 = vpack.c.b16 %v1863, %v1851
        %v2272 = vpack.c.b16 %v1864, %v1852
        %v2273 = vpack.c.b16 %v1865, %v1853
        %v2274 = vpack.c.b16 %v1866, %v1854
        %v2275 = vpack.c.b16 %v1867, %v1855
        %v2276 = vpack.c.b16 %v1868, %v1856
        %v2277 = vpack.c.b16 %v1869, %v1857
        %v2278 = vpack.c.b16 %v1870, %v1858
        %v2279 = vpack.c.b16 %v1883, %v1871
        %v2280 = vpack.c.b16 %v1884, %v1872
        %v2281 = vpack.c.b16 %v1885, %v1873
        %v2282 = vpack.c.b16 %v1886, %v1874
        %v2283 = vpack.c.b16 %v1887, %v1875
        %v2284 = vpack.c.b16 %v1888, %v1876
        %v2285 = vpack.c.b16 %v1889, %v1877
        %v2286 = vpack.c.b16 %v1890, %v1878
        %v2287 = vpack.c.b16 %v1891, %v1879
        %v2288 = vpack.c.b16 %v1892, %v1880
        %v2289 = vpack.c.b16 %v1893, %v1881
        %v2290 = vpack.c.b16 %v1894, %v1882
        %v2291 = vpack.c.b16 %v1907, %v1895
        %v2292 = vpack.c.b16 %v1908, %v1896
        %v2293 = vpack.c.b16 %v1909, %v1897
        %v2294 = vpack.c.b16 %v1910, %v1898
        %v2295 = vpack.c.b16 %v1911, %v1899
        %v2296 = vpack.c.b16 %v1912, %v1900
        %v2297 = vpack.c.b16 %v1913, %v1901
        %v2298 = vpack.c.b16 %v1914, %v1902
        %v2299 = vpack.c.b16 %v1915, %v1903
        %v2300 = vpack.c.b16 %v1916, %v1904
        %v2301 = vpack.c.b16 %v1917, %v1905
        %v2302 = vpack.c.b16 %v1918, %v1906
        %2687 = vmatprep.subr.bf16.mxu0 %v2004
        %2688 = vmatpush1.bf16.msra.mxu0 %v2003
        %2689 = vmatprep.subr.bf16.mxu0 %v1992
        %2690 = vmatpush1.bf16.msra.mxu0 %v1991
        %2691 = vmatprep.subr.bf16.mxu0 %v1980
        %2692 = vmatpush1.bf16.msra.mxu0 %v1979
        %2693 = vmatprep.subr.bf16.mxu0 %v1968
        %2694 = vmatpush1.bf16.msra.mxu0 %v1967
        %2695 = vmatprep.subr.bf16.mxu0 %v1956
        %2696 = vmatpush1.bf16.msra.mxu0 %v1955
        %2697 = vmatprep.subr.bf16.mxu0 %v1944
        %2698 = vmatpush1.bf16.msra.mxu0 %v1943
        %2699 = vmatprep.subr.bf16.mxu0 %v1932
        %2700 = vmatpush1.bf16.msra.mxu0 %v1931
        %2701 = vmatprep.subr.bf16.mxu0 %v1920
        %2702 = vmatpush1.bf16.msra.mxu0 %v1919
        %2703 = vmatprep.subr.bf16.mxu0 %v2100
        %2704 = vmatpush2.bf16.msra.mxu0 %v2099
        %2705 = vmatprep.subr.bf16.mxu0 %v2088
        %2706 = vmatpush2.bf16.msra.mxu0 %v2087
        %2707 = vmatprep.subr.bf16.mxu0 %v2076
        %2708 = vmatpush2.bf16.msra.mxu0 %v2075
        %2709 = vmatprep.subr.bf16.mxu0 %v2064
        %2710 = vmatpush2.bf16.msra.mxu0 %v2063
        %2711 = vmatprep.subr.bf16.mxu0 %v2052
        %2712 = vmatpush2.bf16.msra.mxu0 %v2051
        %2713 = vmatprep.subr.bf16.mxu0 %v2040
        %2714 = vmatpush2.bf16.msra.mxu0 %v2039
        %2715 = vmatprep.subr.bf16.mxu0 %v2028
        %2716 = vmatpush2.bf16.msra.mxu0 %v2027
        %2717 = vmatprep.subr.bf16.mxu0 %v2016
        %2718 = vmatpush2.bf16.msra.mxu0 %v2015
        %2719 = vmatprep.mubr.bf16.mxu0 %v288
        %2720 = vmatmul.mubr.bf16.gmra.mxu0 %v287
        %v2721 = vpop.f32.mrf.mxu0
        %v2722 = vadd.f32 %v710, %v2721
        %v2723 = vpop.f32.mrf.mxu0
        %v2724 = vadd.f32 %v714, %v2723
        %v2725 = vpop.f32.mrf.mxu0
        %v2726 = vadd.f32 %v710, %v2725
        %v2727 = vpop.f32.mrf.mxu0
        %v2728 = vadd.f32 %v714, %v2727
        %2729 = vmatprep.mubr.bf16.mxu0 %v292
        %2730 = vmatmul.mubr.bf16.gmra.mxu0 %v291
        %v2731 = vpop.f32.mrf.mxu0
        %v2732 = vadd.f32 %v710, %v2731
        %v2733 = vpop.f32.mrf.mxu0
        %v2734 = vadd.f32 %v714, %v2733
        %v2735 = vpop.f32.mrf.mxu0
        %v2736 = vadd.f32 %v710, %v2735
        %v2737 = vpop.f32.mrf.mxu0
        %v2738 = vadd.f32 %v714, %v2737
        %2739 = vmatprep.mubr.bf16.mxu0 %v296
        %2740 = vmatmul.mubr.bf16.gmra.mxu0 %v295
        %v2741 = vpop.f32.mrf.mxu0
        %v2742 = vadd.f32 %v710, %v2741
        %v2743 = vpop.f32.mrf.mxu0
        %v2744 = vadd.f32 %v714, %v2743
        %v2745 = vpop.f32.mrf.mxu0
        %v2746 = vadd.f32 %v710, %v2745
        %v2747 = vpop.f32.mrf.mxu0
        %v2748 = vadd.f32 %v714, %v2747
        %2749 = vmatprep.mubr.bf16.mxu0 %v300
        %2750 = vmatmul.mubr.bf16.gmra.mxu0 %v299
        %v2751 = vpop.f32.mrf.mxu0
        %v2752 = vadd.f32 %v710, %v2751
        %v2753 = vpop.f32.mrf.mxu0
        %v2754 = vadd.f32 %v714, %v2753
        %v2755 = vpop.f32.mrf.mxu0
        %v2756 = vadd.f32 %v710, %v2755
        %v2757 = vpop.f32.mrf.mxu0
        %v2758 = vadd.f32 %v714, %v2757
        %2759 = vmatprep.mubr.bf16.mxu0 %v304
        %2760 = vmatmul.mubr.bf16.gmra.mxu0 %v303
        %v2761 = vpop.f32.mrf.mxu0
        %v2762 = vadd.f32 %v710, %v2761
        %v2763 = vpop.f32.mrf.mxu0
        %v2764 = vadd.f32 %v714, %v2763
        %v2765 = vpop.f32.mrf.mxu0
        %v2766 = vadd.f32 %v710, %v2765
        %v2767 = vpop.f32.mrf.mxu0
        %v2768 = vadd.f32 %v714, %v2767
        %2769 = vmatprep.mubr.bf16.mxu0 %v308
        %2770 = vmatmul.mubr.bf16.gmra.mxu0 %v307
        %v2771 = vpop.f32.mrf.mxu0
        %v2772 = vadd.f32 %v710, %v2771
        %v2773 = vpop.f32.mrf.mxu0
        %v2774 = vadd.f32 %v714, %v2773
        %v2775 = vpop.f32.mrf.mxu0
        %v2776 = vadd.f32 %v710, %v2775
        %v2777 = vpop.f32.mrf.mxu0
        %v2778 = vadd.f32 %v714, %v2777
        %2779 = vmatprep.mubr.bf16.mxu0 %v312
        %2780 = vmatmul.mubr.bf16.gmra.mxu0 %v311
        %v2781 = vpop.f32.mrf.mxu0
        %v2782 = vadd.f32 %v710, %v2781
        %v2783 = vpop.f32.mrf.mxu0
        %v2784 = vadd.f32 %v714, %v2783
        %v2785 = vpop.f32.mrf.mxu0
        %v2786 = vadd.f32 %v710, %v2785
        %v2787 = vpop.f32.mrf.mxu0
        %v2788 = vadd.f32 %v714, %v2787
        %2789 = vmatprep.mubr.bf16.mxu0 %v316
        %2790 = vmatmul.mubr.bf16.gmra.mxu0 %v315
        %v2791 = vpop.f32.mrf.mxu0
        %v2792 = vadd.f32 %v710, %v2791
        %v2793 = vpop.f32.mrf.mxu0
        %v2794 = vadd.f32 %v714, %v2793
        %v2795 = vpop.f32.mrf.mxu0
        %v2796 = vadd.f32 %v710, %v2795
        %v2797 = vpop.f32.mrf.mxu0
        %v2798 = vadd.f32 %v714, %v2797
        %2799 = vdwg.mxu0
        %2800 = vmatprep.subr.bf16.mxu0 %v2196
        %2801 = vmatpush1.bf16.msra.mxu0 %v2195
        %2802 = vmatprep.subr.bf16.mxu0 %v2184
        %2803 = vmatpush1.bf16.msra.mxu0 %v2183
        %2804 = vmatprep.subr.bf16.mxu0 %v2172
        %2805 = vmatpush1.bf16.msra.mxu0 %v2171
        %2806 = vmatprep.subr.bf16.mxu0 %v2160
        %2807 = vmatpush1.bf16.msra.mxu0 %v2159
        %2808 = vmatprep.subr.bf16.mxu0 %v2148
        %2809 = vmatpush1.bf16.msra.mxu0 %v2147
        %2810 = vmatprep.subr.bf16.mxu0 %v2136
        %2811 = vmatpush1.bf16.msra.mxu0 %v2135
        %2812 = vmatprep.subr.bf16.mxu0 %v2124
        %2813 = vmatpush1.bf16.msra.mxu0 %v2123
        %2814 = vmatprep.subr.bf16.mxu0 %v2112
        %2815 = vmatpush1.bf16.msra.mxu0 %v2111
        %2816 = vmatprep.subr.bf16.mxu0 %v2292
        %2817 = vmatpush2.bf16.msra.mxu0 %v2291
        %2818 = vmatprep.subr.bf16.mxu0 %v2280
        %2819 = vmatpush2.bf16.msra.mxu0 %v2279
        %2820 = vmatprep.subr.bf16.mxu0 %v2268
        %2821 = vmatpush2.bf16.msra.mxu0 %v2267
        %2822 = vmatprep.subr.bf16.mxu0 %v2256
        %2823 = vmatpush2.bf16.msra.mxu0 %v2255
        %2824 = vmatprep.subr.bf16.mxu0 %v2244
        %2825 = vmatpush2.bf16.msra.mxu0 %v2243
        %2826 = vmatprep.subr.bf16.mxu0 %v2232
        %2827 = vmatpush2.bf16.msra.mxu0 %v2231
        %2828 = vmatprep.subr.bf16.mxu0 %v2220
        %2829 = vmatpush2.bf16.msra.mxu0 %v2219
        %2830 = vmatprep.subr.bf16.mxu0 %v2208
        %2831 = vmatpush2.bf16.msra.mxu0 %v2207
        %2832 = vmatprep.mubr.bf16.mxu0 %v290
        %2833 = vmatmul.mubr.bf16.gmra.mxu0 %v289
        %v2834 = vpop.f32.mrf.mxu0
        %v2835 = vadd.f32 %v2722, %v2834
        %v2836 = vpop.f32.mrf.mxu0
        %v2837 = vadd.f32 %v2724, %v2836
        %v2838 = vpop.f32.mrf.mxu0
        %v2839 = vadd.f32 %v2726, %v2838
        %v2840 = vpop.f32.mrf.mxu0
        %v2841 = vadd.f32 %v2728, %v2840
        %2842 = vmatprep.mubr.bf16.mxu0 %v294
        %2843 = vmatmul.mubr.bf16.gmra.mxu0 %v293
        %v2844 = vpop.f32.mrf.mxu0
        %v2845 = vadd.f32 %v2732, %v2844
        %v2846 = vpop.f32.mrf.mxu0
        %v2847 = vadd.f32 %v2734, %v2846
        %v2848 = vpop.f32.mrf.mxu0
        %v2849 = vadd.f32 %v2736, %v2848
        %v2850 = vpop.f32.mrf.mxu0
        %v2851 = vadd.f32 %v2738, %v2850
        %2852 = vmatprep.mubr.bf16.mxu0 %v298
        %2853 = vmatmul.mubr.bf16.gmra.mxu0 %v297
        %v2854 = vpop.f32.mrf.mxu0
        %v2855 = vadd.f32 %v2742, %v2854
        %v2856 = vpop.f32.mrf.mxu0
        %v2857 = vadd.f32 %v2744, %v2856
        %v2858 = vpop.f32.mrf.mxu0
        %v2859 = vadd.f32 %v2746, %v2858
        %v2860 = vpop.f32.mrf.mxu0
        %v2861 = vadd.f32 %v2748, %v2860
        %2862 = vmatprep.mubr.bf16.mxu0 %v302
        %2863 = vmatmul.mubr.bf16.gmra.mxu0 %v301
        %v2864 = vpop.f32.mrf.mxu0
        %v2865 = vadd.f32 %v2752, %v2864
        %v2866 = vpop.f32.mrf.mxu0
        %v2867 = vadd.f32 %v2754, %v2866
        %v2868 = vpop.f32.mrf.mxu0
        %v2869 = vadd.f32 %v2756, %v2868
        %v2870 = vpop.f32.mrf.mxu0
        %v2871 = vadd.f32 %v2758, %v2870
        %2872 = vmatprep.mubr.bf16.mxu0 %v306
        %2873 = vmatmul.mubr.bf16.gmra.mxu0 %v305
        %v2874 = vpop.f32.mrf.mxu0
        %v2875 = vadd.f32 %v2762, %v2874
        %v2876 = vpop.f32.mrf.mxu0
        %v2877 = vadd.f32 %v2764, %v2876
        %v2878 = vpop.f32.mrf.mxu0
        %v2879 = vadd.f32 %v2766, %v2878
        %v2880 = vpop.f32.mrf.mxu0
        %v2881 = vadd.f32 %v2768, %v2880
        %2882 = vmatprep.mubr.bf16.mxu0 %v310
        %2883 = vmatmul.mubr.bf16.gmra.mxu0 %v309
        %v2884 = vpop.f32.mrf.mxu0
        %v2885 = vadd.f32 %v2772, %v2884
        %v2886 = vpop.f32.mrf.mxu0
        %v2887 = vadd.f32 %v2774, %v2886
        %v2888 = vpop.f32.mrf.mxu0
        %v2889 = vadd.f32 %v2776, %v2888
        %v2890 = vpop.f32.mrf.mxu0
        %v2891 = vadd.f32 %v2778, %v2890
        %2892 = vmatprep.mubr.bf16.mxu0 %v314
        %2893 = vmatmul.mubr.bf16.gmra.mxu0 %v313
        %v2894 = vpop.f32.mrf.mxu0
        %v2895 = vadd.f32 %v2782, %v2894
        %v2896 = vpop.f32.mrf.mxu0
        %v2897 = vadd.f32 %v2784, %v2896
        %v2898 = vpop.f32.mrf.mxu0
        %v2899 = vadd.f32 %v2786, %v2898
        %v2900 = vpop.f32.mrf.mxu0
        %v2901 = vadd.f32 %v2788, %v2900
        %2902 = vmatprep.mubr.bf16.mxu0 %v318
        %2903 = vmatmul.mubr.bf16.gmra.mxu0 %v317
        %v2904 = vpop.f32.mrf.mxu0
        %v2905 = vadd.f32 %v2792, %v2904
        %v2906 = vpop.f32.mrf.mxu0
        %v2907 = vadd.f32 %v2794, %v2906
        %v2908 = vpop.f32.mrf.mxu0
        %v2909 = vadd.f32 %v2796, %v2908
        %v2910 = vpop.f32.mrf.mxu0
        %v2911 = vadd.f32 %v2798, %v2910
        %2912 = vdwg.mxu0
        %2913 = vmatprep.subr.bf16.mxu0 %v2006
        %2914 = vmatpush1.bf16.msra.mxu0 %v2005
        %2915 = vmatprep.subr.bf16.mxu0 %v1994
        %2916 = vmatpush1.bf16.msra.mxu0 %v1993
        %2917 = vmatprep.subr.bf16.mxu0 %v1982
        %2918 = vmatpush1.bf16.msra.mxu0 %v1981
        %2919 = vmatprep.subr.bf16.mxu0 %v1970
        %2920 = vmatpush1.bf16.msra.mxu0 %v1969
        %2921 = vmatprep.subr.bf16.mxu0 %v1958
        %2922 = vmatpush1.bf16.msra.mxu0 %v1957
        %2923 = vmatprep.subr.bf16.mxu0 %v1946
        %2924 = vmatpush1.bf16.msra.mxu0 %v1945
        %2925 = vmatprep.subr.bf16.mxu0 %v1934
        %2926 = vmatpush1.bf16.msra.mxu0 %v1933
        %2927 = vmatprep.subr.bf16.mxu0 %v1922
        %2928 = vmatpush1.bf16.msra.mxu0 %v1921
        %2929 = vmatprep.subr.bf16.mxu0 %v2102
        %2930 = vmatpush2.bf16.msra.mxu0 %v2101
        %2931 = vmatprep.subr.bf16.mxu0 %v2090
        %2932 = vmatpush2.bf16.msra.mxu0 %v2089
        %2933 = vmatprep.subr.bf16.mxu0 %v2078
        %2934 = vmatpush2.bf16.msra.mxu0 %v2077
        %2935 = vmatprep.subr.bf16.mxu0 %v2066
        %2936 = vmatpush2.bf16.msra.mxu0 %v2065
        %2937 = vmatprep.subr.bf16.mxu0 %v2054
        %2938 = vmatpush2.bf16.msra.mxu0 %v2053
        %2939 = vmatprep.subr.bf16.mxu0 %v2042
        %2940 = vmatpush2.bf16.msra.mxu0 %v2041
        %2941 = vmatprep.subr.bf16.mxu0 %v2030
        %2942 = vmatpush2.bf16.msra.mxu0 %v2029
        %2943 = vmatprep.subr.bf16.mxu0 %v2018
        %2944 = vmatpush2.bf16.msra.mxu0 %v2017
        %2945 = vmatprep.mubr.bf16.mxu0 %v288
        %2946 = vmatmul.mubr.bf16.gmra.mxu0 %v287
        %v2947 = vpop.f32.mrf.mxu0
        %v2948 = vadd.f32 %v718, %v2947
        %v2949 = vpop.f32.mrf.mxu0
        %v2950 = vadd.f32 %v722, %v2949
        %v2951 = vpop.f32.mrf.mxu0
        %v2952 = vadd.f32 %v718, %v2951
        %v2953 = vpop.f32.mrf.mxu0
        %v2954 = vadd.f32 %v722, %v2953
        %2955 = vmatprep.mubr.bf16.mxu0 %v292
        %2956 = vmatmul.mubr.bf16.gmra.mxu0 %v291
        %v2957 = vpop.f32.mrf.mxu0
        %v2958 = vadd.f32 %v718, %v2957
        %v2959 = vpop.f32.mrf.mxu0
        %v2960 = vadd.f32 %v722, %v2959
        %v2961 = vpop.f32.mrf.mxu0
        %v2962 = vadd.f32 %v718, %v2961
        %v2963 = vpop.f32.mrf.mxu0
        %v2964 = vadd.f32 %v722, %v2963
        %2965 = vmatprep.mubr.bf16.mxu0 %v296
        %2966 = vmatmul.mubr.bf16.gmra.mxu0 %v295
        %v2967 = vpop.f32.mrf.mxu0
        %v2968 = vadd.f32 %v718, %v2967
        %v2969 = vpop.f32.mrf.mxu0
        %v2970 = vadd.f32 %v722, %v2969
        %v2971 = vpop.f32.mrf.mxu0
        %v2972 = vadd.f32 %v718, %v2971
        %v2973 = vpop.f32.mrf.mxu0
        %v2974 = vadd.f32 %v722, %v2973
        %2975 = vmatprep.mubr.bf16.mxu0 %v300
        %2976 = vmatmul.mubr.bf16.gmra.mxu0 %v299
        %v2977 = vpop.f32.mrf.mxu0
        %v2978 = vadd.f32 %v718, %v2977
        %v2979 = vpop.f32.mrf.mxu0
        %v2980 = vadd.f32 %v722, %v2979
        %v2981 = vpop.f32.mrf.mxu0
        %v2982 = vadd.f32 %v718, %v2981
        %v2983 = vpop.f32.mrf.mxu0
        %v2984 = vadd.f32 %v722, %v2983
        %2985 = vmatprep.mubr.bf16.mxu0 %v304
        %2986 = vmatmul.mubr.bf16.gmra.mxu0 %v303
        %v2987 = vpop.f32.mrf.mxu0
        %v2988 = vadd.f32 %v718, %v2987
        %v2989 = vpop.f32.mrf.mxu0
        %v2990 = vadd.f32 %v722, %v2989
        %v2991 = vpop.f32.mrf.mxu0
        %v2992 = vadd.f32 %v718, %v2991
        %v2993 = vpop.f32.mrf.mxu0
        %v2994 = vadd.f32 %v722, %v2993
        %2995 = vmatprep.mubr.bf16.mxu0 %v308
        %2996 = vmatmul.mubr.bf16.gmra.mxu0 %v307
        %v2997 = vpop.f32.mrf.mxu0
        %v2998 = vadd.f32 %v718, %v2997
        %v2999 = vpop.f32.mrf.mxu0
        %v3000 = vadd.f32 %v722, %v2999
        %v3001 = vpop.f32.mrf.mxu0
        %v3002 = vadd.f32 %v718, %v3001
        %v3003 = vpop.f32.mrf.mxu0
        %v3004 = vadd.f32 %v722, %v3003
        %3005 = vmatprep.mubr.bf16.mxu0 %v312
        %3006 = vmatmul.mubr.bf16.gmra.mxu0 %v311
        %v3007 = vpop.f32.mrf.mxu0
        %v3008 = vadd.f32 %v718, %v3007
        %v3009 = vpop.f32.mrf.mxu0
        %v3010 = vadd.f32 %v722, %v3009
        %v3011 = vpop.f32.mrf.mxu0
        %v3012 = vadd.f32 %v718, %v3011
        %v3013 = vpop.f32.mrf.mxu0
        %v3014 = vadd.f32 %v722, %v3013
        %3015 = vmatprep.mubr.bf16.mxu0 %v316
        %3016 = vmatmul.mubr.bf16.gmra.mxu0 %v315
        %v3017 = vpop.f32.mrf.mxu0
        %v3018 = vadd.f32 %v718, %v3017
        %v3019 = vpop.f32.mrf.mxu0
        %v3020 = vadd.f32 %v722, %v3019
        %v3021 = vpop.f32.mrf.mxu0
        %v3022 = vadd.f32 %v718, %v3021
        %v3023 = vpop.f32.mrf.mxu0
        %v3024 = vadd.f32 %v722, %v3023
        %3025 = vdwg.mxu0
        %3026 = vmatprep.subr.bf16.mxu0 %v2198
        %3027 = vmatpush1.bf16.msra.mxu0 %v2197
        %3028 = vmatprep.subr.bf16.mxu0 %v2186
        %3029 = vmatpush1.bf16.msra.mxu0 %v2185
        %3030 = vmatprep.subr.bf16.mxu0 %v2174
        %3031 = vmatpush1.bf16.msra.mxu0 %v2173
        %3032 = vmatprep.subr.bf16.mxu0 %v2162
        %3033 = vmatpush1.bf16.msra.mxu0 %v2161
        %3034 = vmatprep.subr.bf16.mxu0 %v2150
        %3035 = vmatpush1.bf16.msra.mxu0 %v2149
        %3036 = vmatprep.subr.bf16.mxu0 %v2138
        %3037 = vmatpush1.bf16.msra.mxu0 %v2137
        %3038 = vmatprep.subr.bf16.mxu0 %v2126
        %3039 = vmatpush1.bf16.msra.mxu0 %v2125
        %3040 = vmatprep.subr.bf16.mxu0 %v2114
        %3041 = vmatpush1.bf16.msra.mxu0 %v2113
        %3042 = vmatprep.subr.bf16.mxu0 %v2294
        %3043 = vmatpush2.bf16.msra.mxu0 %v2293
        %3044 = vmatprep.subr.bf16.mxu0 %v2282
        %3045 = vmatpush2.bf16.msra.mxu0 %v2281
        %3046 = vmatprep.subr.bf16.mxu0 %v2270
        %3047 = vmatpush2.bf16.msra.mxu0 %v2269
        %3048 = vmatprep.subr.bf16.mxu0 %v2258
        %3049 = vmatpush2.bf16.msra.mxu0 %v2257
        %3050 = vmatprep.subr.bf16.mxu0 %v2246
        %3051 = vmatpush2.bf16.msra.mxu0 %v2245
        %3052 = vmatprep.subr.bf16.mxu0 %v2234
        %3053 = vmatpush2.bf16.msra.mxu0 %v2233
        %3054 = vmatprep.subr.bf16.mxu0 %v2222
        %3055 = vmatpush2.bf16.msra.mxu0 %v2221
        %3056 = vmatprep.subr.bf16.mxu0 %v2210
        %3057 = vmatpush2.bf16.msra.mxu0 %v2209
        %3058 = vmatprep.mubr.bf16.mxu0 %v290
        %3059 = vmatmul.mubr.bf16.gmra.mxu0 %v289
        %v3060 = vpop.f32.mrf.mxu0
        %v3061 = vadd.f32 %v2948, %v3060
        %v3062 = vpop.f32.mrf.mxu0
        %v3063 = vadd.f32 %v2950, %v3062
        %v3064 = vpop.f32.mrf.mxu0
        %v3065 = vadd.f32 %v2952, %v3064
        %v3066 = vpop.f32.mrf.mxu0
        %v3067 = vadd.f32 %v2954, %v3066
        %3068 = vmatprep.mubr.bf16.mxu0 %v294
        %3069 = vmatmul.mubr.bf16.gmra.mxu0 %v293
        %v3070 = vpop.f32.mrf.mxu0
        %v3071 = vadd.f32 %v2958, %v3070
        %v3072 = vpop.f32.mrf.mxu0
        %v3073 = vadd.f32 %v2960, %v3072
        %v3074 = vpop.f32.mrf.mxu0
        %v3075 = vadd.f32 %v2962, %v3074
        %v3076 = vpop.f32.mrf.mxu0
        %v3077 = vadd.f32 %v2964, %v3076
        %3078 = vmatprep.mubr.bf16.mxu0 %v298
        %3079 = vmatmul.mubr.bf16.gmra.mxu0 %v297
        %v3080 = vpop.f32.mrf.mxu0
        %v3081 = vadd.f32 %v2968, %v3080
        %v3082 = vpop.f32.mrf.mxu0
        %v3083 = vadd.f32 %v2970, %v3082
        %v3084 = vpop.f32.mrf.mxu0
        %v3085 = vadd.f32 %v2972, %v3084
        %v3086 = vpop.f32.mrf.mxu0
        %v3087 = vadd.f32 %v2974, %v3086
        %3088 = vmatprep.mubr.bf16.mxu0 %v302
        %3089 = vmatmul.mubr.bf16.gmra.mxu0 %v301
        %v3090 = vpop.f32.mrf.mxu0
        %v3091 = vadd.f32 %v2978, %v3090
        %v3092 = vpop.f32.mrf.mxu0
        %v3093 = vadd.f32 %v2980, %v3092
        %v3094 = vpop.f32.mrf.mxu0
        %v3095 = vadd.f32 %v2982, %v3094
        %v3096 = vpop.f32.mrf.mxu0
        %v3097 = vadd.f32 %v2984, %v3096
        %3098 = vmatprep.mubr.bf16.mxu0 %v306
        %3099 = vmatmul.mubr.bf16.gmra.mxu0 %v305
        %v3100 = vpop.f32.mrf.mxu0
        %v3101 = vadd.f32 %v2988, %v3100
        %v3102 = vpop.f32.mrf.mxu0
        %v3103 = vadd.f32 %v2990, %v3102
        %v3104 = vpop.f32.mrf.mxu0
        %v3105 = vadd.f32 %v2992, %v3104
        %v3106 = vpop.f32.mrf.mxu0
        %v3107 = vadd.f32 %v2994, %v3106
        %3108 = vmatprep.mubr.bf16.mxu0 %v310
        %3109 = vmatmul.mubr.bf16.gmra.mxu0 %v309
        %v3110 = vpop.f32.mrf.mxu0
        %v3111 = vadd.f32 %v2998, %v3110
        %v3112 = vpop.f32.mrf.mxu0
        %v3113 = vadd.f32 %v3000, %v3112
        %v3114 = vpop.f32.mrf.mxu0
        %v3115 = vadd.f32 %v3002, %v3114
        %v3116 = vpop.f32.mrf.mxu0
        %v3117 = vadd.f32 %v3004, %v3116
        %3118 = vmatprep.mubr.bf16.mxu0 %v314
        %3119 = vmatmul.mubr.bf16.gmra.mxu0 %v313
        %v3120 = vpop.f32.mrf.mxu0
        %v3121 = vadd.f32 %v3008, %v3120
        %v3122 = vpop.f32.mrf.mxu0
        %v3123 = vadd.f32 %v3010, %v3122
        %v3124 = vpop.f32.mrf.mxu0
        %v3125 = vadd.f32 %v3012, %v3124
        %v3126 = vpop.f32.mrf.mxu0
        %v3127 = vadd.f32 %v3014, %v3126
        %3128 = vmatprep.mubr.bf16.mxu0 %v318
        %3129 = vmatmul.mubr.bf16.gmra.mxu0 %v317
        %v3130 = vpop.f32.mrf.mxu0
        %v3131 = vadd.f32 %v3018, %v3130
        %v3132 = vpop.f32.mrf.mxu0
        %v3133 = vadd.f32 %v3020, %v3132
        %v3134 = vpop.f32.mrf.mxu0
        %v3135 = vadd.f32 %v3022, %v3134
        %v3136 = vpop.f32.mrf.mxu0
        %v3137 = vadd.f32 %v3024, %v3136
        %3138 = vdwg.mxu0
        %3139 = vmatprep.subr.bf16.mxu0 %v2008
        %3140 = vmatpush1.bf16.msra.mxu0 %v2007
        %3141 = vmatprep.subr.bf16.mxu0 %v1996
        %3142 = vmatpush1.bf16.msra.mxu0 %v1995
        %3143 = vmatprep.subr.bf16.mxu0 %v1984
        %3144 = vmatpush1.bf16.msra.mxu0 %v1983
        %3145 = vmatprep.subr.bf16.mxu0 %v1972
        %3146 = vmatpush1.bf16.msra.mxu0 %v1971
        %3147 = vmatprep.subr.bf16.mxu0 %v1960
        %3148 = vmatpush1.bf16.msra.mxu0 %v1959
        %3149 = vmatprep.subr.bf16.mxu0 %v1948
        %3150 = vmatpush1.bf16.msra.mxu0 %v1947
        %3151 = vmatprep.subr.bf16.mxu0 %v1936
        %3152 = vmatpush1.bf16.msra.mxu0 %v1935
        %3153 = vmatprep.subr.bf16.mxu0 %v1924
        %3154 = vmatpush1.bf16.msra.mxu0 %v1923
        %3155 = vmatprep.subr.bf16.mxu0 %v2104
        %3156 = vmatpush2.bf16.msra.mxu0 %v2103
        %3157 = vmatprep.subr.bf16.mxu0 %v2092
        %3158 = vmatpush2.bf16.msra.mxu0 %v2091
        %3159 = vmatprep.subr.bf16.mxu0 %v2080
        %3160 = vmatpush2.bf16.msra.mxu0 %v2079
        %3161 = vmatprep.subr.bf16.mxu0 %v2068
        %3162 = vmatpush2.bf16.msra.mxu0 %v2067
        %3163 = vmatprep.subr.bf16.mxu0 %v2056
        %3164 = vmatpush2.bf16.msra.mxu0 %v2055
        %3165 = vmatprep.subr.bf16.mxu0 %v2044
        %3166 = vmatpush2.bf16.msra.mxu0 %v2043
        %3167 = vmatprep.subr.bf16.mxu0 %v2032
        %3168 = vmatpush2.bf16.msra.mxu0 %v2031
        %3169 = vmatprep.subr.bf16.mxu0 %v2020
        %3170 = vmatpush2.bf16.msra.mxu0 %v2019
        %3171 = vmatprep.mubr.bf16.mxu0 %v288
        %3172 = vmatmul.mubr.bf16.gmra.mxu0 %v287
        %v3173 = vpop.f32.mrf.mxu0
        %v3174 = vadd.f32 %v726, %v3173
        %v3175 = vpop.f32.mrf.mxu0
        %v3176 = vadd.f32 %v730, %v3175
        %v3177 = vpop.f32.mrf.mxu0
        %v3178 = vadd.f32 %v726, %v3177
        %v3179 = vpop.f32.mrf.mxu0
        %v3180 = vadd.f32 %v730, %v3179
        %3181 = vmatprep.mubr.bf16.mxu0 %v292
        %3182 = vmatmul.mubr.bf16.gmra.mxu0 %v291
        %v3183 = vpop.f32.mrf.mxu0
        %v3184 = vadd.f32 %v726, %v3183
        %v3185 = vpop.f32.mrf.mxu0
        %v3186 = vadd.f32 %v730, %v3185
        %v3187 = vpop.f32.mrf.mxu0
        %v3188 = vadd.f32 %v726, %v3187
        %v3189 = vpop.f32.mrf.mxu0
        %v3190 = vadd.f32 %v730, %v3189
        %3191 = vmatprep.mubr.bf16.mxu0 %v296
        %3192 = vmatmul.mubr.bf16.gmra.mxu0 %v295
        %v3193 = vpop.f32.mrf.mxu0
        %v3194 = vadd.f32 %v726, %v3193
        %v3195 = vpop.f32.mrf.mxu0
        %v3196 = vadd.f32 %v730, %v3195
        %v3197 = vpop.f32.mrf.mxu0
        %v3198 = vadd.f32 %v726, %v3197
        %v3199 = vpop.f32.mrf.mxu0
        %v3200 = vadd.f32 %v730, %v3199
        %3201 = vmatprep.mubr.bf16.mxu0 %v300
        %3202 = vmatmul.mubr.bf16.gmra.mxu0 %v299
        %v3203 = vpop.f32.mrf.mxu0
        %v3204 = vadd.f32 %v726, %v3203
        %v3205 = vpop.f32.mrf.mxu0
        %v3206 = vadd.f32 %v730, %v3205
        %v3207 = vpop.f32.mrf.mxu0
        %v3208 = vadd.f32 %v726, %v3207
        %v3209 = vpop.f32.mrf.mxu0
        %v3210 = vadd.f32 %v730, %v3209
        %3211 = vmatprep.mubr.bf16.mxu0 %v304
        %3212 = vmatmul.mubr.bf16.gmra.mxu0 %v303
        %v3213 = vpop.f32.mrf.mxu0
        %v3214 = vadd.f32 %v726, %v3213
        %v3215 = vpop.f32.mrf.mxu0
        %v3216 = vadd.f32 %v730, %v3215
        %v3217 = vpop.f32.mrf.mxu0
        %v3218 = vadd.f32 %v726, %v3217
        %v3219 = vpop.f32.mrf.mxu0
        %v3220 = vadd.f32 %v730, %v3219
        %3221 = vmatprep.mubr.bf16.mxu0 %v308
        %3222 = vmatmul.mubr.bf16.gmra.mxu0 %v307
        %v3223 = vpop.f32.mrf.mxu0
        %v3224 = vadd.f32 %v726, %v3223
        %v3225 = vpop.f32.mrf.mxu0
        %v3226 = vadd.f32 %v730, %v3225
        %v3227 = vpop.f32.mrf.mxu0
        %v3228 = vadd.f32 %v726, %v3227
        %v3229 = vpop.f32.mrf.mxu0
        %v3230 = vadd.f32 %v730, %v3229
        %3231 = vmatprep.mubr.bf16.mxu0 %v312
        %3232 = vmatmul.mubr.bf16.gmra.mxu0 %v311
        %v3233 = vpop.f32.mrf.mxu0
        %v3234 = vadd.f32 %v726, %v3233
        %v3235 = vpop.f32.mrf.mxu0
        %v3236 = vadd.f32 %v730, %v3235
        %v3237 = vpop.f32.mrf.mxu0
        %v3238 = vadd.f32 %v726, %v3237
        %v3239 = vpop.f32.mrf.mxu0
        %v3240 = vadd.f32 %v730, %v3239
        %3241 = vmatprep.mubr.bf16.mxu0 %v316
        %3242 = vmatmul.mubr.bf16.gmra.mxu0 %v315
        %v3243 = vpop.f32.mrf.mxu0
        %v3244 = vadd.f32 %v726, %v3243
        %v3245 = vpop.f32.mrf.mxu0
        %v3246 = vadd.f32 %v730, %v3245
        %v3247 = vpop.f32.mrf.mxu0
        %v3248 = vadd.f32 %v726, %v3247
        %v3249 = vpop.f32.mrf.mxu0
        %v3250 = vadd.f32 %v730, %v3249
        %3251 = vdwg.mxu0
        %3252 = vmatprep.subr.bf16.mxu0 %v2200
        %3253 = vmatpush1.bf16.msra.mxu0 %v2199
        %3254 = vmatprep.subr.bf16.mxu0 %v2188
        %3255 = vmatpush1.bf16.msra.mxu0 %v2187
        %3256 = vmatprep.subr.bf16.mxu0 %v2176
        %3257 = vmatpush1.bf16.msra.mxu0 %v2175
        %3258 = vmatprep.subr.bf16.mxu0 %v2164
        %3259 = vmatpush1.bf16.msra.mxu0 %v2163
        %3260 = vmatprep.subr.bf16.mxu0 %v2152
        %3261 = vmatpush1.bf16.msra.mxu0 %v2151
        %3262 = vmatprep.subr.bf16.mxu0 %v2140
        %3263 = vmatpush1.bf16.msra.mxu0 %v2139
        %3264 = vmatprep.subr.bf16.mxu0 %v2128
        %3265 = vmatpush1.bf16.msra.mxu0 %v2127
        %3266 = vmatprep.subr.bf16.mxu0 %v2116
        %3267 = vmatpush1.bf16.msra.mxu0 %v2115
        %3268 = vmatprep.subr.bf16.mxu0 %v2296
        %3269 = vmatpush2.bf16.msra.mxu0 %v2295
        %3270 = vmatprep.subr.bf16.mxu0 %v2284
        %3271 = vmatpush2.bf16.msra.mxu0 %v2283
        %3272 = vmatprep.subr.bf16.mxu0 %v2272
        %3273 = vmatpush2.bf16.msra.mxu0 %v2271
        %3274 = vmatprep.subr.bf16.mxu0 %v2260
        %3275 = vmatpush2.bf16.msra.mxu0 %v2259
        %3276 = vmatprep.subr.bf16.mxu0 %v2248
        %3277 = vmatpush2.bf16.msra.mxu0 %v2247
        %3278 = vmatprep.subr.bf16.mxu0 %v2236
        %3279 = vmatpush2.bf16.msra.mxu0 %v2235
        %3280 = vmatprep.subr.bf16.mxu0 %v2224
        %3281 = vmatpush2.bf16.msra.mxu0 %v2223
        %3282 = vmatprep.subr.bf16.mxu0 %v2212
        %3283 = vmatpush2.bf16.msra.mxu0 %v2211
        %3284 = vmatprep.mubr.bf16.mxu0 %v290
        %3285 = vmatmul.mubr.bf16.gmra.mxu0 %v289
        %v3286 = vpop.f32.mrf.mxu0
        %v3287 = vadd.f32 %v3174, %v3286
        %v3288 = vpop.f32.mrf.mxu0
        %v3289 = vadd.f32 %v3176, %v3288
        %v3290 = vpop.f32.mrf.mxu0
        %v3291 = vadd.f32 %v3178, %v3290
        %v3292 = vpop.f32.mrf.mxu0
        %v3293 = vadd.f32 %v3180, %v3292
        %3294 = vmatprep.mubr.bf16.mxu0 %v294
        %3295 = vmatmul.mubr.bf16.gmra.mxu0 %v293
        %v3296 = vpop.f32.mrf.mxu0
        %v3297 = vadd.f32 %v3184, %v3296
        %v3298 = vpop.f32.mrf.mxu0
        %v3299 = vadd.f32 %v3186, %v3298
        %v3300 = vpop.f32.mrf.mxu0
        %v3301 = vadd.f32 %v3188, %v3300
        %v3302 = vpop.f32.mrf.mxu0
        %v3303 = vadd.f32 %v3190, %v3302
        %3304 = vmatprep.mubr.bf16.mxu0 %v298
        %3305 = vmatmul.mubr.bf16.gmra.mxu0 %v297
        %v3306 = vpop.f32.mrf.mxu0
        %v3307 = vadd.f32 %v3194, %v3306
        %v3308 = vpop.f32.mrf.mxu0
        %v3309 = vadd.f32 %v3196, %v3308
        %v3310 = vpop.f32.mrf.mxu0
        %v3311 = vadd.f32 %v3198, %v3310
        %v3312 = vpop.f32.mrf.mxu0
        %v3313 = vadd.f32 %v3200, %v3312
        %3314 = vmatprep.mubr.bf16.mxu0 %v302
        %3315 = vmatmul.mubr.bf16.gmra.mxu0 %v301
        %v3316 = vpop.f32.mrf.mxu0
        %v3317 = vadd.f32 %v3204, %v3316
        %v3318 = vpop.f32.mrf.mxu0
        %v3319 = vadd.f32 %v3206, %v3318
        %v3320 = vpop.f32.mrf.mxu0
        %v3321 = vadd.f32 %v3208, %v3320
        %v3322 = vpop.f32.mrf.mxu0
        %v3323 = vadd.f32 %v3210, %v3322
        %3324 = vmatprep.mubr.bf16.mxu0 %v306
        %3325 = vmatmul.mubr.bf16.gmra.mxu0 %v305
        %v3326 = vpop.f32.mrf.mxu0
        %v3327 = vadd.f32 %v3214, %v3326
        %v3328 = vpop.f32.mrf.mxu0
        %v3329 = vadd.f32 %v3216, %v3328
        %v3330 = vpop.f32.mrf.mxu0
        %v3331 = vadd.f32 %v3218, %v3330
        %v3332 = vpop.f32.mrf.mxu0
        %v3333 = vadd.f32 %v3220, %v3332
        %3334 = vmatprep.mubr.bf16.mxu0 %v310
        %3335 = vmatmul.mubr.bf16.gmra.mxu0 %v309
        %v3336 = vpop.f32.mrf.mxu0
        %v3337 = vadd.f32 %v3224, %v3336
        %v3338 = vpop.f32.mrf.mxu0
        %v3339 = vadd.f32 %v3226, %v3338
        %v3340 = vpop.f32.mrf.mxu0
        %v3341 = vadd.f32 %v3228, %v3340
        %v3342 = vpop.f32.mrf.mxu0
        %v3343 = vadd.f32 %v3230, %v3342
        %3344 = vmatprep.mubr.bf16.mxu0 %v314
        %3345 = vmatmul.mubr.bf16.gmra.mxu0 %v313
        %v3346 = vpop.f32.mrf.mxu0
        %v3347 = vadd.f32 %v3234, %v3346
        %v3348 = vpop.f32.mrf.mxu0
        %v3349 = vadd.f32 %v3236, %v3348
        %v3350 = vpop.f32.mrf.mxu0
        %v3351 = vadd.f32 %v3238, %v3350
        %v3352 = vpop.f32.mrf.mxu0
        %v3353 = vadd.f32 %v3240, %v3352
        %3354 = vmatprep.mubr.bf16.mxu0 %v318
        %3355 = vmatmul.mubr.bf16.gmra.mxu0 %v317
        %v3356 = vpop.f32.mrf.mxu0
        %v3357 = vadd.f32 %v3244, %v3356
        %v3358 = vpop.f32.mrf.mxu0
        %v3359 = vadd.f32 %v3246, %v3358
        %v3360 = vpop.f32.mrf.mxu0
        %v3361 = vadd.f32 %v3248, %v3360
        %v3362 = vpop.f32.mrf.mxu0
        %v3363 = vadd.f32 %v3250, %v3362
        %3364 = vdwg.mxu0
        %3365 = vmatprep.subr.bf16.mxu0 %v2010
        %3366 = vmatpush1.bf16.msra.mxu0 %v2009
        %3367 = vmatprep.subr.bf16.mxu0 %v1998
        %3368 = vmatpush1.bf16.msra.mxu0 %v1997
        %3369 = vmatprep.subr.bf16.mxu0 %v1986
        %3370 = vmatpush1.bf16.msra.mxu0 %v1985
        %3371 = vmatprep.subr.bf16.mxu0 %v1974
        %3372 = vmatpush1.bf16.msra.mxu0 %v1973
        %3373 = vmatprep.subr.bf16.mxu0 %v1962
        %3374 = vmatpush1.bf16.msra.mxu0 %v1961
        %3375 = vmatprep.subr.bf16.mxu0 %v1950
        %3376 = vmatpush1.bf16.msra.mxu0 %v1949
        %3377 = vmatprep.subr.bf16.mxu0 %v1938
        %3378 = vmatpush1.bf16.msra.mxu0 %v1937
        %3379 = vmatprep.subr.bf16.mxu0 %v1926
        %3380 = vmatpush1.bf16.msra.mxu0 %v1925
        %3381 = vmatprep.subr.bf16.mxu0 %v2106
        %3382 = vmatpush2.bf16.msra.mxu0 %v2105
        %3383 = vmatprep.subr.bf16.mxu0 %v2094
        %3384 = vmatpush2.bf16.msra.mxu0 %v2093
        %3385 = vmatprep.subr.bf16.mxu0 %v2082
        %3386 = vmatpush2.bf16.msra.mxu0 %v2081
        %3387 = vmatprep.subr.bf16.mxu0 %v2070
        %3388 = vmatpush2.bf16.msra.mxu0 %v2069
        %3389 = vmatprep.subr.bf16.mxu0 %v2058
        %3390 = vmatpush2.bf16.msra.mxu0 %v2057
        %3391 = vmatprep.subr.bf16.mxu0 %v2046
        %3392 = vmatpush2.bf16.msra.mxu0 %v2045
        %3393 = vmatprep.subr.bf16.mxu0 %v2034
        %3394 = vmatpush2.bf16.msra.mxu0 %v2033
        %3395 = vmatprep.subr.bf16.mxu0 %v2022
        %3396 = vmatpush2.bf16.msra.mxu0 %v2021
        %3397 = vmatprep.mubr.bf16.mxu0 %v288
        %3398 = vmatmul.mubr.bf16.gmra.mxu0 %v287
        %v3399 = vpop.f32.mrf.mxu0
        %v3400 = vadd.f32 %v734, %v3399
        %v3401 = vpop.f32.mrf.mxu0
        %v3402 = vadd.f32 %v738, %v3401
        %v3403 = vpop.f32.mrf.mxu0
        %v3404 = vadd.f32 %v734, %v3403
        %v3405 = vpop.f32.mrf.mxu0
        %v3406 = vadd.f32 %v738, %v3405
        %3407 = vmatprep.mubr.bf16.mxu0 %v292
        %3408 = vmatmul.mubr.bf16.gmra.mxu0 %v291
        %v3409 = vpop.f32.mrf.mxu0
        %v3410 = vadd.f32 %v734, %v3409
        %v3411 = vpop.f32.mrf.mxu0
        %v3412 = vadd.f32 %v738, %v3411
        %v3413 = vpop.f32.mrf.mxu0
        %v3414 = vadd.f32 %v734, %v3413
        %v3415 = vpop.f32.mrf.mxu0
        %v3416 = vadd.f32 %v738, %v3415
        %3417 = vmatprep.mubr.bf16.mxu0 %v296
        %3418 = vmatmul.mubr.bf16.gmra.mxu0 %v295
        %v3419 = vpop.f32.mrf.mxu0
        %v3420 = vadd.f32 %v734, %v3419
        %v3421 = vpop.f32.mrf.mxu0
        %v3422 = vadd.f32 %v738, %v3421
        %v3423 = vpop.f32.mrf.mxu0
        %v3424 = vadd.f32 %v734, %v3423
        %v3425 = vpop.f32.mrf.mxu0
        %v3426 = vadd.f32 %v738, %v3425
        %3427 = vmatprep.mubr.bf16.mxu0 %v300
        %3428 = vmatmul.mubr.bf16.gmra.mxu0 %v299
        %v3429 = vpop.f32.mrf.mxu0
        %v3430 = vadd.f32 %v734, %v3429
        %v3431 = vpop.f32.mrf.mxu0
        %v3432 = vadd.f32 %v738, %v3431
        %v3433 = vpop.f32.mrf.mxu0
        %v3434 = vadd.f32 %v734, %v3433
        %v3435 = vpop.f32.mrf.mxu0
        %v3436 = vadd.f32 %v738, %v3435
        %3437 = vmatprep.mubr.bf16.mxu0 %v304
        %3438 = vmatmul.mubr.bf16.gmra.mxu0 %v303
        %v3439 = vpop.f32.mrf.mxu0
        %v3440 = vadd.f32 %v734, %v3439
        %v3441 = vpop.f32.mrf.mxu0
        %v3442 = vadd.f32 %v738, %v3441
        %v3443 = vpop.f32.mrf.mxu0
        %v3444 = vadd.f32 %v734, %v3443
        %v3445 = vpop.f32.mrf.mxu0
        %v3446 = vadd.f32 %v738, %v3445
        %3447 = vmatprep.mubr.bf16.mxu0 %v308
        %3448 = vmatmul.mubr.bf16.gmra.mxu0 %v307
        %v3449 = vpop.f32.mrf.mxu0
        %v3450 = vadd.f32 %v734, %v3449
        %v3451 = vpop.f32.mrf.mxu0
        %v3452 = vadd.f32 %v738, %v3451
        %v3453 = vpop.f32.mrf.mxu0
        %v3454 = vadd.f32 %v734, %v3453
        %v3455 = vpop.f32.mrf.mxu0
        %v3456 = vadd.f32 %v738, %v3455
        %3457 = vmatprep.mubr.bf16.mxu0 %v312
        %3458 = vmatmul.mubr.bf16.gmra.mxu0 %v311
        %v3459 = vpop.f32.mrf.mxu0
        %v3460 = vadd.f32 %v734, %v3459
        %v3461 = vpop.f32.mrf.mxu0
        %v3462 = vadd.f32 %v738, %v3461
        %v3463 = vpop.f32.mrf.mxu0
        %v3464 = vadd.f32 %v734, %v3463
        %v3465 = vpop.f32.mrf.mxu0
        %v3466 = vadd.f32 %v738, %v3465
        %3467 = vmatprep.mubr.bf16.mxu0 %v316
        %3468 = vmatmul.mubr.bf16.gmra.mxu0 %v315
        %v3469 = vpop.f32.mrf.mxu0
        %v3470 = vadd.f32 %v734, %v3469
        %v3471 = vpop.f32.mrf.mxu0
        %v3472 = vadd.f32 %v738, %v3471
        %v3473 = vpop.f32.mrf.mxu0
        %v3474 = vadd.f32 %v734, %v3473
        %v3475 = vpop.f32.mrf.mxu0
        %v3476 = vadd.f32 %v738, %v3475
        %3477 = vdwg.mxu0
        %3478 = vmatprep.subr.bf16.mxu0 %v2202
        %3479 = vmatpush1.bf16.msra.mxu0 %v2201
        %3480 = vmatprep.subr.bf16.mxu0 %v2190
        %3481 = vmatpush1.bf16.msra.mxu0 %v2189
        %3482 = vmatprep.subr.bf16.mxu0 %v2178
        %3483 = vmatpush1.bf16.msra.mxu0 %v2177
        %3484 = vmatprep.subr.bf16.mxu0 %v2166
        %3485 = vmatpush1.bf16.msra.mxu0 %v2165
        %3486 = vmatprep.subr.bf16.mxu0 %v2154
        %3487 = vmatpush1.bf16.msra.mxu0 %v2153
        %3488 = vmatprep.subr.bf16.mxu0 %v2142
        %3489 = vmatpush1.bf16.msra.mxu0 %v2141
        %3490 = vmatprep.subr.bf16.mxu0 %v2130
        %3491 = vmatpush1.bf16.msra.mxu0 %v2129
        %3492 = vmatprep.subr.bf16.mxu0 %v2118
        %3493 = vmatpush1.bf16.msra.mxu0 %v2117
        %3494 = vmatprep.subr.bf16.mxu0 %v2298
        %3495 = vmatpush2.bf16.msra.mxu0 %v2297
        %3496 = vmatprep.subr.bf16.mxu0 %v2286
        %3497 = vmatpush2.bf16.msra.mxu0 %v2285
        %3498 = vmatprep.subr.bf16.mxu0 %v2274
        %3499 = vmatpush2.bf16.msra.mxu0 %v2273
        %3500 = vmatprep.subr.bf16.mxu0 %v2262
        %3501 = vmatpush2.bf16.msra.mxu0 %v2261
        %3502 = vmatprep.subr.bf16.mxu0 %v2250
        %3503 = vmatpush2.bf16.msra.mxu0 %v2249
        %3504 = vmatprep.subr.bf16.mxu0 %v2238
        %3505 = vmatpush2.bf16.msra.mxu0 %v2237
        %3506 = vmatprep.subr.bf16.mxu0 %v2226
        %3507 = vmatpush2.bf16.msra.mxu0 %v2225
        %3508 = vmatprep.subr.bf16.mxu0 %v2214
        %3509 = vmatpush2.bf16.msra.mxu0 %v2213
        %3510 = vmatprep.mubr.bf16.mxu0 %v290
        %3511 = vmatmul.mubr.bf16.gmra.mxu0 %v289
        %v3512 = vpop.f32.mrf.mxu0
        %v3513 = vadd.f32 %v3400, %v3512
        %v3514 = vpop.f32.mrf.mxu0
        %v3515 = vadd.f32 %v3402, %v3514
        %v3516 = vpop.f32.mrf.mxu0
        %v3517 = vadd.f32 %v3404, %v3516
        %v3518 = vpop.f32.mrf.mxu0
        %v3519 = vadd.f32 %v3406, %v3518
        %3520 = vmatprep.mubr.bf16.mxu0 %v294
        %3521 = vmatmul.mubr.bf16.gmra.mxu0 %v293
        %v3522 = vpop.f32.mrf.mxu0
        %v3523 = vadd.f32 %v3410, %v3522
        %v3524 = vpop.f32.mrf.mxu0
        %v3525 = vadd.f32 %v3412, %v3524
        %v3526 = vpop.f32.mrf.mxu0
        %v3527 = vadd.f32 %v3414, %v3526
        %v3528 = vpop.f32.mrf.mxu0
        %v3529 = vadd.f32 %v3416, %v3528
        %3530 = vmatprep.mubr.bf16.mxu0 %v298
        %3531 = vmatmul.mubr.bf16.gmra.mxu0 %v297
        %v3532 = vpop.f32.mrf.mxu0
        %v3533 = vadd.f32 %v3420, %v3532
        %v3534 = vpop.f32.mrf.mxu0
        %v3535 = vadd.f32 %v3422, %v3534
        %v3536 = vpop.f32.mrf.mxu0
        %v3537 = vadd.f32 %v3424, %v3536
        %v3538 = vpop.f32.mrf.mxu0
        %v3539 = vadd.f32 %v3426, %v3538
        %3540 = vmatprep.mubr.bf16.mxu0 %v302
        %3541 = vmatmul.mubr.bf16.gmra.mxu0 %v301
        %v3542 = vpop.f32.mrf.mxu0
        %v3543 = vadd.f32 %v3430, %v3542
        %v3544 = vpop.f32.mrf.mxu0
        %v3545 = vadd.f32 %v3432, %v3544
        %v3546 = vpop.f32.mrf.mxu0
        %v3547 = vadd.f32 %v3434, %v3546
        %v3548 = vpop.f32.mrf.mxu0
        %v3549 = vadd.f32 %v3436, %v3548
        %3550 = vmatprep.mubr.bf16.mxu0 %v306
        %3551 = vmatmul.mubr.bf16.gmra.mxu0 %v305
        %v3552 = vpop.f32.mrf.mxu0
        %v3553 = vadd.f32 %v3440, %v3552
        %v3554 = vpop.f32.mrf.mxu0
        %v3555 = vadd.f32 %v3442, %v3554
        %v3556 = vpop.f32.mrf.mxu0
        %v3557 = vadd.f32 %v3444, %v3556
        %v3558 = vpop.f32.mrf.mxu0
        %v3559 = vadd.f32 %v3446, %v3558
        %3560 = vmatprep.mubr.bf16.mxu0 %v310
        %3561 = vmatmul.mubr.bf16.gmra.mxu0 %v309
        %v3562 = vpop.f32.mrf.mxu0
        %v3563 = vadd.f32 %v3450, %v3562
        %v3564 = vpop.f32.mrf.mxu0
        %v3565 = vadd.f32 %v3452, %v3564
        %v3566 = vpop.f32.mrf.mxu0
        %v3567 = vadd.f32 %v3454, %v3566
        %v3568 = vpop.f32.mrf.mxu0
        %v3569 = vadd.f32 %v3456, %v3568
        %3570 = vmatprep.mubr.bf16.mxu0 %v314
        %3571 = vmatmul.mubr.bf16.gmra.mxu0 %v313
        %v3572 = vpop.f32.mrf.mxu0
        %v3573 = vadd.f32 %v3460, %v3572
        %v3574 = vpop.f32.mrf.mxu0
        %v3575 = vadd.f32 %v3462, %v3574
        %v3576 = vpop.f32.mrf.mxu0
        %v3577 = vadd.f32 %v3464, %v3576
        %v3578 = vpop.f32.mrf.mxu0
        %v3579 = vadd.f32 %v3466, %v3578
        %3580 = vmatprep.mubr.bf16.mxu0 %v318
        %3581 = vmatmul.mubr.bf16.gmra.mxu0 %v317
        %v3582 = vpop.f32.mrf.mxu0
        %v3583 = vadd.f32 %v3470, %v3582
        %v3584 = vpop.f32.mrf.mxu0
        %v3585 = vadd.f32 %v3472, %v3584
        %v3586 = vpop.f32.mrf.mxu0
        %v3587 = vadd.f32 %v3474, %v3586
        %v3588 = vpop.f32.mrf.mxu0
        %v3589 = vadd.f32 %v3476, %v3588
        %3590 = vdwg.mxu0
        %3591 = vmatprep.subr.bf16.mxu0 %v2012
        %3592 = vmatpush1.bf16.msra.mxu0 %v2011
        %3593 = vmatprep.subr.bf16.mxu0 %v2000
        %3594 = vmatpush1.bf16.msra.mxu0 %v1999
        %3595 = vmatprep.subr.bf16.mxu0 %v1988
        %3596 = vmatpush1.bf16.msra.mxu0 %v1987
        %3597 = vmatprep.subr.bf16.mxu0 %v1976
        %3598 = vmatpush1.bf16.msra.mxu0 %v1975
        %3599 = vmatprep.subr.bf16.mxu0 %v1964
        %3600 = vmatpush1.bf16.msra.mxu0 %v1963
        %3601 = vmatprep.subr.bf16.mxu0 %v1952
        %3602 = vmatpush1.bf16.msra.mxu0 %v1951
        %3603 = vmatprep.subr.bf16.mxu0 %v1940
        %3604 = vmatpush1.bf16.msra.mxu0 %v1939
        %3605 = vmatprep.subr.bf16.mxu0 %v1928
        %3606 = vmatpush1.bf16.msra.mxu0 %v1927
        %3607 = vmatprep.subr.bf16.mxu0 %v2108
        %3608 = vmatpush2.bf16.msra.mxu0 %v2107
        %3609 = vmatprep.subr.bf16.mxu0 %v2096
        %3610 = vmatpush2.bf16.msra.mxu0 %v2095
        %3611 = vmatprep.subr.bf16.mxu0 %v2084
        %3612 = vmatpush2.bf16.msra.mxu0 %v2083
        %3613 = vmatprep.subr.bf16.mxu0 %v2072
        %3614 = vmatpush2.bf16.msra.mxu0 %v2071
        %3615 = vmatprep.subr.bf16.mxu0 %v2060
        %3616 = vmatpush2.bf16.msra.mxu0 %v2059
        %3617 = vmatprep.subr.bf16.mxu0 %v2048
        %3618 = vmatpush2.bf16.msra.mxu0 %v2047
        %3619 = vmatprep.subr.bf16.mxu0 %v2036
        %3620 = vmatpush2.bf16.msra.mxu0 %v2035
        %3621 = vmatprep.subr.bf16.mxu0 %v2024
        %3622 = vmatpush2.bf16.msra.mxu0 %v2023
        %3623 = vmatprep.mubr.bf16.mxu0 %v288
        %3624 = vmatmul.mubr.bf16.gmra.mxu0 %v287
        %v3625 = vpop.f32.mrf.mxu0
        %v3626 = vadd.f32 %v742, %v3625
        %v3627 = vpop.f32.mrf.mxu0
        %v3628 = vadd.f32 %v746, %v3627
        %v3629 = vpop.f32.mrf.mxu0
        %v3630 = vadd.f32 %v742, %v3629
        %v3631 = vpop.f32.mrf.mxu0
        %v3632 = vadd.f32 %v746, %v3631
        %3633 = vmatprep.mubr.bf16.mxu0 %v292
        %3634 = vmatmul.mubr.bf16.gmra.mxu0 %v291
        %v3635 = vpop.f32.mrf.mxu0
        %v3636 = vadd.f32 %v742, %v3635
        %v3637 = vpop.f32.mrf.mxu0
        %v3638 = vadd.f32 %v746, %v3637
        %v3639 = vpop.f32.mrf.mxu0
        %v3640 = vadd.f32 %v742, %v3639
        %v3641 = vpop.f32.mrf.mxu0
        %v3642 = vadd.f32 %v746, %v3641
        %3643 = vmatprep.mubr.bf16.mxu0 %v296
        %3644 = vmatmul.mubr.bf16.gmra.mxu0 %v295
        %v3645 = vpop.f32.mrf.mxu0
        %v3646 = vadd.f32 %v742, %v3645
        %v3647 = vpop.f32.mrf.mxu0
        %v3648 = vadd.f32 %v746, %v3647
        %v3649 = vpop.f32.mrf.mxu0
        %v3650 = vadd.f32 %v742, %v3649
        %v3651 = vpop.f32.mrf.mxu0
        %v3652 = vadd.f32 %v746, %v3651
        %3653 = vmatprep.mubr.bf16.mxu0 %v300
        %3654 = vmatmul.mubr.bf16.gmra.mxu0 %v299
        %v3655 = vpop.f32.mrf.mxu0
        %v3656 = vadd.f32 %v742, %v3655
        %v3657 = vpop.f32.mrf.mxu0
        %v3658 = vadd.f32 %v746, %v3657
        %v3659 = vpop.f32.mrf.mxu0
        %v3660 = vadd.f32 %v742, %v3659
        %v3661 = vpop.f32.mrf.mxu0
        %v3662 = vadd.f32 %v746, %v3661
        %3663 = vmatprep.mubr.bf16.mxu0 %v304
        %3664 = vmatmul.mubr.bf16.gmra.mxu0 %v303
        %v3665 = vpop.f32.mrf.mxu0
        %v3666 = vadd.f32 %v742, %v3665
        %v3667 = vpop.f32.mrf.mxu0
        %v3668 = vadd.f32 %v746, %v3667
        %v3669 = vpop.f32.mrf.mxu0
        %v3670 = vadd.f32 %v742, %v3669
        %v3671 = vpop.f32.mrf.mxu0
        %v3672 = vadd.f32 %v746, %v3671
        %3673 = vmatprep.mubr.bf16.mxu0 %v308
        %3674 = vmatmul.mubr.bf16.gmra.mxu0 %v307
        %v3675 = vpop.f32.mrf.mxu0
        %v3676 = vadd.f32 %v742, %v3675
        %v3677 = vpop.f32.mrf.mxu0
        %v3678 = vadd.f32 %v746, %v3677
        %v3679 = vpop.f32.mrf.mxu0
        %v3680 = vadd.f32 %v742, %v3679
        %v3681 = vpop.f32.mrf.mxu0
        %v3682 = vadd.f32 %v746, %v3681
        %3683 = vmatprep.mubr.bf16.mxu0 %v312
        %3684 = vmatmul.mubr.bf16.gmra.mxu0 %v311
        %v3685 = vpop.f32.mrf.mxu0
        %v3686 = vadd.f32 %v742, %v3685
        %v3687 = vpop.f32.mrf.mxu0
        %v3688 = vadd.f32 %v746, %v3687
        %v3689 = vpop.f32.mrf.mxu0
        %v3690 = vadd.f32 %v742, %v3689
        %v3691 = vpop.f32.mrf.mxu0
        %v3692 = vadd.f32 %v746, %v3691
        %3693 = vmatprep.mubr.bf16.mxu0 %v316
        %3694 = vmatmul.mubr.bf16.gmra.mxu0 %v315
        %v3695 = vpop.f32.mrf.mxu0
        %v3696 = vadd.f32 %v742, %v3695
        %v3697 = vpop.f32.mrf.mxu0
        %v3698 = vadd.f32 %v746, %v3697
        %v3699 = vpop.f32.mrf.mxu0
        %v3700 = vadd.f32 %v742, %v3699
        %v3701 = vpop.f32.mrf.mxu0
        %v3702 = vadd.f32 %v746, %v3701
        %3703 = vdwg.mxu0
        %3704 = vmatprep.subr.bf16.mxu0 %v2204
        %3705 = vmatpush1.bf16.msra.mxu0 %v2203
        %3706 = vmatprep.subr.bf16.mxu0 %v2192
        %3707 = vmatpush1.bf16.msra.mxu0 %v2191
        %3708 = vmatprep.subr.bf16.mxu0 %v2180
        %3709 = vmatpush1.bf16.msra.mxu0 %v2179
        %3710 = vmatprep.subr.bf16.mxu0 %v2168
        %3711 = vmatpush1.bf16.msra.mxu0 %v2167
        %3712 = vmatprep.subr.bf16.mxu0 %v2156
        %3713 = vmatpush1.bf16.msra.mxu0 %v2155
        %3714 = vmatprep.subr.bf16.mxu0 %v2144
        %3715 = vmatpush1.bf16.msra.mxu0 %v2143
        %3716 = vmatprep.subr.bf16.mxu0 %v2132
        %3717 = vmatpush1.bf16.msra.mxu0 %v2131
        %3718 = vmatprep.subr.bf16.mxu0 %v2120
        %3719 = vmatpush1.bf16.msra.mxu0 %v2119
        %3720 = vmatprep.subr.bf16.mxu0 %v2300
        %3721 = vmatpush2.bf16.msra.mxu0 %v2299
        %3722 = vmatprep.subr.bf16.mxu0 %v2288
        %3723 = vmatpush2.bf16.msra.mxu0 %v2287
        %3724 = vmatprep.subr.bf16.mxu0 %v2276
        %3725 = vmatpush2.bf16.msra.mxu0 %v2275
        %3726 = vmatprep.subr.bf16.mxu0 %v2264
        %3727 = vmatpush2.bf16.msra.mxu0 %v2263
        %3728 = vmatprep.subr.bf16.mxu0 %v2252
        %3729 = vmatpush2.bf16.msra.mxu0 %v2251
        %3730 = vmatprep.subr.bf16.mxu0 %v2240
        %3731 = vmatpush2.bf16.msra.mxu0 %v2239
        %3732 = vmatprep.subr.bf16.mxu0 %v2228
        %3733 = vmatpush2.bf16.msra.mxu0 %v2227
        %3734 = vmatprep.subr.bf16.mxu0 %v2216
        %3735 = vmatpush2.bf16.msra.mxu0 %v2215
        %3736 = vmatprep.mubr.bf16.mxu0 %v290
        %3737 = vmatmul.mubr.bf16.gmra.mxu0 %v289
        %v3738 = vpop.f32.mrf.mxu0
        %v3739 = vadd.f32 %v3626, %v3738
        %v3740 = vpop.f32.mrf.mxu0
        %v3741 = vadd.f32 %v3628, %v3740
        %v3742 = vpop.f32.mrf.mxu0
        %v3743 = vadd.f32 %v3630, %v3742
        %v3744 = vpop.f32.mrf.mxu0
        %v3745 = vadd.f32 %v3632, %v3744
        %3746 = vmatprep.mubr.bf16.mxu0 %v294
        %3747 = vmatmul.mubr.bf16.gmra.mxu0 %v293
        %v3748 = vpop.f32.mrf.mxu0
        %v3749 = vadd.f32 %v3636, %v3748
        %v3750 = vpop.f32.mrf.mxu0
        %v3751 = vadd.f32 %v3638, %v3750
        %v3752 = vpop.f32.mrf.mxu0
        %v3753 = vadd.f32 %v3640, %v3752
        %v3754 = vpop.f32.mrf.mxu0
        %v3755 = vadd.f32 %v3642, %v3754
        %3756 = vmatprep.mubr.bf16.mxu0 %v298
        %3757 = vmatmul.mubr.bf16.gmra.mxu0 %v297
        %v3758 = vpop.f32.mrf.mxu0
        %v3759 = vadd.f32 %v3646, %v3758
        %v3760 = vpop.f32.mrf.mxu0
        %v3761 = vadd.f32 %v3648, %v3760
        %v3762 = vpop.f32.mrf.mxu0
        %v3763 = vadd.f32 %v3650, %v3762
        %v3764 = vpop.f32.mrf.mxu0
        %v3765 = vadd.f32 %v3652, %v3764
        %3766 = vmatprep.mubr.bf16.mxu0 %v302
        %3767 = vmatmul.mubr.bf16.gmra.mxu0 %v301
        %v3768 = vpop.f32.mrf.mxu0
        %v3769 = vadd.f32 %v3656, %v3768
        %v3770 = vpop.f32.mrf.mxu0
        %v3771 = vadd.f32 %v3658, %v3770
        %v3772 = vpop.f32.mrf.mxu0
        %v3773 = vadd.f32 %v3660, %v3772
        %v3774 = vpop.f32.mrf.mxu0
        %v3775 = vadd.f32 %v3662, %v3774
        %3776 = vmatprep.mubr.bf16.mxu0 %v306
        %3777 = vmatmul.mubr.bf16.gmra.mxu0 %v305
        %v3778 = vpop.f32.mrf.mxu0
        %v3779 = vadd.f32 %v3666, %v3778
        %v3780 = vpop.f32.mrf.mxu0
        %v3781 = vadd.f32 %v3668, %v3780
        %v3782 = vpop.f32.mrf.mxu0
        %v3783 = vadd.f32 %v3670, %v3782
        %v3784 = vpop.f32.mrf.mxu0
        %v3785 = vadd.f32 %v3672, %v3784
        %3786 = vmatprep.mubr.bf16.mxu0 %v310
        %3787 = vmatmul.mubr.bf16.gmra.mxu0 %v309
        %v3788 = vpop.f32.mrf.mxu0
        %v3789 = vadd.f32 %v3676, %v3788
        %v3790 = vpop.f32.mrf.mxu0
        %v3791 = vadd.f32 %v3678, %v3790
        %v3792 = vpop.f32.mrf.mxu0
        %v3793 = vadd.f32 %v3680, %v3792
        %v3794 = vpop.f32.mrf.mxu0
        %v3795 = vadd.f32 %v3682, %v3794
        %3796 = vmatprep.mubr.bf16.mxu0 %v314
        %3797 = vmatmul.mubr.bf16.gmra.mxu0 %v313
        %v3798 = vpop.f32.mrf.mxu0
        %v3799 = vadd.f32 %v3686, %v3798
        %v3800 = vpop.f32.mrf.mxu0
        %v3801 = vadd.f32 %v3688, %v3800
        %v3802 = vpop.f32.mrf.mxu0
        %v3803 = vadd.f32 %v3690, %v3802
        %v3804 = vpop.f32.mrf.mxu0
        %v3805 = vadd.f32 %v3692, %v3804
        %3806 = vmatprep.mubr.bf16.mxu0 %v318
        %3807 = vmatmul.mubr.bf16.gmra.mxu0 %v317
        %v3808 = vpop.f32.mrf.mxu0
        %v3809 = vadd.f32 %v3696, %v3808
        %v3810 = vpop.f32.mrf.mxu0
        %v3811 = vadd.f32 %v3698, %v3810
        %v3812 = vpop.f32.mrf.mxu0
        %v3813 = vadd.f32 %v3700, %v3812
        %v3814 = vpop.f32.mrf.mxu0
        %v3815 = vadd.f32 %v3702, %v3814
        %3816 = vdwg.mxu0
        %3817 = vmatprep.subr.bf16.mxu0 %v2014
        %3818 = vmatpush1.bf16.msra.mxu0 %v2013
        %3819 = vmatprep.subr.bf16.mxu0 %v2002
        %3820 = vmatpush1.bf16.msra.mxu0 %v2001
        %3821 = vmatprep.subr.bf16.mxu0 %v1990
        %3822 = vmatpush1.bf16.msra.mxu0 %v1989
        %3823 = vmatprep.subr.bf16.mxu0 %v1978
        %3824 = vmatpush1.bf16.msra.mxu0 %v1977
        %3825 = vmatprep.subr.bf16.mxu0 %v1966
        %3826 = vmatpush1.bf16.msra.mxu0 %v1965
        %3827 = vmatprep.subr.bf16.mxu0 %v1954
        %3828 = vmatpush1.bf16.msra.mxu0 %v1953
        %3829 = vmatprep.subr.bf16.mxu0 %v1942
        %3830 = vmatpush1.bf16.msra.mxu0 %v1941
        %3831 = vmatprep.subr.bf16.mxu0 %v1930
        %3832 = vmatpush1.bf16.msra.mxu0 %v1929
        %3833 = vmatprep.subr.bf16.mxu0 %v2110
        %3834 = vmatpush2.bf16.msra.mxu0 %v2109
        %3835 = vmatprep.subr.bf16.mxu0 %v2098
        %3836 = vmatpush2.bf16.msra.mxu0 %v2097
        %3837 = vmatprep.subr.bf16.mxu0 %v2086
        %3838 = vmatpush2.bf16.msra.mxu0 %v2085
        %3839 = vmatprep.subr.bf16.mxu0 %v2074
        %3840 = vmatpush2.bf16.msra.mxu0 %v2073
        %3841 = vmatprep.subr.bf16.mxu0 %v2062
        %3842 = vmatpush2.bf16.msra.mxu0 %v2061
        %3843 = vmatprep.subr.bf16.mxu0 %v2050
        %3844 = vmatpush2.bf16.msra.mxu0 %v2049
        %3845 = vmatprep.subr.bf16.mxu0 %v2038
        %3846 = vmatpush2.bf16.msra.mxu0 %v2037
        %3847 = vmatprep.subr.bf16.mxu0 %v2026
        %3848 = vmatpush2.bf16.msra.mxu0 %v2025
        %3849 = vmatprep.mubr.bf16.mxu0 %v288
        %3850 = vmatmul.mubr.bf16.gmra.mxu0 %v287
        %v3851 = vpop.f32.mrf.mxu0
        %v3852 = vadd.f32 %v750, %v3851
        %v3853 = vpop.f32.mrf.mxu0
        %v3854 = vadd.f32 %v754, %v3853
        %v3855 = vpop.f32.mrf.mxu0
        %v3856 = vadd.f32 %v750, %v3855
        %v3857 = vpop.f32.mrf.mxu0
        %v3858 = vadd.f32 %v754, %v3857
        %3859 = vmatprep.mubr.bf16.mxu0 %v292
        %3860 = vmatmul.mubr.bf16.gmra.mxu0 %v291
        %v3861 = vpop.f32.mrf.mxu0
        %v3862 = vadd.f32 %v750, %v3861
        %v3863 = vpop.f32.mrf.mxu0
        %v3864 = vadd.f32 %v754, %v3863
        %v3865 = vpop.f32.mrf.mxu0
        %v3866 = vadd.f32 %v750, %v3865
        %v3867 = vpop.f32.mrf.mxu0
        %v3868 = vadd.f32 %v754, %v3867
        %3869 = vmatprep.mubr.bf16.mxu0 %v296
        %3870 = vmatmul.mubr.bf16.gmra.mxu0 %v295
        %v3871 = vpop.f32.mrf.mxu0
        %v3872 = vadd.f32 %v750, %v3871
        %v3873 = vpop.f32.mrf.mxu0
        %v3874 = vadd.f32 %v754, %v3873
        %v3875 = vpop.f32.mrf.mxu0
        %v3876 = vadd.f32 %v750, %v3875
        %v3877 = vpop.f32.mrf.mxu0
        %v3878 = vadd.f32 %v754, %v3877
        %3879 = vmatprep.mubr.bf16.mxu0 %v300
        %3880 = vmatmul.mubr.bf16.gmra.mxu0 %v299
        %v3881 = vpop.f32.mrf.mxu0
        %v3882 = vadd.f32 %v750, %v3881
        %v3883 = vpop.f32.mrf.mxu0
        %v3884 = vadd.f32 %v754, %v3883
        %v3885 = vpop.f32.mrf.mxu0
        %v3886 = vadd.f32 %v750, %v3885
        %v3887 = vpop.f32.mrf.mxu0
        %v3888 = vadd.f32 %v754, %v3887
        %3889 = vmatprep.mubr.bf16.mxu0 %v304
        %3890 = vmatmul.mubr.bf16.gmra.mxu0 %v303
        %v3891 = vpop.f32.mrf.mxu0
        %v3892 = vadd.f32 %v750, %v3891
        %v3893 = vpop.f32.mrf.mxu0
        %v3894 = vadd.f32 %v754, %v3893
        %v3895 = vpop.f32.mrf.mxu0
        %v3896 = vadd.f32 %v750, %v3895
        %v3897 = vpop.f32.mrf.mxu0
        %v3898 = vadd.f32 %v754, %v3897
        %3899 = vmatprep.mubr.bf16.mxu0 %v308
        %3900 = vmatmul.mubr.bf16.gmra.mxu0 %v307
        %v3901 = vpop.f32.mrf.mxu0
        %v3902 = vadd.f32 %v750, %v3901
        %v3903 = vpop.f32.mrf.mxu0
        %v3904 = vadd.f32 %v754, %v3903
        %v3905 = vpop.f32.mrf.mxu0
        %v3906 = vadd.f32 %v750, %v3905
        %v3907 = vpop.f32.mrf.mxu0
        %v3908 = vadd.f32 %v754, %v3907
        %3909 = vmatprep.mubr.bf16.mxu0 %v312
        %3910 = vmatmul.mubr.bf16.gmra.mxu0 %v311
        %v3911 = vpop.f32.mrf.mxu0
        %v3912 = vadd.f32 %v750, %v3911
        %v3913 = vpop.f32.mrf.mxu0
        %v3914 = vadd.f32 %v754, %v3913
        %v3915 = vpop.f32.mrf.mxu0
        %v3916 = vadd.f32 %v750, %v3915
        %v3917 = vpop.f32.mrf.mxu0
        %v3918 = vadd.f32 %v754, %v3917
        %3919 = vmatprep.mubr.bf16.mxu0 %v316
        %3920 = vmatmul.mubr.bf16.gmra.mxu0 %v315
        %v3921 = vpop.f32.mrf.mxu0
        %v3922 = vadd.f32 %v750, %v3921
        %v3923 = vpop.f32.mrf.mxu0
        %v3924 = vadd.f32 %v754, %v3923
        %v3925 = vpop.f32.mrf.mxu0
        %v3926 = vadd.f32 %v750, %v3925
        %v3927 = vpop.f32.mrf.mxu0
        %v3928 = vadd.f32 %v754, %v3927
        %3929 = vdwg.mxu0
        %3930 = vmatprep.subr.bf16.mxu0 %v2206
        %3931 = vmatpush1.bf16.msra.mxu0 %v2205
        %3932 = vmatprep.subr.bf16.mxu0 %v2194
        %3933 = vmatpush1.bf16.msra.mxu0 %v2193
        %3934 = vmatprep.subr.bf16.mxu0 %v2182
        %3935 = vmatpush1.bf16.msra.mxu0 %v2181
        %3936 = vmatprep.subr.bf16.mxu0 %v2170
        %3937 = vmatpush1.bf16.msra.mxu0 %v2169
        %3938 = vmatprep.subr.bf16.mxu0 %v2158
        %3939 = vmatpush1.bf16.msra.mxu0 %v2157
        %3940 = vmatprep.subr.bf16.mxu0 %v2146
        %3941 = vmatpush1.bf16.msra.mxu0 %v2145
        %3942 = vmatprep.subr.bf16.mxu0 %v2134
        %3943 = vmatpush1.bf16.msra.mxu0 %v2133
        %3944 = vmatprep.subr.bf16.mxu0 %v2122
        %3945 = vmatpush1.bf16.msra.mxu0 %v2121
        %3946 = vmatprep.subr.bf16.mxu0 %v2302
        %3947 = vmatpush2.bf16.msra.mxu0 %v2301
        %3948 = vmatprep.subr.bf16.mxu0 %v2290
        %3949 = vmatpush2.bf16.msra.mxu0 %v2289
        %3950 = vmatprep.subr.bf16.mxu0 %v2278
        %3951 = vmatpush2.bf16.msra.mxu0 %v2277
        %3952 = vmatprep.subr.bf16.mxu0 %v2266
        %3953 = vmatpush2.bf16.msra.mxu0 %v2265
        %3954 = vmatprep.subr.bf16.mxu0 %v2254
        %3955 = vmatpush2.bf16.msra.mxu0 %v2253
        %3956 = vmatprep.subr.bf16.mxu0 %v2242
        %3957 = vmatpush2.bf16.msra.mxu0 %v2241
        %3958 = vmatprep.subr.bf16.mxu0 %v2230
        %3959 = vmatpush2.bf16.msra.mxu0 %v2229
        %3960 = vmatprep.subr.bf16.mxu0 %v2218
        %3961 = vmatpush2.bf16.msra.mxu0 %v2217
        %3962 = vmatprep.mubr.bf16.mxu0 %v290
        %3963 = vmatmul.mubr.bf16.gmra.mxu0 %v289
        %v3964 = vpop.f32.mrf.mxu0
        %v3965 = vadd.f32 %v3852, %v3964
        %v3966 = vpop.f32.mrf.mxu0
        %v3967 = vadd.f32 %v3854, %v3966
        %v3968 = vpop.f32.mrf.mxu0
        %v3969 = vadd.f32 %v3856, %v3968
        %v3970 = vpop.f32.mrf.mxu0
        %v3971 = vadd.f32 %v3858, %v3970
        %3972 = vmatprep.mubr.bf16.mxu0 %v294
        %3973 = vmatmul.mubr.bf16.gmra.mxu0 %v293
        %v3974 = vpop.f32.mrf.mxu0
        %v3975 = vadd.f32 %v3862, %v3974
        %v3976 = vpop.f32.mrf.mxu0
        %v3977 = vadd.f32 %v3864, %v3976
        %v3978 = vpop.f32.mrf.mxu0
        %v3979 = vadd.f32 %v3866, %v3978
        %v3980 = vpop.f32.mrf.mxu0
        %v3981 = vadd.f32 %v3868, %v3980
        %3982 = vmatprep.mubr.bf16.mxu0 %v298
        %3983 = vmatmul.mubr.bf16.gmra.mxu0 %v297
        %v3984 = vpop.f32.mrf.mxu0
        %v3985 = vadd.f32 %v3872, %v3984
        %v3986 = vpop.f32.mrf.mxu0
        %v3987 = vadd.f32 %v3874, %v3986
        %v3988 = vpop.f32.mrf.mxu0
        %v3989 = vadd.f32 %v3876, %v3988
        %v3990 = vpop.f32.mrf.mxu0
        %v3991 = vadd.f32 %v3878, %v3990
        %3992 = vmatprep.mubr.bf16.mxu0 %v302
        %3993 = vmatmul.mubr.bf16.gmra.mxu0 %v301
        %v3994 = vpop.f32.mrf.mxu0
        %v3995 = vadd.f32 %v3882, %v3994
        %v3996 = vpop.f32.mrf.mxu0
        %v3997 = vadd.f32 %v3884, %v3996
        %v3998 = vpop.f32.mrf.mxu0
        %v3999 = vadd.f32 %v3886, %v3998
        %v4000 = vpop.f32.mrf.mxu0
        %v4001 = vadd.f32 %v3888, %v4000
        %4002 = vmatprep.mubr.bf16.mxu0 %v306
        %4003 = vmatmul.mubr.bf16.gmra.mxu0 %v305
        %v4004 = vpop.f32.mrf.mxu0
        %v4005 = vadd.f32 %v3892, %v4004
        %v4006 = vpop.f32.mrf.mxu0
        %v4007 = vadd.f32 %v3894, %v4006
        %v4008 = vpop.f32.mrf.mxu0
        %v4009 = vadd.f32 %v3896, %v4008
        %v4010 = vpop.f32.mrf.mxu0
        %v4011 = vadd.f32 %v3898, %v4010
        %4012 = vmatprep.mubr.bf16.mxu0 %v310
        %4013 = vmatmul.mubr.bf16.gmra.mxu0 %v309
        %v4014 = vpop.f32.mrf.mxu0
        %v4015 = vadd.f32 %v3902, %v4014
        %v4016 = vpop.f32.mrf.mxu0
        %v4017 = vadd.f32 %v3904, %v4016
        %v4018 = vpop.f32.mrf.mxu0
        %v4019 = vadd.f32 %v3906, %v4018
        %v4020 = vpop.f32.mrf.mxu0
        %v4021 = vadd.f32 %v3908, %v4020
        %4022 = vmatprep.mubr.bf16.mxu0 %v314
        %4023 = vmatmul.mubr.bf16.gmra.mxu0 %v313
        %v4024 = vpop.f32.mrf.mxu0
        %v4025 = vadd.f32 %v3912, %v4024
        %v4026 = vpop.f32.mrf.mxu0
        %v4027 = vadd.f32 %v3914, %v4026
        %v4028 = vpop.f32.mrf.mxu0
        %v4029 = vadd.f32 %v3916, %v4028
        %v4030 = vpop.f32.mrf.mxu0
        %v4031 = vadd.f32 %v3918, %v4030
        %4032 = vmatprep.mubr.bf16.mxu0 %v318
        %4033 = vmatmul.mubr.bf16.gmra.mxu0 %v317
        %v4034 = vpop.f32.mrf.mxu0
        %v4035 = vadd.f32 %v3922, %v4034
        %v4036 = vpop.f32.mrf.mxu0
        %v4037 = vadd.f32 %v3924, %v4036
        %v4038 = vpop.f32.mrf.mxu0
        %v4039 = vadd.f32 %v3926, %v4038
        %v4040 = vpop.f32.mrf.mxu0
        %v4041 = vadd.f32 %v3928, %v4040
        %4042 = vdwg.mxu0
        %4043 = vst [vmem:[%s221] sm:$0xff] %v2835
        %4044 = vst [vmem:[%s221 + $0x8] sm:$0xff] %v2837
        %4045 = vst [vmem:[%s221 + $0x10] sm:$0xff] %v3061
        %4046 = vst [vmem:[%s221 + $0x18] sm:$0xff] %v3063
        %4047 = vst [vmem:[%s221 + $0x20] sm:$0xff] %v3287
        %4048 = vst [vmem:[%s221 + $0x28] sm:$0xff] %v3289
        %4049 = vst [vmem:[%s221 + $0x30] sm:$0xff] %v3513
        %4050 = vst [vmem:[%s221 + $0x38] sm:$0xff] %v3515
        %4051 = vst [vmem:[%s221 + $0x40] sm:$0xff] %v3739
        %4052 = vst [vmem:[%s221 + $0x48] sm:$0xff] %v3741
        %4053 = vst [vmem:[%s221 + $0x50] sm:$0xff] %v3965
        %4054 = vst [vmem:[%s221 + $0x58] sm:$0xff] %v3967
        %4055 = vst [vmem:[%s221 + $0x60] sm:$0xff] %v2839
        %4056 = vst [vmem:[%s221 + $0x68] sm:$0xff] %v2841
        %4057 = vst [vmem:[%s221 + $0x70] sm:$0xff] %v3065
        %4058 = vst [vmem:[%s221 + $0x78] sm:$0xff] %v3067
        %4059 = vst [vmem:[%s221 + $0x80] sm:$0xff] %v3291
        %4060 = vst [vmem:[%s221 + $0x88] sm:$0xff] %v3293
        %4061 = vst [vmem:[%s221 + $0x90] sm:$0xff] %v3517
        %4062 = vst [vmem:[%s221 + $0x98] sm:$0xff] %v3519
        %4063 = vst [vmem:[%s221 + $0xa0] sm:$0xff] %v3743
        %4064 = vst [vmem:[%s221 + $0xa8] sm:$0xff] %v3745
        %4065 = vst [vmem:[%s221 + $0xb0] sm:$0xff] %v3969
        %4066 = vst [vmem:[%s221 + $0xb8] sm:$0xff] %v3971
        %4067 = vst [vmem:[%s221 + $0xc0] sm:$0xff] %v2845
        %4068 = vst [vmem:[%s221 + $0xc8] sm:$0xff] %v2847
        %4069 = vst [vmem:[%s221 + $0xd0] sm:$0xff] %v3071
        %4070 = vst [vmem:[%s221 + $0xd8] sm:$0xff] %v3073
        %4071 = vst [vmem:[%s221 + $0xe0] sm:$0xff] %v3297
        %4072 = vst [vmem:[%s221 + $0xe8] sm:$0xff] %v3299
        %4073 = vst [vmem:[%s221 + $0xf0] sm:$0xff] %v3523
        %4074 = vst [vmem:[%s221 + $0xf8] sm:$0xff] %v3525
        %4075 = vst [vmem:[%s221 + $0x100] sm:$0xff] %v3749
        %4076 = vst [vmem:[%s221 + $0x108] sm:$0xff] %v3751
        %4077 = vst [vmem:[%s221 + $0x110] sm:$0xff] %v3975
        %4078 = vst [vmem:[%s221 + $0x118] sm:$0xff] %v3977
        %4079 = vst [vmem:[%s221 + $0x120] sm:$0xff] %v2849
        %4080 = vst [vmem:[%s221 + $0x128] sm:$0xff] %v2851
        %4081 = vst [vmem:[%s221 + $0x130] sm:$0xff] %v3075
        %4082 = vst [vmem:[%s221 + $0x138] sm:$0xff] %v3077
        %4083 = vst [vmem:[%s221 + $0x140] sm:$0xff] %v3301
        %4084 = vst [vmem:[%s221 + $0x148] sm:$0xff] %v3303
        %4085 = vst [vmem:[%s221 + $0x150] sm:$0xff] %v3527
        %4086 = vst [vmem:[%s221 + $0x158] sm:$0xff] %v3529
        %4087 = vst [vmem:[%s221 + $0x160] sm:$0xff] %v3753
        %4088 = vst [vmem:[%s221 + $0x168] sm:$0xff] %v3755
        %4089 = vst [vmem:[%s221 + $0x170] sm:$0xff] %v3979
        %4090 = vst [vmem:[%s221 + $0x178] sm:$0xff] %v3981
        %4091 = vst [vmem:[%s221 + $0x180] sm:$0xff] %v2855
        %4092 = vst [vmem:[%s221 + $0x188] sm:$0xff] %v2857
        %4093 = vst [vmem:[%s221 + $0x190] sm:$0xff] %v3081
        %4094 = vst [vmem:[%s221 + $0x198] sm:$0xff] %v3083
        %4095 = vst [vmem:[%s221 + $0x1a0] sm:$0xff] %v3307
        %4096 = vst [vmem:[%s221 + $0x1a8] sm:$0xff] %v3309
        %4097 = vst [vmem:[%s221 + $0x1b0] sm:$0xff] %v3533
        %4098 = vst [vmem:[%s221 + $0x1b8] sm:$0xff] %v3535
        %4099 = vst [vmem:[%s221 + $0x1c0] sm:$0xff] %v3759
        %4100 = vst [vmem:[%s221 + $0x1c8] sm:$0xff] %v3761
        %4101 = vst [vmem:[%s221 + $0x1d0] sm:$0xff] %v3985
        %4102 = vst [vmem:[%s221 + $0x1d8] sm:$0xff] %v3987
        %4103 = vst [vmem:[%s221 + $0x1e0] sm:$0xff] %v2859
        %4104 = vst [vmem:[%s221 + $0x1e8] sm:$0xff] %v2861
        %4105 = vst [vmem:[%s221 + $0x1f0] sm:$0xff] %v3085
        %4106 = vst [vmem:[%s221 + $0x1f8] sm:$0xff] %v3087
        %4107 = vst [vmem:[%s221 + $0x200] sm:$0xff] %v3311
        %4108 = vst [vmem:[%s221 + $0x208] sm:$0xff] %v3313
        %4109 = vst [vmem:[%s221 + $0x210] sm:$0xff] %v3537
        %4110 = vst [vmem:[%s221 + $0x218] sm:$0xff] %v3539
        %4111 = vst [vmem:[%s221 + $0x220] sm:$0xff] %v3763
        %4112 = vst [vmem:[%s221 + $0x228] sm:$0xff] %v3765
        %4113 = vst [vmem:[%s221 + $0x230] sm:$0xff] %v3989
        %4114 = vst [vmem:[%s221 + $0x238] sm:$0xff] %v3991
        %4115 = vst [vmem:[%s221 + $0x240] sm:$0xff] %v2865
        %4116 = vst [vmem:[%s221 + $0x248] sm:$0xff] %v2867
        %4117 = vst [vmem:[%s221 + $0x250] sm:$0xff] %v3091
        %4118 = vst [vmem:[%s221 + $0x258] sm:$0xff] %v3093
        %4119 = vst [vmem:[%s221 + $0x260] sm:$0xff] %v3317
        %4120 = vst [vmem:[%s221 + $0x268] sm:$0xff] %v3319
        %4121 = vst [vmem:[%s221 + $0x270] sm:$0xff] %v3543
        %4122 = vst [vmem:[%s221 + $0x278] sm:$0xff] %v3545
        %4123 = vst [vmem:[%s221 + $0x280] sm:$0xff] %v3769
        %4124 = vst [vmem:[%s221 + $0x288] sm:$0xff] %v3771
        %4125 = vst [vmem:[%s221 + $0x290] sm:$0xff] %v3995
        %4126 = vst [vmem:[%s221 + $0x298] sm:$0xff] %v3997
        %4127 = vst [vmem:[%s221 + $0x2a0] sm:$0xff] %v2869
        %4128 = vst [vmem:[%s221 + $0x2a8] sm:$0xff] %v2871
        %4129 = vst [vmem:[%s221 + $0x2b0] sm:$0xff] %v3095
        %4130 = vst [vmem:[%s221 + $0x2b8] sm:$0xff] %v3097
        %4131 = vst [vmem:[%s221 + $0x2c0] sm:$0xff] %v3321
        %4132 = vst [vmem:[%s221 + $0x2c8] sm:$0xff] %v3323
        %4133 = vst [vmem:[%s221 + $0x2d0] sm:$0xff] %v3547
        %4134 = vst [vmem:[%s221 + $0x2d8] sm:$0xff] %v3549
        %4135 = vst [vmem:[%s221 + $0x2e0] sm:$0xff] %v3773
        %4136 = vst [vmem:[%s221 + $0x2e8] sm:$0xff] %v3775
        %4137 = vst [vmem:[%s221 + $0x2f0] sm:$0xff] %v3999
        %4138 = vst [vmem:[%s221 + $0x2f8] sm:$0xff] %v4001
        %4139 = vst [vmem:[%s221 + $0x300] sm:$0xff] %v2875
        %4140 = vst [vmem:[%s221 + $0x308] sm:$0xff] %v2877
        %4141 = vst [vmem:[%s221 + $0x310] sm:$0xff] %v3101
        %4142 = vst [vmem:[%s221 + $0x318] sm:$0xff] %v3103
        %4143 = vst [vmem:[%s221 + $0x320] sm:$0xff] %v3327
        %4144 = vst [vmem:[%s221 + $0x328] sm:$0xff] %v3329
        %4145 = vst [vmem:[%s221 + $0x330] sm:$0xff] %v3553
        %4146 = vst [vmem:[%s221 + $0x338] sm:$0xff] %v3555
        %4147 = vst [vmem:[%s221 + $0x340] sm:$0xff] %v3779
        %4148 = vst [vmem:[%s221 + $0x348] sm:$0xff] %v3781
        %4149 = vst [vmem:[%s221 + $0x350] sm:$0xff] %v4005
        %4150 = vst [vmem:[%s221 + $0x358] sm:$0xff] %v4007
        %4151 = vst [vmem:[%s221 + $0x360] sm:$0xff] %v2879
        %4152 = vst [vmem:[%s221 + $0x368] sm:$0xff] %v2881
        %4153 = vst [vmem:[%s221 + $0x370] sm:$0xff] %v3105
        %4154 = vst [vmem:[%s221 + $0x378] sm:$0xff] %v3107
        %4155 = vst [vmem:[%s221 + $0x380] sm:$0xff] %v3331
        %4156 = vst [vmem:[%s221 + $0x388] sm:$0xff] %v3333
        %4157 = vst [vmem:[%s221 + $0x390] sm:$0xff] %v3557
        %4158 = vst [vmem:[%s221 + $0x398] sm:$0xff] %v3559
        %4159 = vst [vmem:[%s221 + $0x3a0] sm:$0xff] %v3783
        %4160 = vst [vmem:[%s221 + $0x3a8] sm:$0xff] %v3785
        %4161 = vst [vmem:[%s221 + $0x3b0] sm:$0xff] %v4009
        %4162 = vst [vmem:[%s221 + $0x3b8] sm:$0xff] %v4011
        %4163 = vst [vmem:[%s221 + $0x3c0] sm:$0xff] %v2885
        %4164 = vst [vmem:[%s221 + $0x3c8] sm:$0xff] %v2887
        %4165 = vst [vmem:[%s221 + $0x3d0] sm:$0xff] %v3111
        %4166 = vst [vmem:[%s221 + $0x3d8] sm:$0xff] %v3113
        %4167 = vst [vmem:[%s221 + $0x3e0] sm:$0xff] %v3337
        %4168 = vst [vmem:[%s221 + $0x3e8] sm:$0xff] %v3339
        %4169 = vst [vmem:[%s221 + $0x3f0] sm:$0xff] %v3563
        %4170 = vst [vmem:[%s221 + $0x3f8] sm:$0xff] %v3565
        %4171 = vst [vmem:[%s221 + $0x400] sm:$0xff] %v3789
        %4172 = vst [vmem:[%s221 + $0x408] sm:$0xff] %v3791
        %4173 = vst [vmem:[%s221 + $0x410] sm:$0xff] %v4015
        %4174 = vst [vmem:[%s221 + $0x418] sm:$0xff] %v4017
        %4175 = vst [vmem:[%s221 + $0x420] sm:$0xff] %v2889
        %4176 = vst [vmem:[%s221 + $0x428] sm:$0xff] %v2891
        %4177 = vst [vmem:[%s221 + $0x430] sm:$0xff] %v3115
        %4178 = vst [vmem:[%s221 + $0x438] sm:$0xff] %v3117
        %4179 = vst [vmem:[%s221 + $0x440] sm:$0xff] %v3341
        %4180 = vst [vmem:[%s221 + $0x448] sm:$0xff] %v3343
        %4181 = vst [vmem:[%s221 + $0x450] sm:$0xff] %v3567
        %4182 = vst [vmem:[%s221 + $0x458] sm:$0xff] %v3569
        %4183 = vst [vmem:[%s221 + $0x460] sm:$0xff] %v3793
        %4184 = vst [vmem:[%s221 + $0x468] sm:$0xff] %v3795
        %4185 = vst [vmem:[%s221 + $0x470] sm:$0xff] %v4019
        %4186 = vst [vmem:[%s221 + $0x478] sm:$0xff] %v4021
        %4187 = vst [vmem:[%s221 + $0x480] sm:$0xff] %v2895
        %4188 = vst [vmem:[%s221 + $0x488] sm:$0xff] %v2897
        %4189 = vst [vmem:[%s221 + $0x490] sm:$0xff] %v3121
        %4190 = vst [vmem:[%s221 + $0x498] sm:$0xff] %v3123
        %4191 = vst [vmem:[%s221 + $0x4a0] sm:$0xff] %v3347
        %4192 = vst [vmem:[%s221 + $0x4a8] sm:$0xff] %v3349
        %4193 = vst [vmem:[%s221 + $0x4b0] sm:$0xff] %v3573
        %4194 = vst [vmem:[%s221 + $0x4b8] sm:$0xff] %v3575
        %4195 = vst [vmem:[%s221 + $0x4c0] sm:$0xff] %v3799
        %4196 = vst [vmem:[%s221 + $0x4c8] sm:$0xff] %v3801
        %4197 = vst [vmem:[%s221 + $0x4d0] sm:$0xff] %v4025
        %4198 = vst [vmem:[%s221 + $0x4d8] sm:$0xff] %v4027
        %4199 = vst [vmem:[%s221 + $0x4e0] sm:$0xff] %v2899
        %4200 = vst [vmem:[%s221 + $0x4e8] sm:$0xff] %v2901
        %4201 = vst [vmem:[%s221 + $0x4f0] sm:$0xff] %v3125
        %4202 = vst [vmem:[%s221 + $0x4f8] sm:$0xff] %v3127
        %4203 = vst [vmem:[%s221 + $0x500] sm:$0xff] %v3351
        %4204 = vst [vmem:[%s221 + $0x508] sm:$0xff] %v3353
        %4205 = vst [vmem:[%s221 + $0x510] sm:$0xff] %v3577
        %4206 = vst [vmem:[%s221 + $0x518] sm:$0xff] %v3579
        %4207 = vst [vmem:[%s221 + $0x520] sm:$0xff] %v3803
        %4208 = vst [vmem:[%s221 + $0x528] sm:$0xff] %v3805
        %4209 = vst [vmem:[%s221 + $0x530] sm:$0xff] %v4029
        %4210 = vst [vmem:[%s221 + $0x538] sm:$0xff] %v4031
        %4211 = vst [vmem:[%s221 + $0x540] sm:$0xff] %v2905
        %4212 = vst [vmem:[%s221 + $0x548] sm:$0xff] %v2907
        %4213 = vst [vmem:[%s221 + $0x550] sm:$0xff] %v3131
        %4214 = vst [vmem:[%s221 + $0x558] sm:$0xff] %v3133
        %4215 = vst [vmem:[%s221 + $0x560] sm:$0xff] %v3357
        %4216 = vst [vmem:[%s221 + $0x568] sm:$0xff] %v3359
        %4217 = vst [vmem:[%s221 + $0x570] sm:$0xff] %v3583
        %4218 = vst [vmem:[%s221 + $0x578] sm:$0xff] %v3585
        %4219 = vst [vmem:[%s221 + $0x580] sm:$0xff] %v3809
        %4220 = vst [vmem:[%s221 + $0x588] sm:$0xff] %v3811
        %4221 = vst [vmem:[%s221 + $0x590] sm:$0xff] %v4035
        %4222 = vst [vmem:[%s221 + $0x598] sm:$0xff] %v4037
        %4223 = vst [vmem:[%s221 + $0x5a0] sm:$0xff] %v2909
        %4224 = vst [vmem:[%s221 + $0x5a8] sm:$0xff] %v2911
        %4225 = vst [vmem:[%s221 + $0x5b0] sm:$0xff] %v3135
        %4226 = vst [vmem:[%s221 + $0x5b8] sm:$0xff] %v3137
        %4227 = vst [vmem:[%s221 + $0x5c0] sm:$0xff] %v3361
        %4228 = vst [vmem:[%s221 + $0x5c8] sm:$0xff] %v3363
        %4229 = vst [vmem:[%s221 + $0x5d0] sm:$0xff] %v3587
        %4230 = vst [vmem:[%s221 + $0x5d8] sm:$0xff] %v3589
        %4231 = vst [vmem:[%s221 + $0x5e0] sm:$0xff] %v3813
        %4232 = vst [vmem:[%s221 + $0x5e8] sm:$0xff] %v3815
        %4233 = vst [vmem:[%s221 + $0x5f0] sm:$0xff] %v4039
        %4234 = vst [vmem:[%s221 + $0x5f8] sm:$0xff] %v4041
        %s4235 = smul.u32 16, %s18
        %p4236 = scmp.lt.s32.totalorder %s4235, 31
        %s4237 = scalar_select %p4236, %s4235, 31
        %s4238 = smul.addr %s4237, 12
        %s4239 = smul.addr %s4238, 8
        %s4240 = scalar_lea.vmem %s3, %s4239
        // Predicated region
        $region45: #{bert_self_attention.2} parent=31 // pred_check
          %p4241 = pneg %p104
        $region46: #{bert_self_attention.2} parent=31 // pred_check_branch
          %4243 = sbr.rel (%p4241) target = $region48
        $region47: #{bert_self_attention.2} parent=31 // pred_region
          %s4244 = smul.u32 16, %s18
        $region48: #{bert_self_attention.2} parent=31 // pred_fallthru
          _
      $region32: #{bert_self_attention.2} parent=5 // pred_fallthru
        _
      %p4245 = scmp.le.s32.totalorder 2, %s13
      // Predicated region
      $region49: #{bert_self_attention.2} parent=5 // pred_check
        %p4246 = pneg %p4245
      $region50: #{bert_self_attention.2} parent=5 // pred_check_branch
        %4248 = sbr.rel (%p4246) target = $region52
      $region51: #{bert_self_attention.2} parent=5 // pred_region
        %s4249 = ssub.s32 %s13, 2
        // Predicated region
        $region53: #{bert_self_attention.2} parent=51 // pred_check
          %p4250 = pneg %p110
        $region54: #{bert_self_attention.2} parent=51 // pred_check_branch
          %4252 = sbr.rel (%p4250) target = $region56
        $region55: #{bert_self_attention.2} parent=51 // pred_region
          %s4253 = smul.u32 16, %s19
          %p4254 = scmp.lt.s32.totalorder %s4253, 31
          %s4255 = scalar_select %p4254, %s4253, 31
          %s4256 = smul.addr %s4255, 12
          %s4257 = smul.addr %s4256, 8
          %s4258 = scalar_lea.vmem %s3, %s4257
        $region56: #{bert_self_attention.2} parent=51 // pred_fallthru
          _
      $region52: #{bert_self_attention.2} parent=5 // pred_fallthru
        _
    $region6: #{bert_self_attention.2} parent=1 // loop_footer
      %s17 = sadd.s32 1, %s13
    $region7: #{bert_self_attention.2} parent=1 // loop_footer_branch
      %12 = sbr.rel target = $region3
    $region8: #{bert_self_attention.2} parent=1 // loop_exit
      _
    %4259 = vsyncpa [#allocation3], 1
    %s4260 = scalar_lea.sflag [#allocation3], 1
    %4261 = vsyncpa %s4260, 1
    %4262 = vsyncpa [#allocation5], 1

</llo_original>
